<compile_context>
chip_gen: v7x
topology: tpu7x:2x2x1
jax: 0.10.0
libtpu: 0.0.40
codegen_flags: <defaults>
</compile_context>

<pallas_src>
import functools
import math

import jax
import jax.numpy as jnp
from jax import lax
from jax.experimental import pallas as pl
from jax.experimental.pallas import tpu as pltpu

_LN_EPS = 1e-5  # torch.nn.LayerNorm default


# ----------------------------- in-kernel helpers -----------------------------

def _layernorm(x, w, b):
    mu = jnp.mean(x, axis=-1, keepdims=True)
    var = jnp.mean(jnp.square(x - mu), axis=-1, keepdims=True)
    return (x - mu) * lax.rsqrt(var + _LN_EPS) * w + b


def _gelu_tanh(x):
    # tanh-approximate GELU: routes the transcendental to the EUP slot instead of a
    # ~12-op VALU erf polynomial on the largest elementwise tensor (N x intermediate).
    # TODO(synk): not bit-identical to torch.nn.GELU() (erf); |diff| <= ~1e-3.
    c = math.sqrt(2.0 / math.pi)
    return 0.5 * x * (1.0 + jnp.tanh(c * (x + 0.044715 * x * x * x)))


# ------------------------- fused transformer-stack kernel --------------------------

def _vit_stack_kernel(
    x_ref, ln1w_ref, ln1b_ref, wqkv_ref, wprj_ref, bprj_ref,
    ln2w_ref, ln2b_ref, w1_ref, b1_ref, w2_ref, b2_ref,
    normw_ref, normb_ref,
    out_ref, attn_ref,
    x_res, q_scr, k_scr, v_scr, cat_scr,
    *, num_heads, head_size):
    l = pl.program_id(1)
    n_layers = pl.num_programs(1)
    cdt = wqkv_ref.dtype                      # matmul compute dtype (f32 or bf16)
    H, Dh = num_heads, head_size
    HD = H * Dh
    scale = 1.0 / math.sqrt(Dh)

    # Layer 0: load the residual stream into the persistent VMEM scratch (f32).
    @pl.when(l == 0)
    def _():
        x_res[...] = x_ref[0].astype(jnp.float32)

    x = x_res[...]                                                     # (N, D) f32

    # ---------------- MHSA with pre-LayerNorm (pn1) ----------------
    h = _layernorm(x, ln1w_ref[0], ln1b_ref[0])
    qkv = jnp.dot(h.astype(cdt), wqkv_ref[0],
                  preferred_element_type=jnp.float32)                  # (N, 3*H*Dh)

    # One relayout pass into head-major (H, N, Dh) scratch so the score and P@V
    # matmuls run as single head-batched MXU streams.
    for i in range(H):
        q_scr[i] = qkv[:, i * Dh:(i + 1) * Dh].astype(cdt)
        k_scr[i] = qkv[:, HD + i * Dh:HD + (i + 1) * Dh].astype(cdt)
        v_scr[i] = qkv[:, 2 * HD + i * Dh:2 * HD + (i + 1) * Dh].astype(cdt)

    dots = jnp.einsum('hqd,hkd->hqk', q_scr[...], k_scr[...],
                      preferred_element_type=jnp.float32) * scale      # (H, N, N)
    m = jnp.max(dots, axis=-1, keepdims=True)
    e = jnp.exp(dots - m)
    p = e * pl.reciprocal(jnp.sum(e, axis=-1, keepdims=True), approx=True)
    attn_ref[0] = p                                                    # (H, N, N) f32

    head_out = jnp.einsum('hqk,hkd->hqd', p.astype(cdt), v_scr[...],
                          preferred_element_type=jnp.float32)          # (H, N, Dh)

    # Assemble (N, H*Dh) once -> single full-K output projection.
    for i in range(H):
        cat_scr[:, i * Dh:(i + 1) * Dh] = head_out[i].astype(cdt)
    y = jnp.dot(cat_scr[...], wprj_ref[0],
                preferred_element_type=jnp.float32) + bprj_ref[0]

    x = x + y                                                          # residual 1

    # ---------------- MLP with pre-LayerNorm (pn2) ----------------
    h2 = _layernorm(x, ln2w_ref[0], ln2b_ref[0])
    m1 = jnp.dot(h2.astype(cdt), w1_ref[0],
                 preferred_element_type=jnp.float32) + b1_ref[0]
    m2 = jnp.dot(_gelu_tanh(m1).astype(cdt), w2_ref[0],
                 preferred_element_type=jnp.float32) + b2_ref[0]
    x = x + m2                                                         # residual 2

    x_res[...] = x

    # Final LayerNorm fused into the last layer's epilogue (no extra pallas_call).
    @pl.when(l == n_layers - 1)
    def _():
        out_ref[0] = _layernorm(x, normw_ref[...], normb_ref[...]).astype(out_ref.dtype)


def _stack_layer_params(layers, compute_dtype):
    stacked = {k: jnp.stack([lp[k] for lp in layers], axis=0) for k in layers[0]}
    # cast matmul weights once in the wrapper (LN params / biases stay f32).
    for k in ("wqkv", "wprj", "w1", "w2"):
        stacked[k] = stacked[k].astype(compute_dtype)
    return stacked


def vit_encoder_forward(x_nchw, params, *, num_heads, head_size, b_mean=False,
                        compute_dtype=jnp.float32):
    B, C, Hsp, Wsp = x_nchw.shape
    # B C H W -> B (H W) C, add positional embedding, prepend cls token (glue).
    tokens = jnp.transpose(x_nchw.reshape(B, C, Hsp * Wsp), (0, 2, 1)) + params["posemb"]
    cls = jnp.broadcast_to(params["cls"], (B, 1, C))
    x = jnp.concatenate([cls, tokens], axis=1)
    B, N, D = x.shape
    L = len(params["layers"])
    HD = num_heads * head_size
    inter = params["layers"][0]["w1"].shape[-1]
    st = _stack_layer_params(params["layers"], compute_dtype)

    def wspec(*shape):
        nd = len(shape)
        return pl.BlockSpec((1,) + shape, lambda b, l: (l,) + (0,) * nd)

    kernel = functools.partial(_vit_stack_kernel,
                               num_heads=num_heads, head_size=head_size)
    out, attn = pl.pallas_call(
        kernel,
        out_shape=(jax.ShapeDtypeStruct((B, N, D), x.dtype),
                   jax.ShapeDtypeStruct((B, L * num_heads, N, N), jnp.float32)),
        grid_spec=pltpu.PrefetchScalarGridSpec(
            num_scalar_prefetch=0,
            grid=(B, L),                               # batch (parallel), layer (sequential)
            in_specs=[
                pl.BlockSpec((1, N, D), lambda b, l: (b, 0, 0)),   # tokens
                wspec(1, D), wspec(1, D),                          # ln1 w, b
                wspec(D, 3 * HD),                                  # wqkv
                wspec(HD, D), wspec(1, D),                         # wprj, bprj
                wspec(1, D), wspec(1, D),                          # ln2 w, b
                wspec(D, inter), wspec(1, inter),                  # w1, b1
                wspec(inter, D), wspec(1, D),                      # w2, b2
                pl.BlockSpec((1, D), lambda b, l: (0, 0)),         # final norm w
                pl.BlockSpec((1, D), lambda b, l: (0, 0)),         # final norm b
            ],
            out_specs=(
                # residual stream: resident in VMEM across the layer axis, written
                # (post final-LN) only on the last layer.
                pl.BlockSpec((1, N, D), lambda b, l: (b, 0, 0)),
                # per-layer attention maps (stacked as (B, L*H, N, N) to keep rank 4).
                pl.BlockSpec((1, num_heads, N, N), lambda b, l: (b, l, 0, 0)),
            ),
            scratch_shapes=[
                pltpu.VMEM((N, D), jnp.float32),                          # residual stream
                pltpu.VMEM((num_heads, N, head_size), compute_dtype),     # q (head-major)
                pltpu.VMEM((num_heads, N, head_size), compute_dtype),     # k (head-major)
                pltpu.VMEM((num_heads, N, head_size), compute_dtype),     # v (head-major)
                pltpu.VMEM((N, HD), compute_dtype),                       # concat(heads)
            ],
        ),
        compiler_params=pltpu.CompilerParams(
            dimension_semantics=("parallel", "arbitrary"),
            vmem_limit_bytes=48 * 1024 * 1024,
        ),
    )(x, st["ln1_w"], st["ln1_b"], st["wqkv"], st["wprj"], st["bprj"],
      st["ln2_w"], st["ln2_b"], st["w1"], st["b1"], st["w2"], st["b2"],
      params["norm_w"], params["norm_b"])

    pooled = out.mean(axis=1) if b_mean else out[:, 0]
    attn = attn.reshape(B, L, num_heads, N, N)
    return pooled, [attn[:, i] for i in range(L)]


# ------------------------------ parameter init --------------------------------

def init_params(key, *, grid_size, embedding_dim, num_heads, head_size,
                intermediate_size, n_layers):
    d = embedding_dim
    hd = num_heads * head_size
    keys = iter(jax.random.split(key, 4 + 10 * n_layers))
    nxt = lambda: next(keys)
    params = {
        "posemb": jax.random.normal(nxt(), (1, grid_size[0] * grid_size[1], d), jnp.float32),
        "cls": jax.random.normal(nxt(), (1, 1, d), jnp.float32),
        "norm_w": 1.0 + 0.1 * jax.random.normal(nxt(), (1, d), jnp.float32),
        "norm_b": 0.1 * jax.random.normal(nxt(), (1, d), jnp.float32),
        "layers": [],
    }
    s_qkv = 1.0 / math.sqrt(head_size)
    s_prj = 1.0 / math.sqrt(d)
    s_fc1 = 1.0 / math.sqrt(d)
    s_fc2 = 1.0 / math.sqrt(intermediate_size)
    for _ in range(n_layers):
        params["layers"].append({
            "ln1_w": 1.0 + 0.1 * jax.random.normal(nxt(), (1, d), jnp.float32),
            "ln1_b": 0.1 * jax.random.normal(nxt(), (1, d), jnp.float32),
            "wqkv": jax.random.uniform(nxt(), (d, 3 * hd), jnp.float32, -s_qkv, s_qkv),
            "wprj": jax.random.uniform(nxt(), (hd, d), jnp.float32, -s_prj, s_prj),
            "bprj": jnp.zeros((1, d), jnp.float32),
            "ln2_w": 1.0 + 0.1 * jax.random.normal(nxt(), (1, d), jnp.float32),
            "ln2_b": 0.1 * jax.random.normal(nxt(), (1, d), jnp.float32),
            "w1": jax.random.uniform(nxt(), (d, intermediate_size), jnp.float32, -s_fc1, s_fc1),
            "b1": jax.random.uniform(nxt(), (1, intermediate_size), jnp.float32, -s_fc1, s_fc1),
            "w2": jax.random.uniform(nxt(), (intermediate_size, d), jnp.float32, -s_fc2, s_fc2),
            "b2": jax.random.uniform(nxt(), (1, d), jnp.float32, -s_fc2, s_fc2),
        })
    return params


# ------------------------------ pure-JAX reference -----------------------------

def ref_forward(x_nchw, params, *, num_heads, head_size, b_mean=False):
    B, C, H, W = x_nchw.shape
    x = jnp.transpose(x_nchw.reshape(B, C, H * W), (0, 2, 1)) + params["posemb"]
    x = jnp.concatenate([jnp.broadcast_to(params["cls"], (B, 1, C)), x], axis=1)
    N = x.shape[1]

    def ln(v, w, b):
        mu = v.mean(-1, keepdims=True)
        var = ((v - mu) ** 2).mean(-1, keepdims=True)
        return (v - mu) / jnp.sqrt(var + _LN_EPS) * w + b

    attns = []
    for p in params["layers"]:
        h = ln(x, p["ln1_w"][0], p["ln1_b"][0])
        qkv = (h @ p["wqkv"]).reshape(B, N, 3, num_heads, head_size)
        q, k, v = (jnp.transpose(qkv[:, :, s], (0, 2, 1, 3)) for s in range(3))
        dots = jnp.einsum("bhnd,bhmd->bhnm", q, k) / math.sqrt(head_size)
        a = jax.nn.softmax(dots, axis=-1)
        o = jnp.einsum("bhnm,bhmd->bhnd", a, v)
        o = jnp.transpose(o, (0, 2, 1, 3)).reshape(B, N, num_heads * head_size)
        x = x + (o @ p["wprj"] + p["bprj"][0])
        h2 = ln(x, p["ln2_w"][0], p["ln2_b"][0])
        x = x + (jax.nn.gelu(h2 @ p["w1"] + p["b1"][0], approximate=False) @ p["w2"] + p["b2"][0])
        attns.append(a)
    x = ln(x, params["norm_w"][0], params["norm_b"][0])
    return (x.mean(axis=1) if b_mean else x[:, 0]), attns


# ------------------------------------ main -------------------------------------

if __name__ == "__main__":
    B, D, Hsp, Wsp = 2, 32, 4, 4          # x: (B, C=embedding_dim, H, W)
    num_heads, head_size, inter, n_layers = 4, 8, 64, 2
    N = 1 + Hsp * Wsp

    key = jax.random.PRNGKey(0)
    kx, kp = jax.random.split(key)
    x = jax.random.normal(kx, (B, D, Hsp, Wsp), jnp.float32)
    params = init_params(kp, grid_size=(Hsp, Wsp), embedding_dim=D,
                         num_heads=num_heads, head_size=head_size,
                         intermediate_size=inter, n_layers=n_layers)

    # --- f32-MXU path (reference-accurate) ---
    pooled, attns = vit_encoder_forward(x, params, num_heads=num_heads,
                                        head_size=head_size, b_mean=False)
    pooled = jax.block_until_ready(pooled)
    attns = jax.block_until_ready(attns)

    assert pooled.shape == (B, D)
    assert len(attns) == n_layers
    assert all(a.shape == (B, num_heads, N, N) for a in attns)

    with jax.default_matmul_precision("highest"):
        ref_pooled, ref_attns = ref_forward(x, params, num_heads=num_heads,
                                            head_size=head_size, b_mean=False)
    # tanh-GELU + approx-reciprocal softmax -> small (<< 1e-2) deviation budget.
    assert jnp.allclose(pooled, ref_pooled, atol=1e-2, rtol=1e-2)
    for a, ra in zip(attns, ref_attns):
        assert jnp.allclose(a, ra, atol=1e-2, rtol=1e-2)

    # --- bf16-MXU path (perf config: bf16 operands, f32 accumulation) ---
    pooled_bf, attns_bf = vit_encoder_forward(x, params, num_heads=num_heads,
                                              head_size=head_size, b_mean=False,
                                              compute_dtype=jnp.bfloat16)
    pooled_bf = jax.block_until_ready(pooled_bf)
    attns_bf = jax.block_until_ready(attns_bf)
    assert jnp.allclose(pooled_bf, ref_pooled, atol=6e-2, rtol=6e-2)
    for a, ra in zip(attns_bf, ref_attns):
        assert jnp.allclose(a, ra, atol=6e-2, rtol=6e-2)

    print("KERNEL_OK")
</pallas_src>

<mosaic_0001>
module attributes {stable_mosaic.version = 11 : i64} {
  func.func @_vit_stack_kernel(%arg0: i32, %arg1: i32, %arg2: memref<1x17x32xf32, #tpu.memory_space<vmem>>, %arg3: memref<1x1x32xf32, #tpu.memory_space<vmem>>, %arg4: memref<1x1x32xf32, #tpu.memory_space<vmem>>, %arg5: memref<1x32x96xf32, #tpu.memory_space<vmem>>, %arg6: memref<1x32x32xf32, #tpu.memory_space<vmem>>, %arg7: memref<1x1x32xf32, #tpu.memory_space<vmem>>, %arg8: memref<1x1x32xf32, #tpu.memory_space<vmem>>, %arg9: memref<1x1x32xf32, #tpu.memory_space<vmem>>, %arg10: memref<1x32x64xf32, #tpu.memory_space<vmem>>, %arg11: memref<1x1x64xf32, #tpu.memory_space<vmem>>, %arg12: memref<1x64x32xf32, #tpu.memory_space<vmem>>, %arg13: memref<1x1x32xf32, #tpu.memory_space<vmem>>, %arg14: memref<1x32xf32, #tpu.memory_space<vmem>>, %arg15: memref<1x32xf32, #tpu.memory_space<vmem>>, %arg16: memref<1x17x32xf32, #tpu.memory_space<vmem>>, %arg17: memref<1x4x17x17xf32, #tpu.memory_space<vmem>>, %arg18: memref<17x32xf32, #tpu.memory_space<vmem>>, %arg19: memref<4x17x8xf32, #tpu.memory_space<vmem>>, %arg20: memref<4x17x8xf32, #tpu.memory_space<vmem>>, %arg21: memref<4x17x8xf32, #tpu.memory_space<vmem>>, %arg22: memref<17x32xf32, #tpu.memory_space<vmem>>) attributes {dimension_semantics = [#tpu.dimension_semantics<parallel>, #tpu.dimension_semantics<arbitrary>], iteration_bounds = array<i64: 2, 2>, scalar_prefetch = 0 : i64, scratch_operands = 5 : i64, tpu.core_type = #tpu.core_type<tc>, window_params = [{transform_indices = @transform_0, window_bounds = array<i64: 1, 17, 32>}, {transform_indices = @transform_1, window_bounds = array<i64: 1, 1, 32>}, {transform_indices = @transform_2, window_bounds = array<i64: 1, 1, 32>}, {transform_indices = @transform_3, window_bounds = array<i64: 1, 32, 96>}, {transform_indices = @transform_4, window_bounds = array<i64: 1, 32, 32>}, {transform_indices = @transform_5, window_bounds = array<i64: 1, 1, 32>}, {transform_indices = @transform_6, window_bounds = array<i64: 1, 1, 32>}, {transform_indices = @transform_7, window_bounds = array<i64: 1, 1, 32>}, {transform_indices = @transform_8, window_bounds = array<i64: 1, 32, 64>}, {transform_indices = @transform_9, window_bounds = array<i64: 1, 1, 64>}, {transform_indices = @transform_10, window_bounds = array<i64: 1, 64, 32>}, {transform_indices = @transform_11, window_bounds = array<i64: 1, 1, 32>}, {pipeline_mode = #tpu.pipeline_mode<synchronous>, transform_indices = @transform_12, window_bounds = array<i64: 1, 32>}, {pipeline_mode = #tpu.pipeline_mode<synchronous>, transform_indices = @transform_13, window_bounds = array<i64: 1, 32>}, {transform_indices = @transform_14, window_bounds = array<i64: 1, 17, 32>}, {transform_indices = @transform_15, window_bounds = array<i64: 1, 4, 17, 17>}]} {
    %c0_i32 = arith.constant 0 : i32
    %0 = arith.cmpi eq, %arg1, %c0_i32 : i32
    %1 = arith.extui %0 : i1 to i32
    %c0_i32_0 = arith.constant 0 : i32
    %2 = arith.cmpi ne, %1, %c0_i32_0 : i32
    scf.if %2 {
      %c0_113 = arith.constant 0 : index
      %c0_114 = arith.constant 0 : index
      %c0_115 = arith.constant 0 : index
      %180 = vector.load %arg2[%c0_113, %c0_114, %c0_115] : memref<1x17x32xf32, #tpu.memory_space<vmem>>, vector<1x17x32xf32>
      %181 = vector.shape_cast %180 : vector<1x17x32xf32> to vector<17x32xf32>
      %c0_116 = arith.constant 0 : index
      %c0_117 = arith.constant 0 : index
      %182 = vector.load %arg18[%c0_116, %c0_117] : memref<17x32xf32, #tpu.memory_space<vmem>>, vector<17x32xf32>
      tpu.vector_store %arg18[%c0_116, %c0_117], %181 {strides = array<i32>} : memref<17x32xf32, #tpu.memory_space<vmem>>, vector<17x32xf32>,
    } else {
    }
    %c0 = arith.constant 0 : index
    %c0_1 = arith.constant 0 : index
    %3 = vector.load %arg18[%c0, %c0_1] : memref<17x32xf32, #tpu.memory_space<vmem>>, vector<17x32xf32>
    %c0_2 = arith.constant 0 : index
    %c0_3 = arith.constant 0 : index
    %c0_4 = arith.constant 0 : index
    %4 = vector.load %arg3[%c0_2, %c0_3, %c0_4] : memref<1x1x32xf32, #tpu.memory_space<vmem>>, vector<1x1x32xf32>
    %5 = vector.shape_cast %4 : vector<1x1x32xf32> to vector<1x32xf32>
    %c0_5 = arith.constant 0 : index
    %c0_6 = arith.constant 0 : index
    %c0_7 = arith.constant 0 : index
    %6 = vector.load %arg4[%c0_5, %c0_6, %c0_7] : memref<1x1x32xf32, #tpu.memory_space<vmem>>, vector<1x1x32xf32>
    %7 = vector.shape_cast %6 : vector<1x1x32xf32> to vector<1x32xf32>
    %cst = arith.constant dense<0.000000e+00> : vector<17xf32>
    %8 = vector.multi_reduction <add>, %3, %cst [1] : vector<17x32xf32> to vector<17xf32>
    %9 = vector.shape_cast %8 : vector<17xf32> to vector<17x1xf32>
    %cst_8 = arith.constant 3.200000e+01 : f32
    %10 = vector.broadcast %cst_8 : f32 to vector<17x1xf32>
    %11 = arith.divf %9, %10 : vector<17x1xf32>
    %12 = vector.broadcast %11 : vector<17x1xf32> to vector<17x32xf32>
    %13 = arith.subf %3, %12 : vector<17x32xf32>
    %14 = arith.mulf %13, %13 : vector<17x32xf32>
    %cst_9 = arith.constant dense<0.000000e+00> : vector<17xf32>
    %15 = vector.multi_reduction <add>, %14, %cst_9 [1] : vector<17x32xf32> to vector<17xf32>
    %16 = vector.shape_cast %15 : vector<17xf32> to vector<17x1xf32>
    %cst_10 = arith.constant 3.200000e+01 : f32
    %17 = vector.broadcast %cst_10 : f32 to vector<17x1xf32>
    %18 = arith.divf %16, %17 : vector<17x1xf32>
    %19 = vector.broadcast %11 : vector<17x1xf32> to vector<17x32xf32>
    %20 = arith.subf %3, %19 : vector<17x32xf32>
    %cst_11 = arith.constant 9.99999974E-6 : f32
    %21 = vector.broadcast %cst_11 : f32 to vector<17x1xf32>
    %22 = arith.addf %18, %21 : vector<17x1xf32>
    %23 = math.rsqrt %22 : vector<17x1xf32>
    %24 = vector.broadcast %23 : vector<17x1xf32> to vector<17x32xf32>
    %25 = arith.mulf %20, %24 : vector<17x32xf32>
    %26 = vector.broadcast %5 : vector<1x32xf32> to vector<17x32xf32>
    %27 = arith.mulf %25, %26 : vector<17x32xf32>
    %28 = vector.broadcast %7 : vector<1x32xf32> to vector<17x32xf32>
    %29 = arith.addf %27, %28 : vector<17x32xf32>
    %c0_12 = arith.constant 0 : index
    %c0_13 = arith.constant 0 : index
    %c0_14 = arith.constant 0 : index
    %30 = vector.load %arg5[%c0_12, %c0_13, %c0_14] : memref<1x32x96xf32, #tpu.memory_space<vmem>>, vector<1x32x96xf32>
    %31 = vector.shape_cast %30 : vector<1x32x96xf32> to vector<32x96xf32>
    %cst_15 = arith.constant dense<0.000000e+00> : vector<17x96xf32>
    %32 = tpu.matmul %29, %31, %cst_15 {dimension_numbers = #tpu.dot_dimension_numbers<[1], [0], [0], [1], [0, 0, 1, 1], [], []>} : vector<17x32xf32>, vector<32x96xf32>, vector<17x96xf32> -> vector<17x96xf32>
    %33 = vector.extract_strided_slice %32 {offsets = [0, 0], sizes = [17, 8], strides = [1, 1]} : vector<17x96xf32> to vector<17x8xf32>
    %c0_16 = arith.constant 0 : index
    %c0_17 = arith.constant 0 : index
    %c0_18 = arith.constant 0 : index
    %34 = vector.load %arg19[%c0_16, %c0_17, %c0_18] : memref<4x17x8xf32, #tpu.memory_space<vmem>>, vector<1x17x8xf32>
    %35 = vector.shape_cast %34 : vector<1x17x8xf32> to vector<17x8xf32>
    %36 = vector.shape_cast %33 : vector<17x8xf32> to vector<1x17x8xf32>
    tpu.vector_store %arg19[%c0_16, %c0_17, %c0_18], %36 {strides = array<i32>} : memref<4x17x8xf32, #tpu.memory_space<vmem>>, vector<1x17x8xf32>,
    %37 = vector.extract_strided_slice %32 {offsets = [0, 32], sizes = [17, 8], strides = [1, 1]} : vector<17x96xf32> to vector<17x8xf32>
    %c0_19 = arith.constant 0 : index
    %c0_20 = arith.constant 0 : index
    %c0_21 = arith.constant 0 : index
    %38 = vector.load %arg20[%c0_19, %c0_20, %c0_21] : memref<4x17x8xf32, #tpu.memory_space<vmem>>, vector<1x17x8xf32>
    %39 = vector.shape_cast %38 : vector<1x17x8xf32> to vector<17x8xf32>
    %40 = vector.shape_cast %37 : vector<17x8xf32> to vector<1x17x8xf32>
    tpu.vector_store %arg20[%c0_19, %c0_20, %c0_21], %40 {strides = array<i32>} : memref<4x17x8xf32, #tpu.memory_space<vmem>>, vector<1x17x8xf32>,
    %41 = vector.extract_strided_slice %32 {offsets = [0, 64], sizes = [17, 8], strides = [1, 1]} : vector<17x96xf32> to vector<17x8xf32>
    %c0_22 = arith.constant 0 : index
    %c0_23 = arith.constant 0 : index
    %c0_24 = arith.constant 0 : index
    %42 = vector.load %arg21[%c0_22, %c0_23, %c0_24] : memref<4x17x8xf32, #tpu.memory_space<vmem>>, vector<1x17x8xf32>
    %43 = vector.shape_cast %42 : vector<1x17x8xf32> to vector<17x8xf32>
    %44 = vector.shape_cast %41 : vector<17x8xf32> to vector<1x17x8xf32>
    tpu.vector_store %arg21[%c0_22, %c0_23, %c0_24], %44 {strides = array<i32>} : memref<4x17x8xf32, #tpu.memory_space<vmem>>, vector<1x17x8xf32>,
    %45 = vector.extract_strided_slice %32 {offsets = [0, 8], sizes = [17, 8], strides = [1, 1]} : vector<17x96xf32> to vector<17x8xf32>
    %c1 = arith.constant 1 : index
    %c0_25 = arith.constant 0 : index
    %c0_26 = arith.constant 0 : index
    %46 = vector.load %arg19[%c1, %c0_25, %c0_26] : memref<4x17x8xf32, #tpu.memory_space<vmem>>, vector<1x17x8xf32>
    %47 = vector.shape_cast %46 : vector<1x17x8xf32> to vector<17x8xf32>
    %48 = vector.shape_cast %45 : vector<17x8xf32> to vector<1x17x8xf32>
    tpu.vector_store %arg19[%c1, %c0_25, %c0_26], %48 {strides = array<i32>} : memref<4x17x8xf32, #tpu.memory_space<vmem>>, vector<1x17x8xf32>,
    %49 = vector.extract_strided_slice %32 {offsets = [0, 40], sizes = [17, 8], strides = [1, 1]} : vector<17x96xf32> to vector<17x8xf32>
    %c1_27 = arith.constant 1 : index
    %c0_28 = arith.constant 0 : index
    %c0_29 = arith.constant 0 : index
    %50 = vector.load %arg20[%c1_27, %c0_28, %c0_29] : memref<4x17x8xf32, #tpu.memory_space<vmem>>, vector<1x17x8xf32>
    %51 = vector.shape_cast %50 : vector<1x17x8xf32> to vector<17x8xf32>
    %52 = vector.shape_cast %49 : vector<17x8xf32> to vector<1x17x8xf32>
    tpu.vector_store %arg20[%c1_27, %c0_28, %c0_29], %52 {strides = array<i32>} : memref<4x17x8xf32, #tpu.memory_space<vmem>>, vector<1x17x8xf32>,
    %53 = vector.extract_strided_slice %32 {offsets = [0, 72], sizes = [17, 8], strides = [1, 1]} : vector<17x96xf32> to vector<17x8xf32>
    %c1_30 = arith.constant 1 : index
    %c0_31 = arith.constant 0 : index
    %c0_32 = arith.constant 0 : index
    %54 = vector.load %arg21[%c1_30, %c0_31, %c0_32] : memref<4x17x8xf32, #tpu.memory_space<vmem>>, vector<1x17x8xf32>
    %55 = vector.shape_cast %54 : vector<1x17x8xf32> to vector<17x8xf32>
    %56 = vector.shape_cast %53 : vector<17x8xf32> to vector<1x17x8xf32>
    tpu.vector_store %arg21[%c1_30, %c0_31, %c0_32], %56 {strides = array<i32>} : memref<4x17x8xf32, #tpu.memory_space<vmem>>, vector<1x17x8xf32>,
    %57 = vector.extract_strided_slice %32 {offsets = [0, 16], sizes = [17, 8], strides = [1, 1]} : vector<17x96xf32> to vector<17x8xf32>
    %c2 = arith.constant 2 : index
    %c0_33 = arith.constant 0 : index
    %c0_34 = arith.constant 0 : index
    %58 = vector.load %arg19[%c2, %c0_33, %c0_34] : memref<4x17x8xf32, #tpu.memory_space<vmem>>, vector<1x17x8xf32>
    %59 = vector.shape_cast %58 : vector<1x17x8xf32> to vector<17x8xf32>
    %60 = vector.shape_cast %57 : vector<17x8xf32> to vector<1x17x8xf32>
    tpu.vector_store %arg19[%c2, %c0_33, %c0_34], %60 {strides = array<i32>} : memref<4x17x8xf32, #tpu.memory_space<vmem>>, vector<1x17x8xf32>,
    %61 = vector.extract_strided_slice %32 {offsets = [0, 48], sizes = [17, 8], strides = [1, 1]} : vector<17x96xf32> to vector<17x8xf32>
    %c2_35 = arith.constant 2 : index
    %c0_36 = arith.constant 0 : index
    %c0_37 = arith.constant 0 : index
    %62 = vector.load %arg20[%c2_35, %c0_36, %c0_37] : memref<4x17x8xf32, #tpu.memory_space<vmem>>, vector<1x17x8xf32>
    %63 = vector.shape_cast %62 : vector<1x17x8xf32> to vector<17x8xf32>
    %64 = vector.shape_cast %61 : vector<17x8xf32> to vector<1x17x8xf32>
    tpu.vector_store %arg20[%c2_35, %c0_36, %c0_37], %64 {strides = array<i32>} : memref<4x17x8xf32, #tpu.memory_space<vmem>>, vector<1x17x8xf32>,
    %65 = vector.extract_strided_slice %32 {offsets = [0, 80], sizes = [17, 8], strides = [1, 1]} : vector<17x96xf32> to vector<17x8xf32>
    %c2_38 = arith.constant 2 : index
    %c0_39 = arith.constant 0 : index
    %c0_40 = arith.constant 0 : index
    %66 = vector.load %arg21[%c2_38, %c0_39, %c0_40] : memref<4x17x8xf32, #tpu.memory_space<vmem>>, vector<1x17x8xf32>
    %67 = vector.shape_cast %66 : vector<1x17x8xf32> to vector<17x8xf32>
    %68 = vector.shape_cast %65 : vector<17x8xf32> to vector<1x17x8xf32>
    tpu.vector_store %arg21[%c2_38, %c0_39, %c0_40], %68 {strides = array<i32>} : memref<4x17x8xf32, #tpu.memory_space<vmem>>, vector<1x17x8xf32>,
    %69 = vector.extract_strided_slice %32 {offsets = [0, 24], sizes = [17, 8], strides = [1, 1]} : vector<17x96xf32> to vector<17x8xf32>
    %c3 = arith.constant 3 : index
    %c0_41 = arith.constant 0 : index
    %c0_42 = arith.constant 0 : index
    %70 = vector.load %arg19[%c3, %c0_41, %c0_42] : memref<4x17x8xf32, #tpu.memory_space<vmem>>, vector<1x17x8xf32>
    %71 = vector.shape_cast %70 : vector<1x17x8xf32> to vector<17x8xf32>
    %72 = vector.shape_cast %69 : vector<17x8xf32> to vector<1x17x8xf32>
    tpu.vector_store %arg19[%c3, %c0_41, %c0_42], %72 {strides = array<i32>} : memref<4x17x8xf32, #tpu.memory_space<vmem>>, vector<1x17x8xf32>,
    %73 = vector.extract_strided_slice %32 {offsets = [0, 56], sizes = [17, 8], strides = [1, 1]} : vector<17x96xf32> to vector<17x8xf32>
    %c3_43 = arith.constant 3 : index
    %c0_44 = arith.constant 0 : index
    %c0_45 = arith.constant 0 : index
    %74 = vector.load %arg20[%c3_43, %c0_44, %c0_45] : memref<4x17x8xf32, #tpu.memory_space<vmem>>, vector<1x17x8xf32>
    %75 = vector.shape_cast %74 : vector<1x17x8xf32> to vector<17x8xf32>
    %76 = vector.shape_cast %73 : vector<17x8xf32> to vector<1x17x8xf32>
    tpu.vector_store %arg20[%c3_43, %c0_44, %c0_45], %76 {strides = array<i32>} : memref<4x17x8xf32, #tpu.memory_space<vmem>>, vector<1x17x8xf32>,
    %77 = vector.extract_strided_slice %32 {offsets = [0, 88], sizes = [17, 8], strides = [1, 1]} : vector<17x96xf32> to vector<17x8xf32>
    %c3_46 = arith.constant 3 : index
    %c0_47 = arith.constant 0 : index
    %c0_48 = arith.constant 0 : index
    %78 = vector.load %arg21[%c3_46, %c0_47, %c0_48] : memref<4x17x8xf32, #tpu.memory_space<vmem>>, vector<1x17x8xf32>
    %79 = vector.shape_cast %78 : vector<1x17x8xf32> to vector<17x8xf32>
    %80 = vector.shape_cast %77 : vector<17x8xf32> to vector<1x17x8xf32>
    tpu.vector_store %arg21[%c3_46, %c0_47, %c0_48], %80 {strides = array<i32>} : memref<4x17x8xf32, #tpu.memory_space<vmem>>, vector<1x17x8xf32>,
    %c0_49 = arith.constant 0 : index
    %c0_50 = arith.constant 0 : index
    %c0_51 = arith.constant 0 : index
    %81 = vector.load %arg19[%c0_49, %c0_50, %c0_51] : memref<4x17x8xf32, #tpu.memory_space<vmem>>, vector<4x17x8xf32>
    %c0_52 = arith.constant 0 : index
    %c0_53 = arith.constant 0 : index
    %c0_54 = arith.constant 0 : index
    %82 = vector.load %arg20[%c0_52, %c0_53, %c0_54] : memref<4x17x8xf32, #tpu.memory_space<vmem>>, vector<4x17x8xf32>
    "tpu.trace_start"() <{level = 10 : i32, message = "hqd,hkd->hqk"}> : () -> ()
    %cst_55 = arith.constant dense<0.000000e+00> : vector<4x17x17xf32>
    %83 = tpu.matmul %81, %82, %cst_55 {dimension_numbers = #tpu.dot_dimension_numbers<[2], [2], [1], [1], [0, 0, 0, 1, 1, 1], [0], [0]>} : vector<4x17x8xf32>, vector<4x17x8xf32>, vector<4x17x17xf32> -> vector<4x17x17xf32>
    "tpu.trace_stop"() : () -> ()
    %cst_56 = arith.constant 0.353553385 : f32
    %84 = vector.broadcast %cst_56 : f32 to vector<4x17x17xf32>
    %85 = arith.mulf %83, %84 : vector<4x17x17xf32>
    %cst_57 = arith.constant dense<0xFF800000> : vector<4x17xf32>
    %86 = vector.multi_reduction <maximumf>, %85, %cst_57 [2] : vector<4x17x17xf32> to vector<4x17xf32>
    %87 = vector.shape_cast %86 : vector<4x17xf32> to vector<4x17x1xf32>
    %88 = vector.broadcast %87 : vector<4x17x1xf32> to vector<4x17x17xf32>
    %89 = arith.subf %85, %88 : vector<4x17x17xf32>
    %90 = math.exp %89 : vector<4x17x17xf32>
    %cst_58 = arith.constant dense<0.000000e+00> : vector<4x17xf32>
    %91 = vector.multi_reduction <add>, %90, %cst_58 [2] : vector<4x17x17xf32> to vector<4x17xf32>
    %92 = vector.shape_cast %91 : vector<4x17xf32> to vector<4x17x1xf32>
    %93 = tpu.reciprocal %92 {approx = true} : vector<4x17x1xf32> -> vector<4x17x1xf32>
    %94 = vector.broadcast %93 : vector<4x17x1xf32> to vector<4x17x17xf32>
    %95 = arith.mulf %90, %94 : vector<4x17x17xf32>
    %c0_59 = arith.constant 0 : index
    %c0_60 = arith.constant 0 : index
    %c0_61 = arith.constant 0 : index
    %c0_62 = arith.constant 0 : index
    %96 = vector.load %arg17[%c0_59, %c0_60, %c0_61, %c0_62] : memref<1x4x17x17xf32, #tpu.memory_space<vmem>>, vector<1x4x17x17xf32>
    %97 = vector.shape_cast %96 : vector<1x4x17x17xf32> to vector<4x17x17xf32>
    %98 = vector.shape_cast %95 : vector<4x17x17xf32> to vector<1x4x17x17xf32>
    tpu.vector_store %arg17[%c0_59, %c0_60, %c0_61, %c0_62], %98 {strides = array<i32>} : memref<1x4x17x17xf32, #tpu.memory_space<vmem>>, vector<1x4x17x17xf32>,
    %c0_63 = arith.constant 0 : index
    %c0_64 = arith.constant 0 : index
    %c0_65 = arith.constant 0 : index
    %99 = vector.load %arg21[%c0_63, %c0_64, %c0_65] : memref<4x17x8xf32, #tpu.memory_space<vmem>>, vector<4x17x8xf32>
    "tpu.trace_start"() <{level = 10 : i32, message = "hqk,hkd->hqd"}> : () -> ()
    %cst_66 = arith.constant dense<0.000000e+00> : vector<4x17x8xf32>
    %100 = tpu.matmul %95, %99, %cst_66 {dimension_numbers = #tpu.dot_dimension_numbers<[2], [1], [1], [2], [0, 0, 0, 1, 1, 2], [0], [0]>} : vector<4x17x17xf32>, vector<4x17x8xf32>, vector<4x17x8xf32> -> vector<4x17x8xf32>
    "tpu.trace_stop"() : () -> ()
    %101 = vector.extract_strided_slice %100 {offsets = [0, 0, 0], sizes = [1, 17, 8], strides = [1, 1, 1]} : vector<4x17x8xf32> to vector<1x17x8xf32>
    %102 = vector.shape_cast %101 : vector<1x17x8xf32> to vector<17x8xf32>
    %c0_67 = arith.constant 0 : index
    %c0_68 = arith.constant 0 : index
    %103 = vector.load %arg22[%c0_67, %c0_68] : memref<17x32xf32, #tpu.memory_space<vmem>>, vector<17x8xf32>
    tpu.vector_store %arg22[%c0_67, %c0_68], %102 {strides = array<i32>} : memref<17x32xf32, #tpu.memory_space<vmem>>, vector<17x8xf32>,
    %104 = vector.extract_strided_slice %100 {offsets = [1, 0, 0], sizes = [1, 17, 8], strides = [1, 1, 1]} : vector<4x17x8xf32> to vector<1x17x8xf32>
    %105 = vector.shape_cast %104 : vector<1x17x8xf32> to vector<17x8xf32>
    %c0_69 = arith.constant 0 : index
    %c8 = arith.constant 8 : index
    %106 = vector.load %arg22[%c0_69, %c8] : memref<17x32xf32, #tpu.memory_space<vmem>>, vector<17x8xf32>
    tpu.vector_store %arg22[%c0_69, %c8], %105 {strides = array<i32>} : memref<17x32xf32, #tpu.memory_space<vmem>>, vector<17x8xf32>,
    %107 = vector.extract_strided_slice %100 {offsets = [2, 0, 0], sizes = [1, 17, 8], strides = [1, 1, 1]} : vector<4x17x8xf32> to vector<1x17x8xf32>
    %108 = vector.shape_cast %107 : vector<1x17x8xf32> to vector<17x8xf32>
    %c0_70 = arith.constant 0 : index
    %c16 = arith.constant 16 : index
    %109 = vector.load %arg22[%c0_70, %c16] : memref<17x32xf32, #tpu.memory_space<vmem>>, vector<17x8xf32>
    tpu.vector_store %arg22[%c0_70, %c16], %108 {strides = array<i32>} : memref<17x32xf32, #tpu.memory_space<vmem>>, vector<17x8xf32>,
    %110 = vector.extract_strided_slice %100 {offsets = [3, 0, 0], sizes = [1, 17, 8], strides = [1, 1, 1]} : vector<4x17x8xf32> to vector<1x17x8xf32>
    %111 = vector.shape_cast %110 : vector<1x17x8xf32> to vector<17x8xf32>
    %c0_71 = arith.constant 0 : index
    %c24 = arith.constant 24 : index
    %112 = vector.load %arg22[%c0_71, %c24] : memref<17x32xf32, #tpu.memory_space<vmem>>, vector<17x8xf32>
    tpu.vector_store %arg22[%c0_71, %c24], %111 {strides = array<i32>} : memref<17x32xf32, #tpu.memory_space<vmem>>, vector<17x8xf32>,
    %c0_72 = arith.constant 0 : index
    %c0_73 = arith.constant 0 : index
    %113 = vector.load %arg22[%c0_72, %c0_73] : memref<17x32xf32, #tpu.memory_space<vmem>>, vector<17x32xf32>
    %c0_74 = arith.constant 0 : index
    %c0_75 = arith.constant 0 : index
    %c0_76 = arith.constant 0 : index
    %114 = vector.load %arg6[%c0_74, %c0_75, %c0_76] : memref<1x32x32xf32, #tpu.memory_space<vmem>>, vector<1x32x32xf32>
    %115 = vector.shape_cast %114 : vector<1x32x32xf32> to vector<32x32xf32>
    %cst_77 = arith.constant dense<0.000000e+00> : vector<17x32xf32>
    %116 = tpu.matmul %113, %115, %cst_77 {dimension_numbers = #tpu.dot_dimension_numbers<[1], [0], [0], [1], [0, 0, 1, 1], [], []>} : vector<17x32xf32>, vector<32x32xf32>, vector<17x32xf32> -> vector<17x32xf32>
    %c0_78 = arith.constant 0 : index
    %c0_79 = arith.constant 0 : index
    %c0_80 = arith.constant 0 : index
    %117 = vector.load %arg7[%c0_78, %c0_79, %c0_80] : memref<1x1x32xf32, #tpu.memory_space<vmem>>, vector<1x1x32xf32>
    %118 = vector.shape_cast %117 : vector<1x1x32xf32> to vector<1x32xf32>
    %119 = vector.broadcast %118 : vector<1x32xf32> to vector<17x32xf32>
    %120 = arith.addf %116, %119 : vector<17x32xf32>
    %121 = arith.addf %3, %120 : vector<17x32xf32>
    %c0_81 = arith.constant 0 : index
    %c0_82 = arith.constant 0 : index
    %c0_83 = arith.constant 0 : index
    %122 = vector.load %arg8[%c0_81, %c0_82, %c0_83] : memref<1x1x32xf32, #tpu.memory_space<vmem>>, vector<1x1x32xf32>
    %123 = vector.shape_cast %122 : vector<1x1x32xf32> to vector<1x32xf32>
    %c0_84 = arith.constant 0 : index
    %c0_85 = arith.constant 0 : index
    %c0_86 = arith.constant 0 : index
    %124 = vector.load %arg9[%c0_84, %c0_85, %c0_86] : memref<1x1x32xf32, #tpu.memory_space<vmem>>, vector<1x1x32xf32>
    %125 = vector.shape_cast %124 : vector<1x1x32xf32> to vector<1x32xf32>
    %cst_87 = arith.constant dense<0.000000e+00> : vector<17xf32>
    %126 = vector.multi_reduction <add>, %121, %cst_87 [1] : vector<17x32xf32> to vector<17xf32>
    %127 = vector.shape_cast %126 : vector<17xf32> to vector<17x1xf32>
    %cst_88 = arith.constant 3.200000e+01 : f32
    %128 = vector.broadcast %cst_88 : f32 to vector<17x1xf32>
    %129 = arith.divf %127, %128 : vector<17x1xf32>
    %130 = vector.broadcast %129 : vector<17x1xf32> to vector<17x32xf32>
    %131 = arith.subf %121, %130 : vector<17x32xf32>
    %132 = arith.mulf %131, %131 : vector<17x32xf32>
    %cst_89 = arith.constant dense<0.000000e+00> : vector<17xf32>
    %133 = vector.multi_reduction <add>, %132, %cst_89 [1] : vector<17x32xf32> to vector<17xf32>
    %134 = vector.shape_cast %133 : vector<17xf32> to vector<17x1xf32>
    %cst_90 = arith.constant 3.200000e+01 : f32
    %135 = vector.broadcast %cst_90 : f32 to vector<17x1xf32>
    %136 = arith.divf %134, %135 : vector<17x1xf32>
    %137 = vector.broadcast %129 : vector<17x1xf32> to vector<17x32xf32>
    %138 = arith.subf %121, %137 : vector<17x32xf32>
    %cst_91 = arith.constant 9.99999974E-6 : f32
    %139 = vector.broadcast %cst_91 : f32 to vector<17x1xf32>
    %140 = arith.addf %136, %139 : vector<17x1xf32>
    %141 = math.rsqrt %140 : vector<17x1xf32>
    %142 = vector.broadcast %141 : vector<17x1xf32> to vector<17x32xf32>
    %143 = arith.mulf %138, %142 : vector<17x32xf32>
    %144 = vector.broadcast %123 : vector<1x32xf32> to vector<17x32xf32>
    %145 = arith.mulf %143, %144 : vector<17x32xf32>
    %146 = vector.broadcast %125 : vector<1x32xf32> to vector<17x32xf32>
    %147 = arith.addf %145, %146 : vector<17x32xf32>
    %c0_92 = arith.constant 0 : index
    %c0_93 = arith.constant 0 : index
    %c0_94 = arith.constant 0 : index
    %148 = vector.load %arg10[%c0_92, %c0_93, %c0_94] : memref<1x32x64xf32, #tpu.memory_space<vmem>>, vector<1x32x64xf32>
    %149 = vector.shape_cast %148 : vector<1x32x64xf32> to vector<32x64xf32>
    %cst_95 = arith.constant dense<0.000000e+00> : vector<17x64xf32>
    %150 = tpu.matmul %147, %149, %cst_95 {dimension_numbers = #tpu.dot_dimension_numbers<[1], [0], [0], [1], [0, 0, 1, 1], [], []>} : vector<17x32xf32>, vector<32x64xf32>, vector<17x64xf32> -> vector<17x64xf32>
    %c0_96 = arith.constant 0 : index
    %c0_97 = arith.constant 0 : index
    %c0_98 = arith.constant 0 : index
    %151 = vector.load %arg11[%c0_96, %c0_97, %c0_98] : memref<1x1x64xf32, #tpu.memory_space<vmem>>, vector<1x1x64xf32>
    %152 = vector.shape_cast %151 : vector<1x1x64xf32> to vector<1x64xf32>
    %153 = vector.broadcast %152 : vector<1x64xf32> to vector<17x64xf32>
    %154 = arith.addf %150, %153 : vector<17x64xf32>
    %cst_99 = arith.constant 5.000000e-01 : f32
    %155 = vector.broadcast %cst_99 : f32 to vector<17x64xf32>
    %156 = arith.mulf %155, %154 : vector<17x64xf32>
    %cst_100 = arith.constant 4.471500e-02 : f32
    %157 = vector.broadcast %cst_100 : f32 to vector<17x64xf32>
    %158 = arith.mulf %157, %154 : vector<17x64xf32>
    %159 = arith.mulf %158, %154 : vector<17x64xf32>
    %160 = arith.mulf %159, %154 : vector<17x64xf32>
    %161 = arith.addf %154, %160 : vector<17x64xf32>
    %cst_101 = arith.constant 0.797884583 : f32
    %162 = vector.broadcast %cst_101 : f32 to vector<17x64xf32>
    %163 = arith.mulf %162, %161 : vector<17x64xf32>
    %164 = math.tanh %163 : vector<17x64xf32>
    %cst_102 = arith.constant 1.000000e+00 : f32
    %165 = vector.broadcast %cst_102 : f32 to vector<17x64xf32>
    %166 = arith.addf %165, %164 : vector<17x64xf32>
    %167 = arith.mulf %156, %166 : vector<17x64xf32>
    %c0_103 = arith.constant 0 : index
    %c0_104 = arith.constant 0 : index
    %c0_105 = arith.constant 0 : index
    %168 = vector.load %arg12[%c0_103, %c0_104, %c0_105] : memref<1x64x32xf32, #tpu.memory_space<vmem>>, vector<1x64x32xf32>
    %169 = vector.shape_cast %168 : vector<1x64x32xf32> to vector<64x32xf32>
    %cst_106 = arith.constant dense<0.000000e+00> : vector<17x32xf32>
    %170 = tpu.matmul %167, %169, %cst_106 {dimension_numbers = #tpu.dot_dimension_numbers<[1], [0], [0], [1], [0, 0, 1, 1], [], []>} : vector<17x64xf32>, vector<64x32xf32>, vector<17x32xf32> -> vector<17x32xf32>
    %c0_107 = arith.constant 0 : index
    %c0_108 = arith.constant 0 : index
    %c0_109 = arith.constant 0 : index
    %171 = vector.load %arg13[%c0_107, %c0_108, %c0_109] : memref<1x1x32xf32, #tpu.memory_space<vmem>>, vector<1x1x32xf32>
    %172 = vector.shape_cast %171 : vector<1x1x32xf32> to vector<1x32xf32>
    %173 = vector.broadcast %172 : vector<1x32xf32> to vector<17x32xf32>
    %174 = arith.addf %170, %173 : vector<17x32xf32>
    %175 = arith.addf %121, %174 : vector<17x32xf32>
    %c0_110 = arith.constant 0 : index
    %c0_111 = arith.constant 0 : index
    %176 = vector.load %arg18[%c0_110, %c0_111] : memref<17x32xf32, #tpu.memory_space<vmem>>, vector<17x32xf32>
    tpu.vector_store %arg18[%c0_110, %c0_111], %175 {strides = array<i32>} : memref<17x32xf32, #tpu.memory_space<vmem>>, vector<17x32xf32>,
    %c1_i32 = arith.constant 1 : i32
    %177 = arith.cmpi eq, %arg1, %c1_i32 : i32
    %178 = arith.extui %177 : i1 to i32
    %c0_i32_112 = arith.constant 0 : i32
    %179 = arith.cmpi ne, %178, %c0_i32_112 : i32
    scf.if %179 {
      %c0_113 = arith.constant 0 : index
      %c0_114 = arith.constant 0 : index
      %180 = vector.load %arg14[%c0_113, %c0_114] : memref<1x32xf32, #tpu.memory_space<vmem>>, vector<1x32xf32>
      %c0_115 = arith.constant 0 : index
      %c0_116 = arith.constant 0 : index
      %181 = vector.load %arg15[%c0_115, %c0_116] : memref<1x32xf32, #tpu.memory_space<vmem>>, vector<1x32xf32>
      %cst_117 = arith.constant dense<0.000000e+00> : vector<17xf32>
      %182 = vector.multi_reduction <add>, %175, %cst_117 [1] : vector<17x32xf32> to vector<17xf32>
      %183 = vector.shape_cast %182 : vector<17xf32> to vector<17x1xf32>
      %cst_118 = arith.constant 3.200000e+01 : f32
      %184 = vector.broadcast %cst_118 : f32 to vector<17x1xf32>
      %185 = arith.divf %183, %184 : vector<17x1xf32>
      %186 = vector.broadcast %185 : vector<17x1xf32> to vector<17x32xf32>
      %187 = arith.subf %175, %186 : vector<17x32xf32>
      %188 = arith.mulf %187, %187 : vector<17x32xf32>
      %cst_119 = arith.constant dense<0.000000e+00> : vector<17xf32>
      %189 = vector.multi_reduction <add>, %188, %cst_119 [1] : vector<17x32xf32> to vector<17xf32>
      %190 = vector.shape_cast %189 : vector<17xf32> to vector<17x1xf32>
      %cst_120 = arith.constant 3.200000e+01 : f32
      %191 = vector.broadcast %cst_120 : f32 to vector<17x1xf32>
      %192 = arith.divf %190, %191 : vector<17x1xf32>
      %193 = vector.broadcast %185 : vector<17x1xf32> to vector<17x32xf32>
      %194 = arith.subf %175, %193 : vector<17x32xf32>
      %cst_121 = arith.constant 9.99999974E-6 : f32
      %195 = vector.broadcast %cst_121 : f32 to vector<17x1xf32>
      %196 = arith.addf %192, %195 : vector<17x1xf32>
      %197 = math.rsqrt %196 : vector<17x1xf32>
      %198 = vector.broadcast %197 : vector<17x1xf32> to vector<17x32xf32>
      %199 = arith.mulf %194, %198 : vector<17x32xf32>
      %200 = vector.broadcast %180 : vector<1x32xf32> to vector<17x32xf32>
      %201 = arith.mulf %199, %200 : vector<17x32xf32>
      %202 = vector.broadcast %181 : vector<1x32xf32> to vector<17x32xf32>
      %203 = arith.addf %201, %202 : vector<17x32xf32>
      %c0_122 = arith.constant 0 : index
      %c0_123 = arith.constant 0 : index
      %c0_124 = arith.constant 0 : index
      %204 = vector.load %arg16[%c0_122, %c0_123, %c0_124] : memref<1x17x32xf32, #tpu.memory_space<vmem>>, vector<1x17x32xf32>
      %205 = vector.shape_cast %204 : vector<1x17x32xf32> to vector<17x32xf32>
      %206 = vector.shape_cast %203 : vector<17x32xf32> to vector<1x17x32xf32>
      tpu.vector_store %arg16[%c0_122, %c0_123, %c0_124], %206 {strides = array<i32>} : memref<1x17x32xf32, #tpu.memory_space<vmem>>, vector<1x17x32xf32>,
    } else {
    }
    return
  }
  func.func @transform_0(%arg0: i32, %arg1: i32) -> (i32, i32, i32) {
    %c0_i32 = arith.constant 0 : i32
    %c0_i32_0 = arith.constant 0 : i32
    %c0_i32_1 = arith.constant 0 : i32
    return %arg0, %c0_i32, %c0_i32_0 : i32, i32, i32
  }
  func.func @transform_1(%arg0: i32, %arg1: i32) -> (i32, i32, i32) {
    %c0_i32 = arith.constant 0 : i32
    %c0_i32_0 = arith.constant 0 : i32
    %c0_i32_1 = arith.constant 0 : i32
    return %arg1, %c0_i32, %c0_i32_0 : i32, i32, i32
  }
  func.func @transform_2(%arg0: i32, %arg1: i32) -> (i32, i32, i32) {
    %c0_i32 = arith.constant 0 : i32
    %c0_i32_0 = arith.constant 0 : i32
    %c0_i32_1 = arith.constant 0 : i32
    return %arg1, %c0_i32, %c0_i32_0 : i32, i32, i32
  }
  func.func @transform_3(%arg0: i32, %arg1: i32) -> (i32, i32, i32) {
    %c0_i32 = arith.constant 0 : i32
    %c0_i32_0 = arith.constant 0 : i32
    %c0_i32_1 = arith.constant 0 : i32
    return %arg1, %c0_i32, %c0_i32_0 : i32, i32, i32
  }
  func.func @transform_4(%arg0: i32, %arg1: i32) -> (i32, i32, i32) {
    %c0_i32 = arith.constant 0 : i32
    %c0_i32_0 = arith.constant 0 : i32
    %c0_i32_1 = arith.constant 0 : i32
    return %arg1, %c0_i32, %c0_i32_0 : i32, i32, i32
  }
  func.func @transform_5(%arg0: i32, %arg1: i32) -> (i32, i32, i32) {
    %c0_i32 = arith.constant 0 : i32
    %c0_i32_0 = arith.constant 0 : i32
    %c0_i32_1 = arith.constant 0 : i32
    return %arg1, %c0_i32, %c0_i32_0 : i32, i32, i32
  }
  func.func @transform_6(%arg0: i32, %arg1: i32) -> (i32, i32, i32) {
    %c0_i32 = arith.constant 0 : i32
    %c0_i32_0 = arith.constant 0 : i32
    %c0_i32_1 = arith.constant 0 : i32
    return %arg1, %c0_i32, %c0_i32_0 : i32, i32, i32
  }
  func.func @transform_7(%arg0: i32, %arg1: i32) -> (i32, i32, i32) {
    %c0_i32 = arith.constant 0 : i32
    %c0_i32_0 = arith.constant 0 : i32
    %c0_i32_1 = arith.constant 0 : i32
    return %arg1, %c0_i32, %c0_i32_0 : i32, i32, i32
  }
  func.func @transform_8(%arg0: i32, %arg1: i32) -> (i32, i32, i32) {
    %c0_i32 = arith.constant 0 : i32
    %c0_i32_0 = arith.constant 0 : i32
    %c0_i32_1 = arith.constant 0 : i32
    return %arg1, %c0_i32, %c0_i32_0 : i32, i32, i32
  }
  func.func @transform_9(%arg0: i32, %arg1: i32) -> (i32, i32, i32) {
    %c0_i32 = arith.constant 0 : i32
    %c0_i32_0 = arith.constant 0 : i32
    %c0_i32_1 = arith.constant 0 : i32
    return %arg1, %c0_i32, %c0_i32_0 : i32, i32, i32
  }
  func.func @transform_10(%arg0: i32, %arg1: i32) -> (i32, i32, i32) {
    %c0_i32 = arith.constant 0 : i32
    %c0_i32_0 = arith.constant 0 : i32
    %c0_i32_1 = arith.constant 0 : i32
    return %arg1, %c0_i32, %c0_i32_0 : i32, i32, i32
  }
  func.func @transform_11(%arg0: i32, %arg1: i32) -> (i32, i32, i32) {
    %c0_i32 = arith.constant 0 : i32
    %c0_i32_0 = arith.constant 0 : i32
    %c0_i32_1 = arith.constant 0 : i32
    return %arg1, %c0_i32, %c0_i32_0 : i32, i32, i32
  }
  func.func @transform_12(%arg0: i32, %arg1: i32) -> (i32, i32) {
    %c0_i32 = arith.constant 0 : i32
    %c0_i32_0 = arith.constant 0 : i32
    %c0_i32_1 = arith.constant 0 : i32
    return %c0_i32, %c0_i32_0 : i32, i32
  }
  func.func @transform_13(%arg0: i32, %arg1: i32) -> (i32, i32) {
    %c0_i32 = arith.constant 0 : i32
    %c0_i32_0 = arith.constant 0 : i32
    %c0_i32_1 = arith.constant 0 : i32
    return %c0_i32, %c0_i32_0 : i32, i32
  }
  func.func @transform_14(%arg0: i32, %arg1: i32) -> (i32, i32, i32) {
    %c0_i32 = arith.constant 0 : i32
    %c0_i32_0 = arith.constant 0 : i32
    %c0_i32_1 = arith.constant 0 : i32
    return %arg0, %c0_i32, %c0_i32_0 : i32, i32, i32
  }
  func.func @transform_15(%arg0: i32, %arg1: i32) -> (i32, i32, i32, i32) {
    %c0_i32 = arith.constant 0 : i32
    %c0_i32_0 = arith.constant 0 : i32
    %c0_i32_1 = arith.constant 0 : i32
    return %arg0, %arg1, %c0_i32, %c0_i32_0 : i32, i32, i32, i32
  }
}

</mosaic_0001>

<llo_original>
// kernel: tpu_custom_call.1
$region0: #{tpu_custom_call.1}
  #allocation0 [shape = 'u32[]', space=smem, size = 0x4, offset = 0x4, fixed_abs, tag = 'smem constant byte address 0x4 - core index']
  #allocation1 [shape = 'u32[144,128]{1,0:T(1,128)}', space=vmem, size = 0x12000, scoped, tag = 'internal scratch']
  #allocation2 [shape = 'f32[17,32]{1,0:T(8,128)}', space=vmem, size = 0x3000, scoped, tag = 'scratch operand']
  #allocation3 [shape = 'f32[4,17,8]{2,1,0:T(8,128)}', space=vmem, size = 0xc000, scoped, tag = 'scratch operand']
  #allocation4 [shape = 'f32[4,17,8]{2,1,0:T(8,128)}', space=vmem, size = 0xc000, scoped, tag = 'scratch operand']
  #allocation5 [shape = 'f32[4,17,8]{2,1,0:T(8,128)}', space=vmem, size = 0xc000, scoped, tag = 'scratch operand']
  #allocation6 [shape = 'f32[17,32]{1,0:T(8,128)}', space=vmem, size = 0x3000, scoped, tag = 'scratch operand']
  %s0 = inlined_call_operand.vmem [shape: f32[2,17,32], index: 0, kind: input, shape index: {}]
  %s1 = inlined_call_operand.vmem [shape: f32[2,1,32], index: 1, kind: input, shape index: {}]
  %s2 = inlined_call_operand.vmem [shape: f32[2,1,32], index: 2, kind: input, shape index: {}]
  %s3 = inlined_call_operand.vmem [shape: f32[2,32,96], index: 3, kind: input, shape index: {}]
  %s4 = inlined_call_operand.vmem [shape: f32[2,32,32], index: 4, kind: input, shape index: {}]
  %s5 = inlined_call_operand.vmem [shape: f32[2,1,32], index: 5, kind: input, shape index: {}]
  %s6 = inlined_call_operand.vmem [shape: f32[2,1,32], index: 6, kind: input, shape index: {}]
  %s7 = inlined_call_operand.vmem [shape: f32[2,1,32], index: 7, kind: input, shape index: {}]
  %s8 = inlined_call_operand.vmem [shape: f32[2,32,64], index: 8, kind: input, shape index: {}]
  %s9 = inlined_call_operand.vmem [shape: f32[2,1,64], index: 9, kind: input, shape index: {}]
  %s10 = inlined_call_operand.vmem [shape: f32[2,64,32], index: 10, kind: input, shape index: {}]
  %s11 = inlined_call_operand.vmem [shape: f32[2,1,32], index: 11, kind: input, shape index: {}]
  %s12 = inlined_call_operand.vmem [shape: f32[1,32], index: 12, kind: input, shape index: {}]
  %s13 = inlined_call_operand.vmem [shape: f32[1,32], index: 13, kind: input, shape index: {}]
  %s14 = inlined_call_operand.vmem [shape: f32[2,17,32], index: 14, kind: output, shape index: {0}]
  %s15 = inlined_call_operand.vmem [shape: f32[2,8,17,17], index: 15, kind: output, shape index: {1}]
  %16 = xla_tuple %s14, %s15
  %s17 = sld [smem:[#allocation0]]
  $region105: #{tpu_custom_call.1} parent=0
    _
  %s19 = ssub.s32 1, %s17
  %s20 = scalar_select 0, %s19, %s17
  loop: start=0, step=1, limit=6
  $region2: #{tpu_custom_call.1} parent=0 // loop_pre_header
    _
  $region3: #{tpu_custom_call.1} parent=0 // loop_header
    %s22 = sphi 0, %s26
    %p23 = scmp.ge.s32.totalorder %s22, 6
    %s29 = sphi 0, %s41
    %s30 = sphi 0, %s37
    %s31 = sphi 0, %s29
    %s32 = sphi 0, %s30
    %s33 = sphi 0, %s31
    %s34 = sphi 0, %s32
    %s44 = sphi 0, %s46
    %s47 = sphi 0, %s44
    %s48 = sphi 0, %s47
    %s64 = sphi 0, %s48
    %s70 = sphi 0, %s72
    %s73 = sphi 0, %s70
    %s74 = sphi 0, %s73
    %s90 = sphi 0, %s74
    %s96 = sphi 0, %s98
    %s99 = sphi 0, %s96
    %s100 = sphi 0, %s99
    %s116 = sphi 0, %s100
    %s122 = sphi 0, %s124
    %s125 = sphi 0, %s122
    %s126 = sphi 0, %s125
    %s142 = sphi 0, %s126
    %s148 = sphi 0, %s150
    %s151 = sphi 0, %s148
    %s152 = sphi 0, %s151
    %s168 = sphi 0, %s152
    %s174 = sphi 0, %s176
    %s177 = sphi 0, %s174
    %s178 = sphi 0, %s177
    %s194 = sphi 0, %s178
    %s200 = sphi 0, %s202
    %s203 = sphi 0, %s200
    %s204 = sphi 0, %s203
    %s220 = sphi 0, %s204
    %s226 = sphi 0, %s228
    %s229 = sphi 0, %s226
    %s230 = sphi 0, %s229
    %s246 = sphi 0, %s230
    %s252 = sphi 0, %s254
    %s255 = sphi 0, %s252
    %s256 = sphi 0, %s255
    %s272 = sphi 0, %s256
    %s278 = sphi 0, %s280
    %s281 = sphi 0, %s278
    %s282 = sphi 0, %s281
    %s298 = sphi 0, %s282
    %s304 = sphi 0, %s306
    %s307 = sphi 0, %s304
    %s308 = sphi 0, %s307
    %s324 = sphi 0, %s308
    %s330 = sphi 0, %s332
    %s333 = sphi 0, %s330
    %s334 = sphi 0, %s333
    %s350 = sphi 0, %s334
    %s354 = sphi 0, %s354
    %s356 = sphi 0, %s354
    %s357 = sphi 0, %s356
    %s371 = sphi 0, %s357
    %s375 = sphi 0, %s375
    %s377 = sphi 0, %s375
    %s378 = sphi 0, %s377
    %s392 = sphi 0, %s378
    %s398 = sphi 0, %s400
    %s401 = sphi 0, %s398
    %s402 = sphi 0, %s401
    %s418 = sphi 0, %s402
    %s426 = sphi 0, %s428
    %s429 = sphi 0, %s426
    %s430 = sphi 0, %s429
    %s446 = sphi 0, %s430
  $region4: #{tpu_custom_call.1} parent=0 // loop_header_branch
    %25 = sbr.rel (%p23) target = $region8
  $region5: #{tpu_custom_call.1} parent=0 // loop_body
    %s27 = ssub.s32 %s22, 1
    %s28 = ssub.s32 %s22, 2
    %s35 = sadd.s32 1, %s30
    %p36 = scmp.ge.s32.totalorder %s35, 2
    %s37 = scalar_select %p36, 0, %s35
    %s38 = sadd.s32 1, %s29
    %s39 = scalar_select %p36, %s38, %s29
    %p40 = scmp.ge.s32.totalorder %s39, 2
    %s41 = scalar_select %p40, 0, %s39
    %s42 = ssub.s32 %s29, %s41
    %p43 = scmp.eq.s32.totalorder %s42, 0
    %s45 = sadd.s32 %s44, 1
    %s46 = scalar_select %p43, %s44, %s45
    %p49 = pneg %p43
    %p50 = scmp.eq.s32.totalorder %s22, 3
    %p51 = por %p49, %p50
    %p52 = scmp.ne.s32.totalorder %s44, %s47
    %p53 = scmp.eq.s32.totalorder %s22, 0
    %p54 = por %p52, %p53
    %p55 = scmp.ne.s32.totalorder %s44, %s47
    %p56 = scmp.eq.s32.totalorder %s27, 3
    %p57 = por %p55, %p56
    %p58 = scmp.ne.s32.totalorder %s47, %s48
    %p59 = scmp.eq.s32.totalorder %s27, 0
    %p60 = por %p58, %p59
    %p61 = scmp.ne.s32.totalorder %s47, %s48
    %p62 = scmp.eq.s32.totalorder %s28, 3
    %p63 = por %p61, %p62
    %p65 = scmp.ne.s32.totalorder %s48, %s64
    %p66 = scmp.eq.s32.totalorder %s28, 0
    %p67 = por %p65, %p66
    %s68 = ssub.s32 %s30, %s37
    %p69 = scmp.eq.s32.totalorder %s68, 0
    %s71 = sadd.s32 %s70, 1
    %s72 = scalar_select %p69, %s70, %s71
    %p75 = pneg %p69
    %p76 = scmp.eq.s32.totalorder %s22, 3
    %p77 = por %p75, %p76
    %p78 = scmp.ne.s32.totalorder %s70, %s73
    %p79 = scmp.eq.s32.totalorder %s22, 0
    %p80 = por %p78, %p79
    %p81 = scmp.ne.s32.totalorder %s70, %s73
    %p82 = scmp.eq.s32.totalorder %s27, 3
    %p83 = por %p81, %p82
    %p84 = scmp.ne.s32.totalorder %s73, %s74
    %p85 = scmp.eq.s32.totalorder %s27, 0
    %p86 = por %p84, %p85
    %p87 = scmp.ne.s32.totalorder %s73, %s74
    %p88 = scmp.eq.s32.totalorder %s28, 3
    %p89 = por %p87, %p88
    %p91 = scmp.ne.s32.totalorder %s74, %s90
    %p92 = scmp.eq.s32.totalorder %s28, 0
    %p93 = por %p91, %p92
    %s94 = ssub.s32 %s30, %s37
    %p95 = scmp.eq.s32.totalorder %s94, 0
    %s97 = sadd.s32 %s96, 1
    %s98 = scalar_select %p95, %s96, %s97
    %p101 = pneg %p95
    %p102 = scmp.eq.s32.totalorder %s22, 3
    %p103 = por %p101, %p102
    %p104 = scmp.ne.s32.totalorder %s96, %s99
    %p105 = scmp.eq.s32.totalorder %s22, 0
    %p106 = por %p104, %p105
    %p107 = scmp.ne.s32.totalorder %s96, %s99
    %p108 = scmp.eq.s32.totalorder %s27, 3
    %p109 = por %p107, %p108
    %p110 = scmp.ne.s32.totalorder %s99, %s100
    %p111 = scmp.eq.s32.totalorder %s27, 0
    %p112 = por %p110, %p111
    %p113 = scmp.ne.s32.totalorder %s99, %s100
    %p114 = scmp.eq.s32.totalorder %s28, 3
    %p115 = por %p113, %p114
    %p117 = scmp.ne.s32.totalorder %s100, %s116
    %p118 = scmp.eq.s32.totalorder %s28, 0
    %p119 = por %p117, %p118
    %s120 = ssub.s32 %s30, %s37
    %p121 = scmp.eq.s32.totalorder %s120, 0
    %s123 = sadd.s32 %s122, 1
    %s124 = scalar_select %p121, %s122, %s123
    %p127 = pneg %p121
    %p128 = scmp.eq.s32.totalorder %s22, 3
    %p129 = por %p127, %p128
    %p130 = scmp.ne.s32.totalorder %s122, %s125
    %p131 = scmp.eq.s32.totalorder %s22, 0
    %p132 = por %p130, %p131
    %p133 = scmp.ne.s32.totalorder %s122, %s125
    %p134 = scmp.eq.s32.totalorder %s27, 3
    %p135 = por %p133, %p134
    %p136 = scmp.ne.s32.totalorder %s125, %s126
    %p137 = scmp.eq.s32.totalorder %s27, 0
    %p138 = por %p136, %p137
    %p139 = scmp.ne.s32.totalorder %s125, %s126
    %p140 = scmp.eq.s32.totalorder %s28, 3
    %p141 = por %p139, %p140
    %p143 = scmp.ne.s32.totalorder %s126, %s142
    %p144 = scmp.eq.s32.totalorder %s28, 0
    %p145 = por %p143, %p144
    %s146 = ssub.s32 %s30, %s37
    %p147 = scmp.eq.s32.totalorder %s146, 0
    %s149 = sadd.s32 %s148, 1
    %s150 = scalar_select %p147, %s148, %s149
    %p153 = pneg %p147
    %p154 = scmp.eq.s32.totalorder %s22, 3
    %p155 = por %p153, %p154
    %p156 = scmp.ne.s32.totalorder %s148, %s151
    %p157 = scmp.eq.s32.totalorder %s22, 0
    %p158 = por %p156, %p157
    %p159 = scmp.ne.s32.totalorder %s148, %s151
    %p160 = scmp.eq.s32.totalorder %s27, 3
    %p161 = por %p159, %p160
    %p162 = scmp.ne.s32.totalorder %s151, %s152
    %p163 = scmp.eq.s32.totalorder %s27, 0
    %p164 = por %p162, %p163
    %p165 = scmp.ne.s32.totalorder %s151, %s152
    %p166 = scmp.eq.s32.totalorder %s28, 3
    %p167 = por %p165, %p166
    %p169 = scmp.ne.s32.totalorder %s152, %s168
    %p170 = scmp.eq.s32.totalorder %s28, 0
    %p171 = por %p169, %p170
    %s172 = ssub.s32 %s30, %s37
    %p173 = scmp.eq.s32.totalorder %s172, 0
    %s175 = sadd.s32 %s174, 1
    %s176 = scalar_select %p173, %s174, %s175
    %p179 = pneg %p173
    %p180 = scmp.eq.s32.totalorder %s22, 3
    %p181 = por %p179, %p180
    %p182 = scmp.ne.s32.totalorder %s174, %s177
    %p183 = scmp.eq.s32.totalorder %s22, 0
    %p184 = por %p182, %p183
    %p185 = scmp.ne.s32.totalorder %s174, %s177
    %p186 = scmp.eq.s32.totalorder %s27, 3
    %p187 = por %p185, %p186
    %p188 = scmp.ne.s32.totalorder %s177, %s178
    %p189 = scmp.eq.s32.totalorder %s27, 0
    %p190 = por %p188, %p189
    %p191 = scmp.ne.s32.totalorder %s177, %s178
    %p192 = scmp.eq.s32.totalorder %s28, 3
    %p193 = por %p191, %p192
    %p195 = scmp.ne.s32.totalorder %s178, %s194
    %p196 = scmp.eq.s32.totalorder %s28, 0
    %p197 = por %p195, %p196
    %s198 = ssub.s32 %s30, %s37
    %p199 = scmp.eq.s32.totalorder %s198, 0
    %s201 = sadd.s32 %s200, 1
    %s202 = scalar_select %p199, %s200, %s201
    %p205 = pneg %p199
    %p206 = scmp.eq.s32.totalorder %s22, 3
    %p207 = por %p205, %p206
    %p208 = scmp.ne.s32.totalorder %s200, %s203
    %p209 = scmp.eq.s32.totalorder %s22, 0
    %p210 = por %p208, %p209
    %p211 = scmp.ne.s32.totalorder %s200, %s203
    %p212 = scmp.eq.s32.totalorder %s27, 3
    %p213 = por %p211, %p212
    %p214 = scmp.ne.s32.totalorder %s203, %s204
    %p215 = scmp.eq.s32.totalorder %s27, 0
    %p216 = por %p214, %p215
    %p217 = scmp.ne.s32.totalorder %s203, %s204
    %p218 = scmp.eq.s32.totalorder %s28, 3
    %p219 = por %p217, %p218
    %p221 = scmp.ne.s32.totalorder %s204, %s220
    %p222 = scmp.eq.s32.totalorder %s28, 0
    %p223 = por %p221, %p222
    %s224 = ssub.s32 %s30, %s37
    %p225 = scmp.eq.s32.totalorder %s224, 0
    %s227 = sadd.s32 %s226, 1
    %s228 = scalar_select %p225, %s226, %s227
    %p231 = pneg %p225
    %p232 = scmp.eq.s32.totalorder %s22, 3
    %p233 = por %p231, %p232
    %p234 = scmp.ne.s32.totalorder %s226, %s229
    %p235 = scmp.eq.s32.totalorder %s22, 0
    %p236 = por %p234, %p235
    %p237 = scmp.ne.s32.totalorder %s226, %s229
    %p238 = scmp.eq.s32.totalorder %s27, 3
    %p239 = por %p237, %p238
    %p240 = scmp.ne.s32.totalorder %s229, %s230
    %p241 = scmp.eq.s32.totalorder %s27, 0
    %p242 = por %p240, %p241
    %p243 = scmp.ne.s32.totalorder %s229, %s230
    %p244 = scmp.eq.s32.totalorder %s28, 3
    %p245 = por %p243, %p244
    %p247 = scmp.ne.s32.totalorder %s230, %s246
    %p248 = scmp.eq.s32.totalorder %s28, 0
    %p249 = por %p247, %p248
    %s250 = ssub.s32 %s30, %s37
    %p251 = scmp.eq.s32.totalorder %s250, 0
    %s253 = sadd.s32 %s252, 1
    %s254 = scalar_select %p251, %s252, %s253
    %p257 = pneg %p251
    %p258 = scmp.eq.s32.totalorder %s22, 3
    %p259 = por %p257, %p258
    %p260 = scmp.ne.s32.totalorder %s252, %s255
    %p261 = scmp.eq.s32.totalorder %s22, 0
    %p262 = por %p260, %p261
    %p263 = scmp.ne.s32.totalorder %s252, %s255
    %p264 = scmp.eq.s32.totalorder %s27, 3
    %p265 = por %p263, %p264
    %p266 = scmp.ne.s32.totalorder %s255, %s256
    %p267 = scmp.eq.s32.totalorder %s27, 0
    %p268 = por %p266, %p267
    %p269 = scmp.ne.s32.totalorder %s255, %s256
    %p270 = scmp.eq.s32.totalorder %s28, 3
    %p271 = por %p269, %p270
    %p273 = scmp.ne.s32.totalorder %s256, %s272
    %p274 = scmp.eq.s32.totalorder %s28, 0
    %p275 = por %p273, %p274
    %s276 = ssub.s32 %s30, %s37
    %p277 = scmp.eq.s32.totalorder %s276, 0
    %s279 = sadd.s32 %s278, 1
    %s280 = scalar_select %p277, %s278, %s279
    %p283 = pneg %p277
    %p284 = scmp.eq.s32.totalorder %s22, 3
    %p285 = por %p283, %p284
    %p286 = scmp.ne.s32.totalorder %s278, %s281
    %p287 = scmp.eq.s32.totalorder %s22, 0
    %p288 = por %p286, %p287
    %p289 = scmp.ne.s32.totalorder %s278, %s281
    %p290 = scmp.eq.s32.totalorder %s27, 3
    %p291 = por %p289, %p290
    %p292 = scmp.ne.s32.totalorder %s281, %s282
    %p293 = scmp.eq.s32.totalorder %s27, 0
    %p294 = por %p292, %p293
    %p295 = scmp.ne.s32.totalorder %s281, %s282
    %p296 = scmp.eq.s32.totalorder %s28, 3
    %p297 = por %p295, %p296
    %p299 = scmp.ne.s32.totalorder %s282, %s298
    %p300 = scmp.eq.s32.totalorder %s28, 0
    %p301 = por %p299, %p300
    %s302 = ssub.s32 %s30, %s37
    %p303 = scmp.eq.s32.totalorder %s302, 0
    %s305 = sadd.s32 %s304, 1
    %s306 = scalar_select %p303, %s304, %s305
    %p309 = pneg %p303
    %p310 = scmp.eq.s32.totalorder %s22, 3
    %p311 = por %p309, %p310
    %p312 = scmp.ne.s32.totalorder %s304, %s307
    %p313 = scmp.eq.s32.totalorder %s22, 0
    %p314 = por %p312, %p313
    %p315 = scmp.ne.s32.totalorder %s304, %s307
    %p316 = scmp.eq.s32.totalorder %s27, 3
    %p317 = por %p315, %p316
    %p318 = scmp.ne.s32.totalorder %s307, %s308
    %p319 = scmp.eq.s32.totalorder %s27, 0
    %p320 = por %p318, %p319
    %p321 = scmp.ne.s32.totalorder %s307, %s308
    %p322 = scmp.eq.s32.totalorder %s28, 3
    %p323 = por %p321, %p322
    %p325 = scmp.ne.s32.totalorder %s308, %s324
    %p326 = scmp.eq.s32.totalorder %s28, 0
    %p327 = por %p325, %p326
    %s328 = ssub.s32 %s30, %s37
    %p329 = scmp.eq.s32.totalorder %s328, 0
    %s331 = sadd.s32 %s330, 1
    %s332 = scalar_select %p329, %s330, %s331
    %p335 = pneg %p329
    %p336 = scmp.eq.s32.totalorder %s22, 3
    %p337 = por %p335, %p336
    %p338 = scmp.ne.s32.totalorder %s330, %s333
    %p339 = scmp.eq.s32.totalorder %s22, 0
    %p340 = por %p338, %p339
    %p341 = scmp.ne.s32.totalorder %s330, %s333
    %p342 = scmp.eq.s32.totalorder %s27, 3
    %p343 = por %p341, %p342
    %p344 = scmp.ne.s32.totalorder %s333, %s334
    %p345 = scmp.eq.s32.totalorder %s27, 0
    %p346 = por %p344, %p345
    %p347 = scmp.ne.s32.totalorder %s333, %s334
    %p348 = scmp.eq.s32.totalorder %s28, 3
    %p349 = por %p347, %p348
    %p351 = scmp.ne.s32.totalorder %s334, %s350
    %p352 = scmp.eq.s32.totalorder %s28, 0
    %p353 = por %p351, %p352
    %s355 = sadd.s32 %s354, 1
    %p358 = scmp.eq.s32.totalorder %s22, 3
    %p359 = scmp.ne.s32.totalorder %s354, %s356
    %p360 = scmp.eq.s32.totalorder %s22, 0
    %p361 = por %p359, %p360
    %p362 = scmp.ne.s32.totalorder %s354, %s356
    %p363 = scmp.eq.s32.totalorder %s27, 3
    %p364 = por %p362, %p363
    %p365 = scmp.ne.s32.totalorder %s356, %s357
    %p366 = scmp.eq.s32.totalorder %s27, 0
    %p367 = por %p365, %p366
    %p368 = scmp.ne.s32.totalorder %s356, %s357
    %p369 = scmp.eq.s32.totalorder %s28, 3
    %p370 = por %p368, %p369
    %p372 = scmp.ne.s32.totalorder %s357, %s371
    %p373 = scmp.eq.s32.totalorder %s28, 0
    %p374 = por %p372, %p373
    %s376 = sadd.s32 %s375, 1
    %p379 = scmp.eq.s32.totalorder %s22, 3
    %p380 = scmp.ne.s32.totalorder %s375, %s377
    %p381 = scmp.eq.s32.totalorder %s22, 0
    %p382 = por %p380, %p381
    %p383 = scmp.ne.s32.totalorder %s375, %s377
    %p384 = scmp.eq.s32.totalorder %s27, 3
    %p385 = por %p383, %p384
    %p386 = scmp.ne.s32.totalorder %s377, %s378
    %p387 = scmp.eq.s32.totalorder %s27, 0
    %p388 = por %p386, %p387
    %p389 = scmp.ne.s32.totalorder %s377, %s378
    %p390 = scmp.eq.s32.totalorder %s28, 3
    %p391 = por %p389, %p390
    %p393 = scmp.ne.s32.totalorder %s378, %s392
    %p394 = scmp.eq.s32.totalorder %s28, 0
    %p395 = por %p393, %p394
    %s396 = ssub.s32 %s29, %s41
    %p397 = scmp.eq.s32.totalorder %s396, 0
    %s399 = sadd.s32 %s398, 1
    %s400 = scalar_select %p397, %s398, %s399
    %p403 = pneg %p397
    %p404 = scmp.eq.s32.totalorder %s22, 3
    %p405 = por %p403, %p404
    %p406 = scmp.ne.s32.totalorder %s398, %s401
    %p407 = scmp.eq.s32.totalorder %s22, 0
    %p408 = por %p406, %p407
    %p409 = scmp.ne.s32.totalorder %s398, %s401
    %p410 = scmp.eq.s32.totalorder %s27, 3
    %p411 = por %p409, %p410
    %p412 = scmp.ne.s32.totalorder %s401, %s402
    %p413 = scmp.eq.s32.totalorder %s27, 0
    %p414 = por %p412, %p413
    %p415 = scmp.ne.s32.totalorder %s401, %s402
    %p416 = scmp.eq.s32.totalorder %s28, 3
    %p417 = por %p415, %p416
    %p419 = scmp.ne.s32.totalorder %s402, %s418
    %p420 = scmp.eq.s32.totalorder %s28, 0
    %p421 = por %p419, %p420
    %s422 = ssub.s32 %s29, %s41
    %s423 = ssub.s32 %s30, %s37
    %s424 = sor.u32 %s422, %s423
    %p425 = scmp.eq.s32.totalorder %s424, 0
    %s427 = sadd.s32 %s426, 1
    %s428 = scalar_select %p425, %s426, %s427
    %p431 = pneg %p425
    %p432 = scmp.eq.s32.totalorder %s22, 3
    %p433 = por %p431, %p432
    %p434 = scmp.ne.s32.totalorder %s426, %s429
    %p435 = scmp.eq.s32.totalorder %s22, 0
    %p436 = por %p434, %p435
    %p437 = scmp.ne.s32.totalorder %s426, %s429
    %p438 = scmp.eq.s32.totalorder %s27, 3
    %p439 = por %p437, %p438
    %p440 = scmp.ne.s32.totalorder %s429, %s430
    %p441 = scmp.eq.s32.totalorder %s27, 0
    %p442 = por %p440, %p441
    %p443 = scmp.ne.s32.totalorder %s429, %s430
    %p444 = scmp.eq.s32.totalorder %s28, 3
    %p445 = por %p443, %p444
    %p447 = scmp.ne.s32.totalorder %s430, %s446
    %p448 = scmp.eq.s32.totalorder %s28, 0
    %p449 = por %p447, %p448
    %p450 = scmp.le.s32.totalorder 1, %s22
    %p451 = scmp.lt.s32.totalorder %s22, 5
    %p452 = pnand %p450, %p451
    %p453 = pneg %p452
    // Predicated region
    $region9: #{tpu_custom_call.1} parent=5 // pred_check
      _
    $region10: #{tpu_custom_call.1} parent=5 // pred_check_branch
      %455 = sbr.rel (%p452) target = $region12
    $region11: #{tpu_custom_call.1} parent=5 // pred_region
      %s456 = ssub.s32 %s22, 1
      // Predicated region
      $region13: #{tpu_custom_call.1} parent=11 // pred_check
        %p457 = pneg %p367
      $region14: #{tpu_custom_call.1} parent=11 // pred_check_branch
        %459 = sbr.rel (%p457) target = $region16
      $region15: #{tpu_custom_call.1} parent=11 // pred_region
        _
      $region16: #{tpu_custom_call.1} parent=11 // pred_fallthru
        _
      // Predicated region
      $region17: #{tpu_custom_call.1} parent=11 // pred_check
        %p460 = pneg %p388
      $region18: #{tpu_custom_call.1} parent=11 // pred_check_branch
        %462 = sbr.rel (%p460) target = $region20
      $region19: #{tpu_custom_call.1} parent=11 // pred_region
        _
      $region20: #{tpu_custom_call.1} parent=11 // pred_fallthru
        _
    $region12: #{tpu_custom_call.1} parent=5 // pred_fallthru
      _
    %p463 = scmp.lt.s32.totalorder %s22, 4
    // Predicated region
    $region21: #{tpu_custom_call.1} parent=5 // pred_check
      %p464 = pneg %p463
    $region22: #{tpu_custom_call.1} parent=5 // pred_check_branch
      %466 = sbr.rel (%p464) target = $region24
    $region23: #{tpu_custom_call.1} parent=5 // pred_region
      // Predicated region
      $region25: #{tpu_custom_call.1} parent=23 // pred_check
        %p467 = pneg %p54
      $region26: #{tpu_custom_call.1} parent=23 // pred_check_branch
        %469 = sbr.rel (%p467) target = $region28
      $region27: #{tpu_custom_call.1} parent=23 // pred_region
        %p470 = scmp.lt.s32.totalorder %s29, 1
        %s471 = scalar_select %p470, %s29, 1
        %s472 = smul.addr %s471, 3
        %s473 = smul.addr %s472, 8
        %s474 = scalar_lea.vmem %s0, %s473
      $region28: #{tpu_custom_call.1} parent=23 // pred_fallthru
        _
      // Predicated region
      $region29: #{tpu_custom_call.1} parent=23 // pred_check
        %p475 = pneg %p80
      $region30: #{tpu_custom_call.1} parent=23 // pred_check_branch
        %477 = sbr.rel (%p475) target = $region32
      $region31: #{tpu_custom_call.1} parent=23 // pred_region
        %p478 = scmp.lt.s32.totalorder %s30, 1
        %s479 = scalar_select %p478, %s30, 1
        %s480 = scalar_lea.vmem %s1, %s479
      $region32: #{tpu_custom_call.1} parent=23 // pred_fallthru
        _
      // Predicated region
      $region33: #{tpu_custom_call.1} parent=23 // pred_check
        %p481 = pneg %p106
      $region34: #{tpu_custom_call.1} parent=23 // pred_check_branch
        %483 = sbr.rel (%p481) target = $region36
      $region35: #{tpu_custom_call.1} parent=23 // pred_region
        %p484 = scmp.lt.s32.totalorder %s30, 1
        %s485 = scalar_select %p484, %s30, 1
        %s486 = scalar_lea.vmem %s2, %s485
      $region36: #{tpu_custom_call.1} parent=23 // pred_fallthru
        _
      // Predicated region
      $region37: #{tpu_custom_call.1} parent=23 // pred_check
        %p487 = pneg %p132
      $region38: #{tpu_custom_call.1} parent=23 // pred_check_branch
        %489 = sbr.rel (%p487) target = $region40
      $region39: #{tpu_custom_call.1} parent=23 // pred_region
        %p490 = scmp.lt.s32.totalorder %s30, 1
        %s491 = scalar_select %p490, %s30, 1
        %s492 = smul.addr %s491, 4
        %s493 = smul.addr %s492, 8
        %s494 = scalar_lea.vmem %s3, %s493
      $region40: #{tpu_custom_call.1} parent=23 // pred_fallthru
        _
      // Predicated region
      $region41: #{tpu_custom_call.1} parent=23 // pred_check
        %p495 = pneg %p158
      $region42: #{tpu_custom_call.1} parent=23 // pred_check_branch
        %497 = sbr.rel (%p495) target = $region44
      $region43: #{tpu_custom_call.1} parent=23 // pred_region
        %p498 = scmp.lt.s32.totalorder %s30, 1
        %s499 = scalar_select %p498, %s30, 1
        %s500 = smul.addr %s499, 4
        %s501 = smul.addr %s500, 8
        %s502 = scalar_lea.vmem %s4, %s501
      $region44: #{tpu_custom_call.1} parent=23 // pred_fallthru
        _
      // Predicated region
      $region45: #{tpu_custom_call.1} parent=23 // pred_check
        %p503 = pneg %p184
      $region46: #{tpu_custom_call.1} parent=23 // pred_check_branch
        %505 = sbr.rel (%p503) target = $region48
      $region47: #{tpu_custom_call.1} parent=23 // pred_region
        %p506 = scmp.lt.s32.totalorder %s30, 1
        %s507 = scalar_select %p506, %s30, 1
        %s508 = scalar_lea.vmem %s5, %s507
      $region48: #{tpu_custom_call.1} parent=23 // pred_fallthru
        _
      // Predicated region
      $region49: #{tpu_custom_call.1} parent=23 // pred_check
        %p509 = pneg %p210
      $region50: #{tpu_custom_call.1} parent=23 // pred_check_branch
        %511 = sbr.rel (%p509) target = $region52
      $region51: #{tpu_custom_call.1} parent=23 // pred_region
        %p512 = scmp.lt.s32.totalorder %s30, 1
        %s513 = scalar_select %p512, %s30, 1
        %s514 = scalar_lea.vmem %s6, %s513
      $region52: #{tpu_custom_call.1} parent=23 // pred_fallthru
        _
      // Predicated region
      $region53: #{tpu_custom_call.1} parent=23 // pred_check
        %p515 = pneg %p236
      $region54: #{tpu_custom_call.1} parent=23 // pred_check_branch
        %517 = sbr.rel (%p515) target = $region56
      $region55: #{tpu_custom_call.1} parent=23 // pred_region
        %p518 = scmp.lt.s32.totalorder %s30, 1
        %s519 = scalar_select %p518, %s30, 1
        %s520 = scalar_lea.vmem %s7, %s519
      $region56: #{tpu_custom_call.1} parent=23 // pred_fallthru
        _
      // Predicated region
      $region57: #{tpu_custom_call.1} parent=23 // pred_check
        %p521 = pneg %p262
      $region58: #{tpu_custom_call.1} parent=23 // pred_check_branch
        %523 = sbr.rel (%p521) target = $region60
      $region59: #{tpu_custom_call.1} parent=23 // pred_region
        %p524 = scmp.lt.s32.totalorder %s30, 1
        %s525 = scalar_select %p524, %s30, 1
        %s526 = smul.addr %s525, 4
        %s527 = smul.addr %s526, 8
        %s528 = scalar_lea.vmem %s8, %s527
      $region60: #{tpu_custom_call.1} parent=23 // pred_fallthru
        _
      // Predicated region
      $region61: #{tpu_custom_call.1} parent=23 // pred_check
        %p529 = pneg %p288
      $region62: #{tpu_custom_call.1} parent=23 // pred_check_branch
        %531 = sbr.rel (%p529) target = $region64
      $region63: #{tpu_custom_call.1} parent=23 // pred_region
        %p532 = scmp.lt.s32.totalorder %s30, 1
        %s533 = scalar_select %p532, %s30, 1
        %s534 = scalar_lea.vmem %s9, %s533
      $region64: #{tpu_custom_call.1} parent=23 // pred_fallthru
        _
      // Predicated region
      $region65: #{tpu_custom_call.1} parent=23 // pred_check
        %p535 = pneg %p314
      $region66: #{tpu_custom_call.1} parent=23 // pred_check_branch
        %537 = sbr.rel (%p535) target = $region68
      $region67: #{tpu_custom_call.1} parent=23 // pred_region
        %p538 = scmp.lt.s32.totalorder %s30, 1
        %s539 = scalar_select %p538, %s30, 1
        %s540 = smul.addr %s539, 8
        %s541 = smul.addr %s540, 8
        %s542 = scalar_lea.vmem %s10, %s541
      $region68: #{tpu_custom_call.1} parent=23 // pred_fallthru
        _
      // Predicated region
      $region69: #{tpu_custom_call.1} parent=23 // pred_check
        %p543 = pneg %p340
      $region70: #{tpu_custom_call.1} parent=23 // pred_check_branch
        %545 = sbr.rel (%p543) target = $region72
      $region71: #{tpu_custom_call.1} parent=23 // pred_region
        %p546 = scmp.lt.s32.totalorder %s30, 1
        %s547 = scalar_select %p546, %s30, 1
        %s548 = scalar_lea.vmem %s11, %s547
      $region72: #{tpu_custom_call.1} parent=23 // pred_fallthru
        _
    $region24: #{tpu_custom_call.1} parent=5 // pred_fallthru
      _
    %p549 = scmp.le.s32.totalorder 1, %s22
    %p550 = scmp.lt.s32.totalorder %s22, 5
    %p551 = pnand %p549, %p550
    %p552 = pneg %p551
    // Predicated region
    $region73: #{tpu_custom_call.1} parent=5 // pred_check
      _
    $region74: #{tpu_custom_call.1} parent=5 // pred_check_branch
      %554 = sbr.rel (%p551) target = $region76
    $region75: #{tpu_custom_call.1} parent=5 // pred_region
      %s555 = ssub.s32 %s22, 1
      %p556 = scmp.lt.s32.totalorder %s31, 1
      %s557 = scalar_select %p556, %s31, 1
      %s558 = smul.addr %s557, 3
      %s559 = smul.addr %s558, 8
      %s560 = scalar_lea.vmem %s0, %s559
      %p561 = pneg %p60
      %p562 = pneg %p57
      %p563 = scmp.lt.s32.totalorder %s32, 1
      %s564 = scalar_select %p563, %s32, 1
      %s565 = scalar_lea.vmem %s1, %s564
      %p566 = pneg %p86
      %p567 = pneg %p83
      %p568 = scmp.lt.s32.totalorder %s32, 1
      %s569 = scalar_select %p568, %s32, 1
      %s570 = scalar_lea.vmem %s2, %s569
      %p571 = pneg %p112
      %p572 = pneg %p109
      %p573 = scmp.lt.s32.totalorder %s32, 1
      %s574 = scalar_select %p573, %s32, 1
      %s575 = smul.addr %s574, 4
      %s576 = smul.addr %s575, 8
      %s577 = scalar_lea.vmem %s3, %s576
      %p578 = pneg %p138
      %p579 = pneg %p135
      %p580 = scmp.lt.s32.totalorder %s32, 1
      %s581 = scalar_select %p580, %s32, 1
      %s582 = smul.addr %s581, 4
      %s583 = smul.addr %s582, 8
      %s584 = scalar_lea.vmem %s4, %s583
      %p585 = pneg %p164
      %p586 = pneg %p161
      %p587 = scmp.lt.s32.totalorder %s32, 1
      %s588 = scalar_select %p587, %s32, 1
      %s589 = scalar_lea.vmem %s5, %s588
      %p590 = pneg %p190
      %p591 = pneg %p187
      %p592 = scmp.lt.s32.totalorder %s32, 1
      %s593 = scalar_select %p592, %s32, 1
      %s594 = scalar_lea.vmem %s6, %s593
      %p595 = pneg %p216
      %p596 = pneg %p213
      %p597 = scmp.lt.s32.totalorder %s32, 1
      %s598 = scalar_select %p597, %s32, 1
      %s599 = scalar_lea.vmem %s7, %s598
      %p600 = pneg %p242
      %p601 = pneg %p239
      %p602 = scmp.lt.s32.totalorder %s32, 1
      %s603 = scalar_select %p602, %s32, 1
      %s604 = smul.addr %s603, 4
      %s605 = smul.addr %s604, 8
      %s606 = scalar_lea.vmem %s8, %s605
      %p607 = pneg %p268
      %p608 = pneg %p265
      %p609 = scmp.lt.s32.totalorder %s32, 1
      %s610 = scalar_select %p609, %s32, 1
      %s611 = scalar_lea.vmem %s9, %s610
      %p612 = pneg %p294
      %p613 = pneg %p291
      %p614 = scmp.lt.s32.totalorder %s32, 1
      %s615 = scalar_select %p614, %s32, 1
      %s616 = smul.addr %s615, 8
      %s617 = smul.addr %s616, 8
      %s618 = scalar_lea.vmem %s10, %s617
      %p619 = pneg %p320
      %p620 = pneg %p317
      %p621 = scmp.lt.s32.totalorder %s32, 1
      %s622 = scalar_select %p621, %s32, 1
      %s623 = scalar_lea.vmem %s11, %s622
      %p624 = pneg %p346
      %p625 = pneg %p343
      %p626 = pneg %p367
      %p627 = pneg %p364
      %p628 = pneg %p388
      %p629 = pneg %p385
      %p630 = pneg %p414
      %p631 = pneg %p411
      %p632 = scmp.lt.s32.totalorder %s31, 1
      %s633 = scalar_select %p632, %s31, 1
      %s634 = smul.addr %s633, 3
      %s635 = smul.addr %s634, 8
      %s636 = scalar_lea.vmem %s14, %s635
      %p637 = pneg %p442
      %p638 = pneg %p439
      %s639 = smul.u32 4, %s32
      %p640 = scmp.lt.s32.totalorder %s31, 1
      %s641 = scalar_select %p640, %s31, 1
      %p642 = scmp.lt.s32.totalorder %s639, 7
      %s643 = scalar_select %p642, %s639, 7
      %s644 = smul.addr %s643, 3
      %s645 = smul.addr %s641, 24
      %s646 = sadd.s32 %s644, %s645
      %s647 = smul.addr %s646, 8
      %s648 = scalar_lea.vmem %s15, %s647
      %p649 = scmp.lt.s32.totalorder %s31, 1
      %s650 = scalar_select %p649, %s31, 1
      %s651 = smul.addr %s650, 3
      %s652 = smul.addr %s651, 8
      %s653 = scalar_lea.vmem %s0, %s652
      %p654 = scmp.lt.s32.totalorder %s32, 1
      %s655 = scalar_select %p654, %s32, 1
      %s656 = scalar_lea.vmem %s1, %s655
      %p657 = scmp.lt.s32.totalorder %s32, 1
      %s658 = scalar_select %p657, %s32, 1
      %s659 = scalar_lea.vmem %s2, %s658
      %p660 = scmp.lt.s32.totalorder %s32, 1
      %s661 = scalar_select %p660, %s32, 1
      %s662 = smul.addr %s661, 4
      %s663 = smul.addr %s662, 8
      %s664 = scalar_lea.vmem %s3, %s663
      %p665 = scmp.lt.s32.totalorder %s32, 1
      %s666 = scalar_select %p665, %s32, 1
      %s667 = smul.addr %s666, 4
      %s668 = smul.addr %s667, 8
      %s669 = scalar_lea.vmem %s4, %s668
      %p670 = scmp.lt.s32.totalorder %s32, 1
      %s671 = scalar_select %p670, %s32, 1
      %s672 = scalar_lea.vmem %s5, %s671
      %p673 = scmp.lt.s32.totalorder %s32, 1
      %s674 = scalar_select %p673, %s32, 1
      %s675 = scalar_lea.vmem %s6, %s674
      %p676 = scmp.lt.s32.totalorder %s32, 1
      %s677 = scalar_select %p676, %s32, 1
      %s678 = scalar_lea.vmem %s7, %s677
      %p679 = scmp.lt.s32.totalorder %s32, 1
      %s680 = scalar_select %p679, %s32, 1
      %s681 = smul.addr %s680, 4
      %s682 = smul.addr %s681, 8
      %s683 = scalar_lea.vmem %s8, %s682
      %p684 = scmp.lt.s32.totalorder %s32, 1
      %s685 = scalar_select %p684, %s32, 1
      %s686 = scalar_lea.vmem %s9, %s685
      %p687 = scmp.lt.s32.totalorder %s32, 1
      %s688 = scalar_select %p687, %s32, 1
      %s689 = smul.addr %s688, 8
      %s690 = smul.addr %s689, 8
      %s691 = scalar_lea.vmem %s10, %s690
      %p692 = scmp.lt.s32.totalorder %s32, 1
      %s693 = scalar_select %p692, %s32, 1
      %s694 = scalar_lea.vmem %s11, %s693
      %p695 = scmp.lt.s32.totalorder %s31, 1
      %s696 = scalar_select %p695, %s31, 1
      %s697 = smul.addr %s696, 3
      %s698 = smul.addr %s697, 8
      %s699 = scalar_lea.vmem %s14, %s698
      %s700 = smul.u32 4, %s32
      %p701 = scmp.lt.s32.totalorder %s31, 1
      %s702 = scalar_select %p701, %s31, 1
      %p703 = scmp.lt.s32.totalorder %s700, 7
      %s704 = scalar_select %p703, %s700, 7
      %s705 = smul.addr %s704, 3
      %s706 = smul.addr %s702, 24
      %s707 = sadd.s32 %s705, %s706
      %s708 = smul.addr %s707, 8
      %s709 = scalar_lea.vmem %s15, %s708
      %s710 = smul.u32 4, %s32
      %p711 = scmp.eq.s32.totalorder %s32, 0
      // Predicated region
      $region77: #{tpu_custom_call.1} parent=75 // pred_check
        %p712 = pneg %p711
      $region78: #{tpu_custom_call.1} parent=75 // pred_check_branch
        %714 = sbr.rel (%p712) target = $region80
      $region79: #{tpu_custom_call.1} parent=75 // pred_region
        %v715 = vld [vmem:[%s653] sm:$0xff]
        %v716 = vld [vmem:[%s653 + $0x8] sm:$0xff]
        %v717 = vld [vmem:[%s653 + $0x10] sm:$0x1]
        %vm718 = vcmask 261120
        %719 = vst.msk [vmem:[#allocation2] sm:$0xff] %vm718, %v715
        %720 = vst.msk [vmem:[#allocation2 + $0x8] sm:$0xff] %vm718, %v716
        %vm721 = vcmask 253952
        %722 = vst.msk [vmem:[#allocation2 + $0x10] sm:$0x1] %vm721, %v717
      $region80: #{tpu_custom_call.1} parent=75 // pred_fallthru
        _
      %v723 = vld [vmem:[#allocation2] sm:$0xff]
      %v724 = vld [vmem:[#allocation2 + $0x8] sm:$0xff]
      %v725 = vld [vmem:[#allocation2 + $0x10] sm:$0x1]
      %v726 = vld [vmem:[%s656] sm:$0x1]
      %v727 = vld [vmem:[%s659] sm:$0x1]
      %vm728 = vcmask 261120
      %v729 = vsel %vm728, %v723, 0.0
      %730 = vadd.xlane.f32.xlu0 %v729
      %v731 = vpop.xlane.xlu0 %730
      %v732 = vsel %vm728, %v724, 0.0
      %733 = vadd.xlane.f32.xlu0 %v732
      %v734 = vpop.xlane.xlu0 %733
      %vm735 = vcmask 253952
      %v736 = vsel %vm735, %v725, 0.0
      %737 = vadd.xlane.f32.xlu0 %v736
      %v738 = vpop.xlane.xlu0 %737
      %v739 = vrcp.pop 32.0
      %v740 = vmul.f32 %v731, %v739
      %v741 = vmul.f32 %v734, %v739
      %v742 = vmul.f32 %v738, %v739
      %v743 = vsub.f32 %v723, %v740
      %v744 = vsub.f32 %v724, %v741
      %v745 = vsub.f32 %v725, %v742
      %v746 = vmul.f32 %v743, %v743
      %v747 = vmul.f32 %v744, %v744
      %v748 = vmul.f32 %v745, %v745
      %v749 = vsel %vm728, %v746, 0.0
      %750 = vadd.xlane.f32.xlu0 %v749
      %v751 = vpop.xlane.xlu0 %750
      %v752 = vsel %vm728, %v747, 0.0
      %753 = vadd.xlane.f32.xlu0 %v752
      %v754 = vpop.xlane.xlu0 %753
      %v755 = vsel %vm735, %v748, 0.0
      %756 = vadd.xlane.f32.xlu0 %v755
      %v757 = vpop.xlane.xlu0 %756
      %v758 = vmul.f32 %v751, %v739
      %v759 = vmul.f32 %v754, %v739
      %v760 = vmul.f32 %v757, %v739
      %v761 = vadd.f32 %v758, 1e-05
      %v762 = vadd.f32 %v759, 1e-05
      %v763 = vadd.f32 %v760, 1e-05
      %v764 = vrsqrt.pop %v761
      %v765 = vrsqrt.pop %v762
      %v766 = vrsqrt.pop %v763
      %v767 = vmul.f32 %v743, %v764
      %v768 = vmul.f32 %v744, %v765
      %v769 = vmul.f32 %v745, %v766
      %v771 = vlaneseq
      %v772 = vshrl.u32 %v771, 7
      %v773 = vsub.s32 0, %v772
      %v774 = vrot.slane %v726, %v773
      %v776 = vmul.f32 %v767, %v774
      %v777 = vmul.f32 %v768, %v774
      %v778 = vmul.f32 %v769, %v774
      %v780 = vlaneseq
      %v781 = vshrl.u32 %v780, 7
      %v782 = vsub.s32 0, %v781
      %v783 = vrot.slane %v727, %v782
      %v785 = vadd.f32 %v776, %v783
      %v786 = vadd.f32 %v777, %v783
      %v787 = vadd.f32 %v778, %v783
      %v788 = vld [vmem:[%s664] sm:$0xff]
      %v789 = vld [vmem:[%s664 + $0x8] sm:$0xff]
      %v790 = vld [vmem:[%s664 + $0x10] sm:$0xff]
      %v791 = vld [vmem:[%s664 + $0x18] sm:$0xff]
      %v793 = vsel %vm728, %v785, 0
      %v796 = vsel %vm728, %v786, 0
      %v799 = vsel %vm728, %v787, 0
      %801 = vmatprep.subr.mxu0 0.0
      %802 = vmatpush1.msra.mxu0 %v788
      %803 = vmatprep.subr.mxu0 0.0
      %804 = vmatpush1.msra.mxu0 %v789
      %805 = vmatprep.subr.mxu0 0.0
      %806 = vmatpush1.msra.mxu0 %v790
      %807 = vmatprep.subr.mxu0 0.0
      %808 = vmatpush1.msra.mxu0 %v791
      %809 = vmatprep.subr.mxu0 0.0
      %810 = vmatpush1.msra.mxu0 0.0
      %811 = vmatprep.subr.mxu0 0.0
      %812 = vmatpush1.msra.mxu0 0.0
      %813 = vmatprep.subr.mxu0 0.0
      %814 = vmatpush1.msra.mxu0 0.0
      %815 = vmatprep.subr.mxu0 0.0
      %816 = vmatpush1.msra.mxu0 0.0
      %817 = vmatprep.subr.mxu0 0.0
      %818 = vmatpush1.msra.mxu0 0.0
      %819 = vmatprep.subr.mxu0 0.0
      %820 = vmatpush1.msra.mxu0 0.0
      %821 = vmatprep.subr.mxu0 0.0
      %822 = vmatpush1.msra.mxu0 0.0
      %823 = vmatprep.subr.mxu0 0.0
      %824 = vmatpush1.msra.mxu0 0.0
      %825 = vmatprep.subr.mxu0 0.0
      %826 = vmatpush1.msra.mxu0 0.0
      %827 = vmatprep.subr.mxu0 0.0
      %828 = vmatpush1.msra.mxu0 0.0
      %829 = vmatprep.subr.mxu0 0.0
      %830 = vmatpush1.msra.mxu0 0.0
      %831 = vmatprep.subr.mxu0 0.0
      %832 = vmatpush1.msra.mxu0 0.0
      %833 = vmatprep.subr.mxu0 0.0
      %834 = vmatpush1.msra.mxu0 0.0
      %835 = vmatprep.subr.mxu0 0.0
      %836 = vmatpush1.msra.mxu0 0.0
      %837 = vmatprep.subr.mxu0 0.0
      %838 = vmatpush1.msra.mxu0 0.0
      %839 = vmatprep.subr.mxu0 0.0
      %840 = vmatpush1.msra.mxu0 0.0
      %841 = vmatprep.subr.mxu0 0.0
      %842 = vmatpush1.msra.mxu0 0.0
      %843 = vmatprep.subr.mxu0 0.0
      %844 = vmatpush1.msra.mxu0 0.0
      %845 = vmatprep.subr.mxu0 0.0
      %846 = vmatpush1.msra.mxu0 0.0
      %847 = vmatprep.subr.mxu0 0.0
      %848 = vmatpush1.msra.mxu0 0.0
      %849 = vmatprep.subr.mxu0 0.0
      %850 = vmatpush1.msra.mxu0 0.0
      %851 = vmatprep.subr.mxu0 0.0
      %852 = vmatpush1.msra.mxu0 0.0
      %853 = vmatprep.subr.mxu0 0.0
      %854 = vmatpush1.msra.mxu0 0.0
      %855 = vmatprep.subr.mxu0 0.0
      %856 = vmatpush1.msra.mxu0 0.0
      %857 = vmatprep.subr.mxu0 0.0
      %858 = vmatpush1.msra.mxu0 0.0
      %859 = vmatprep.subr.mxu0 0.0
      %860 = vmatpush1.msra.mxu0 0.0
      %861 = vmatprep.subr.mxu0 0.0
      %862 = vmatpush1.msra.mxu0 0.0
      %863 = vmatprep.subr.mxu0 0.0
      %864 = vmatpush1.msra.mxu0 0.0
      %865 = vmatprep.mubr.f32.mxu0 0.0
      %866 = vmatmul.mubr.f32.gmra.mrb[0].mxu0 %v793
      %v867 = vpop.f32.mrb[0].mxu0
      %v868 = vadd.f32 0.0, %v867
      %v869 = vpop.f32.mrb[0].mxu0
      %870 = vmatprep.mubr.f32.mxu0 0.0
      %871 = vmatmul.mubr.f32.gmra.mrb[0].mxu0 %v796
      %v872 = vpop.f32.mrb[0].mxu0
      %v873 = vadd.f32 0.0, %v872
      %v874 = vpop.f32.mrb[0].mxu0
      %875 = vmatprep.mubr.f32.mxu0 0.0
      %876 = vmatmul.mubr.f32.gmra.mrb[0].mxu0 %v799
      %v877 = vpop.f32.mrb[0].mxu0
      %v878 = vadd.f32 0.0, %v877
      %v879 = vpop.f32.mrb[0].mxu0
      %880 = vdwg.mxu0
      %vm881 = vcmask 64512
      %882 = vst.msk [vmem:[#allocation3] sm:$0xff] %vm881, %v868
      %883 = vst.msk [vmem:[#allocation3 + $0x8] sm:$0xff] %vm881, %v873
      %vm884 = vcmask 57344
      %885 = vst.msk [vmem:[#allocation3 + $0x10] sm:$0x1] %vm884, %v878
      %889 = vrot.lane.b32.xlu0 %v868, 96
      %v890 = vpop.permute.xlu0 %889
      %891 = vrot.lane.b32.xlu0 %v873, 96
      %v892 = vpop.permute.xlu0 %891
      %893 = vrot.lane.b32.xlu0 %v878, 96
      %v894 = vpop.permute.xlu0 %893
      %898 = vst.msk [vmem:[#allocation4] sm:$0xff] %vm881, %v890
      %899 = vst.msk [vmem:[#allocation4 + $0x8] sm:$0xff] %vm881, %v892
      %900 = vst.msk [vmem:[#allocation4 + $0x10] sm:$0x1] %vm884, %v894
      %901 = vrot.lane.b32.xlu0 %v868, 64
      %v902 = vpop.permute.xlu0 %901
      %903 = vrot.lane.b32.xlu0 %v873, 64
      %v904 = vpop.permute.xlu0 %903
      %905 = vrot.lane.b32.xlu0 %v878, 64
      %v906 = vpop.permute.xlu0 %905
      %910 = vst.msk [vmem:[#allocation5] sm:$0xff] %vm881, %v902
      %911 = vst.msk [vmem:[#allocation5 + $0x8] sm:$0xff] %vm881, %v904
      %912 = vst.msk [vmem:[#allocation5 + $0x10] sm:$0x1] %vm884, %v906
      %913 = vrot.lane.b32.xlu0 %v868, 120
      %v914 = vpop.permute.xlu0 %913
      %915 = vrot.lane.b32.xlu0 %v873, 120
      %v916 = vpop.permute.xlu0 %915
      %917 = vrot.lane.b32.xlu0 %v878, 120
      %v918 = vpop.permute.xlu0 %917
      %s922 = scalar_lea.vmem [#allocation3], 24
      %923 = vst.msk [vmem:[%s922] sm:$0xff] %vm881, %v914
      %924 = vst.msk [vmem:[%s922 + $0x8] sm:$0xff] %vm881, %v916
      %925 = vst.msk [vmem:[%s922 + $0x10] sm:$0x1] %vm884, %v918
      %926 = vrot.lane.b32.xlu0 %v868, 88
      %v927 = vpop.permute.xlu0 %926
      %928 = vrot.lane.b32.xlu0 %v873, 88
      %v929 = vpop.permute.xlu0 %928
      %930 = vrot.lane.b32.xlu0 %v878, 88
      %v931 = vpop.permute.xlu0 %930
      %s935 = scalar_lea.vmem [#allocation4], 24
      %936 = vst.msk [vmem:[%s935] sm:$0xff] %vm881, %v927
      %937 = vst.msk [vmem:[%s935 + $0x8] sm:$0xff] %vm881, %v929
      %938 = vst.msk [vmem:[%s935 + $0x10] sm:$0x1] %vm884, %v931
      %939 = vrot.lane.b32.xlu0 %v868, 56
      %v940 = vpop.permute.xlu0 %939
      %941 = vrot.lane.b32.xlu0 %v873, 56
      %v942 = vpop.permute.xlu0 %941
      %943 = vrot.lane.b32.xlu0 %v878, 56
      %v944 = vpop.permute.xlu0 %943
      %s948 = scalar_lea.vmem [#allocation5], 24
      %949 = vst.msk [vmem:[%s948] sm:$0xff] %vm881, %v940
      %950 = vst.msk [vmem:[%s948 + $0x8] sm:$0xff] %vm881, %v942
      %951 = vst.msk [vmem:[%s948 + $0x10] sm:$0x1] %vm884, %v944
      %952 = vrot.lane.b32.xlu0 %v868, 112
      %v953 = vpop.permute.xlu0 %952
      %954 = vrot.lane.b32.xlu0 %v873, 112
      %v955 = vpop.permute.xlu0 %954
      %956 = vrot.lane.b32.xlu0 %v878, 112
      %v957 = vpop.permute.xlu0 %956
      %s961 = scalar_lea.vmem [#allocation3], 48
      %962 = vst.msk [vmem:[%s961] sm:$0xff] %vm881, %v953
      %963 = vst.msk [vmem:[%s961 + $0x8] sm:$0xff] %vm881, %v955
      %964 = vst.msk [vmem:[%s961 + $0x10] sm:$0x1] %vm884, %v957
      %965 = vrot.lane.b32.xlu0 %v868, 80
      %v966 = vpop.permute.xlu0 %965
      %967 = vrot.lane.b32.xlu0 %v873, 80
      %v968 = vpop.permute.xlu0 %967
      %969 = vrot.lane.b32.xlu0 %v878, 80
      %v970 = vpop.permute.xlu0 %969
      %s974 = scalar_lea.vmem [#allocation4], 48
      %975 = vst.msk [vmem:[%s974] sm:$0xff] %vm881, %v966
      %976 = vst.msk [vmem:[%s974 + $0x8] sm:$0xff] %vm881, %v968
      %977 = vst.msk [vmem:[%s974 + $0x10] sm:$0x1] %vm884, %v970
      %978 = vrot.lane.b32.xlu0 %v868, 48
      %v979 = vpop.permute.xlu0 %978
      %980 = vrot.lane.b32.xlu0 %v873, 48
      %v981 = vpop.permute.xlu0 %980
      %982 = vrot.lane.b32.xlu0 %v878, 48
      %v983 = vpop.permute.xlu0 %982
      %s987 = scalar_lea.vmem [#allocation5], 48
      %988 = vst.msk [vmem:[%s987] sm:$0xff] %vm881, %v979
      %989 = vst.msk [vmem:[%s987 + $0x8] sm:$0xff] %vm881, %v981
      %990 = vst.msk [vmem:[%s987 + $0x10] sm:$0x1] %vm884, %v983
      %991 = vrot.lane.b32.xlu0 %v868, 104
      %v992 = vpop.permute.xlu0 %991
      %993 = vrot.lane.b32.xlu0 %v873, 104
      %v994 = vpop.permute.xlu0 %993
      %995 = vrot.lane.b32.xlu0 %v878, 104
      %v996 = vpop.permute.xlu0 %995
      %s1000 = scalar_lea.vmem [#allocation3], 72
      %1001 = vst.msk [vmem:[%s1000] sm:$0xff] %vm881, %v992
      %1002 = vst.msk [vmem:[%s1000 + $0x8] sm:$0xff] %vm881, %v994
      %1003 = vst.msk [vmem:[%s1000 + $0x10] sm:$0x1] %vm884, %v996
      %1004 = vrot.lane.b32.xlu0 %v868, 72
      %v1005 = vpop.permute.xlu0 %1004
      %1006 = vrot.lane.b32.xlu0 %v873, 72
      %v1007 = vpop.permute.xlu0 %1006
      %1008 = vrot.lane.b32.xlu0 %v878, 72
      %v1009 = vpop.permute.xlu0 %1008
      %s1013 = scalar_lea.vmem [#allocation4], 72
      %1014 = vst.msk [vmem:[%s1013] sm:$0xff] %vm881, %v1005
      %1015 = vst.msk [vmem:[%s1013 + $0x8] sm:$0xff] %vm881, %v1007
      %1016 = vst.msk [vmem:[%s1013 + $0x10] sm:$0x1] %vm884, %v1009
      %1017 = vrot.lane.b32.xlu0 %v868, 40
      %v1018 = vpop.permute.xlu0 %1017
      %1019 = vrot.lane.b32.xlu0 %v873, 40
      %v1020 = vpop.permute.xlu0 %1019
      %1021 = vrot.lane.b32.xlu0 %v878, 40
      %v1022 = vpop.permute.xlu0 %1021
      %s1026 = scalar_lea.vmem [#allocation5], 72
      %1027 = vst.msk [vmem:[%s1026] sm:$0xff] %vm881, %v1018
      %1028 = vst.msk [vmem:[%s1026 + $0x8] sm:$0xff] %vm881, %v1020
      %1029 = vst.msk [vmem:[%s1026 + $0x10] sm:$0x1] %vm884, %v1022
      %v1030 = vld [vmem:[#allocation3] sm:$0xff]
      %v1031 = vld [vmem:[#allocation3 + $0x8] sm:$0xff]
      %v1032 = vld [vmem:[#allocation3 + $0x10] sm:$0x1]
      %v1033 = vld [vmem:[#allocation3 + $0x18] sm:$0xff]
      %v1034 = vld [vmem:[#allocation3 + $0x20] sm:$0xff]
      %v1035 = vld [vmem:[#allocation3 + $0x28] sm:$0x1]
      %v1036 = vld [vmem:[#allocation3 + $0x30] sm:$0xff]
      %v1037 = vld [vmem:[#allocation3 + $0x38] sm:$0xff]
      %v1038 = vld [vmem:[#allocation3 + $0x40] sm:$0x1]
      %v1039 = vld [vmem:[#allocation3 + $0x48] sm:$0xff]
      %v1040 = vld [vmem:[#allocation3 + $0x50] sm:$0xff]
      %v1041 = vld [vmem:[#allocation3 + $0x58] sm:$0x1]
      %v1042 = vld [vmem:[#allocation4] sm:$0xff]
      %v1043 = vld [vmem:[#allocation4 + $0x8] sm:$0xff]
      %v1044 = vld [vmem:[#allocation4 + $0x10] sm:$0x1]
      %v1045 = vld [vmem:[#allocation4 + $0x18] sm:$0xff]
      %v1046 = vld [vmem:[#allocation4 + $0x20] sm:$0xff]
      %v1047 = vld [vmem:[#allocation4 + $0x28] sm:$0x1]
      %v1048 = vld [vmem:[#allocation4 + $0x30] sm:$0xff]
      %v1049 = vld [vmem:[#allocation4 + $0x38] sm:$0xff]
      %v1050 = vld [vmem:[#allocation4 + $0x40] sm:$0x1]
      %v1051 = vld [vmem:[#allocation4 + $0x48] sm:$0xff]
      %v1052 = vld [vmem:[#allocation4 + $0x50] sm:$0xff]
      %v1053 = vld [vmem:[#allocation4 + $0x58] sm:$0x1]
      %v1055 = vsel %vm881, %v1030, 0
      %v1058 = vsel %vm881, %v1031, 0
      %v1061 = vsel %vm881, %v1032, 0
      %v1064 = vsel %vm881, %v1042, 0
      %v1067 = vsel %vm881, %v1043, 0
      %v1070 = vsel %vm881, %v1044, 0
      %1072 = vmatprep.subr.mxu0 0.0
      %1073 = vmatpush1.xpose.msra.mxu0 %v1064
      %1074 = vmatprep.subr.mxu0 0.0
      %1075 = vmatpush1.xpose.msra.mxu0 %v1067
      %1076 = vmatprep.subr.mxu0 0.0
      %1077 = vmatpush1.xpose.msra.mxu0 %v1070
      %1078 = vmatprep.subr.mxu0 0.0
      %1079 = vmatpush1.xpose.msra.mxu0 0.0
      %1080 = vmatprep.subr.mxu0 0.0
      %1081 = vmatpush1.xpose.msra.mxu0 0.0
      %1082 = vmatprep.subr.mxu0 0.0
      %1083 = vmatpush1.xpose.msra.mxu0 0.0
      %1084 = vmatprep.subr.mxu0 0.0
      %1085 = vmatpush1.xpose.msra.mxu0 0.0
      %1086 = vmatprep.subr.mxu0 0.0
      %1087 = vmatpush1.xpose.msra.mxu0 0.0
      %1088 = vmatprep.subr.mxu0 0.0
      %1089 = vmatpush1.xpose.msra.mxu0 0.0
      %1090 = vmatprep.subr.mxu0 0.0
      %1091 = vmatpush1.xpose.msra.mxu0 0.0
      %1092 = vmatprep.subr.mxu0 0.0
      %1093 = vmatpush1.xpose.msra.mxu0 0.0
      %1094 = vmatprep.subr.mxu0 0.0
      %1095 = vmatpush1.xpose.msra.mxu0 0.0
      %1096 = vmatprep.subr.mxu0 0.0
      %1097 = vmatpush1.xpose.msra.mxu0 0.0
      %1098 = vmatprep.subr.mxu0 0.0
      %1099 = vmatpush1.xpose.msra.mxu0 0.0
      %1100 = vmatprep.subr.mxu0 0.0
      %1101 = vmatpush1.xpose.msra.mxu0 0.0
      %1102 = vmatprep.subr.mxu0 0.0
      %1103 = vmatpush1.xpose.msra.mxu0 0.0
      %1104 = vmatprep.subr.mxu0 0.0
      %1105 = vmatpush1.xpose.msra.mxu0 0.0
      %1106 = vmatprep.subr.mxu0 0.0
      %1107 = vmatpush1.xpose.msra.mxu0 0.0
      %1108 = vmatprep.subr.mxu0 0.0
      %1109 = vmatpush1.xpose.msra.mxu0 0.0
      %1110 = vmatprep.subr.mxu0 0.0
      %1111 = vmatpush1.xpose.msra.mxu0 0.0
      %1112 = vmatprep.subr.mxu0 0.0
      %1113 = vmatpush1.xpose.msra.mxu0 0.0
      %1114 = vmatprep.subr.mxu0 0.0
      %1115 = vmatpush1.xpose.msra.mxu0 0.0
      %1116 = vmatprep.subr.mxu0 0.0
      %1117 = vmatpush1.xpose.msra.mxu0 0.0
      %1118 = vmatprep.subr.mxu0 0.0
      %1119 = vmatpush1.xpose.msra.mxu0 0.0
      %1120 = vmatprep.subr.mxu0 0.0
      %1121 = vmatpush1.xpose.msra.mxu0 0.0
      %1122 = vmatprep.subr.mxu0 0.0
      %1123 = vmatpush1.xpose.msra.mxu0 0.0
      %1124 = vmatprep.subr.mxu0 0.0
      %1125 = vmatpush1.xpose.msra.mxu0 0.0
      %1126 = vmatprep.subr.mxu0 0.0
      %1127 = vmatpush1.xpose.msra.mxu0 0.0
      %1128 = vmatprep.subr.mxu0 0.0
      %1129 = vmatpush1.xpose.msra.mxu0 0.0
      %1130 = vmatprep.subr.mxu0 0.0
      %1131 = vmatpush1.xpose.msra.mxu0 0.0
      %1132 = vmatprep.subr.mxu0 0.0
      %1133 = vmatpush1.xpose.msra.mxu0 0.0
      %1134 = vmatprep.subr.mxu0 0.0
      %1135 = vmatpush1.xpose.msra.mxu0 0.0
      %1136 = vmatprep.mubr.f32.mxu0 0.0
      %1137 = vmatmul.mubr.f32.gmra.mrb[0].mxu0 %v1055
      %v1138 = vpop.f32.mrb[0].mxu0
      %v1139 = vadd.f32 0.0, %v1138
      %v1140 = vpop.f32.mrb[0].mxu0
      %1141 = vmatprep.mubr.f32.mxu0 0.0
      %1142 = vmatmul.mubr.f32.gmra.mrb[0].mxu0 %v1058
      %v1143 = vpop.f32.mrb[0].mxu0
      %v1144 = vadd.f32 0.0, %v1143
      %v1145 = vpop.f32.mrb[0].mxu0
      %1146 = vmatprep.mubr.f32.mxu0 0.0
      %1147 = vmatmul.mubr.f32.gmra.mrb[0].mxu0 %v1061
      %v1148 = vpop.f32.mrb[0].mxu0
      %v1149 = vadd.f32 0.0, %v1148
      %v1150 = vpop.f32.mrb[0].mxu0
      %1151 = vdwg.mxu0
      %v1153 = vsel %vm881, %v1033, 0
      %v1156 = vsel %vm881, %v1034, 0
      %v1159 = vsel %vm881, %v1035, 0
      %v1162 = vsel %vm881, %v1045, 0
      %v1165 = vsel %vm881, %v1046, 0
      %v1168 = vsel %vm881, %v1047, 0
      %1170 = vmatprep.subr.mxu0 0.0
      %1171 = vmatpush1.xpose.msra.mxu0 %v1162
      %1172 = vmatprep.subr.mxu0 0.0
      %1173 = vmatpush1.xpose.msra.mxu0 %v1165
      %1174 = vmatprep.subr.mxu0 0.0
      %1175 = vmatpush1.xpose.msra.mxu0 %v1168
      %1176 = vmatprep.subr.mxu0 0.0
      %1177 = vmatpush1.xpose.msra.mxu0 0.0
      %1178 = vmatprep.subr.mxu0 0.0
      %1179 = vmatpush1.xpose.msra.mxu0 0.0
      %1180 = vmatprep.subr.mxu0 0.0
      %1181 = vmatpush1.xpose.msra.mxu0 0.0
      %1182 = vmatprep.subr.mxu0 0.0
      %1183 = vmatpush1.xpose.msra.mxu0 0.0
      %1184 = vmatprep.subr.mxu0 0.0
      %1185 = vmatpush1.xpose.msra.mxu0 0.0
      %1186 = vmatprep.subr.mxu0 0.0
      %1187 = vmatpush1.xpose.msra.mxu0 0.0
      %1188 = vmatprep.subr.mxu0 0.0
      %1189 = vmatpush1.xpose.msra.mxu0 0.0
      %1190 = vmatprep.subr.mxu0 0.0
      %1191 = vmatpush1.xpose.msra.mxu0 0.0
      %1192 = vmatprep.subr.mxu0 0.0
      %1193 = vmatpush1.xpose.msra.mxu0 0.0
      %1194 = vmatprep.subr.mxu0 0.0
      %1195 = vmatpush1.xpose.msra.mxu0 0.0
      %1196 = vmatprep.subr.mxu0 0.0
      %1197 = vmatpush1.xpose.msra.mxu0 0.0
      %1198 = vmatprep.subr.mxu0 0.0
      %1199 = vmatpush1.xpose.msra.mxu0 0.0
      %1200 = vmatprep.subr.mxu0 0.0
      %1201 = vmatpush1.xpose.msra.mxu0 0.0
      %1202 = vmatprep.subr.mxu0 0.0
      %1203 = vmatpush1.xpose.msra.mxu0 0.0
      %1204 = vmatprep.subr.mxu0 0.0
      %1205 = vmatpush1.xpose.msra.mxu0 0.0
      %1206 = vmatprep.subr.mxu0 0.0
      %1207 = vmatpush1.xpose.msra.mxu0 0.0
      %1208 = vmatprep.subr.mxu0 0.0
      %1209 = vmatpush1.xpose.msra.mxu0 0.0
      %1210 = vmatprep.subr.mxu0 0.0
      %1211 = vmatpush1.xpose.msra.mxu0 0.0
      %1212 = vmatprep.subr.mxu0 0.0
      %1213 = vmatpush1.xpose.msra.mxu0 0.0
      %1214 = vmatprep.subr.mxu0 0.0
      %1215 = vmatpush1.xpose.msra.mxu0 0.0
      %1216 = vmatprep.subr.mxu0 0.0
      %1217 = vmatpush1.xpose.msra.mxu0 0.0
      %1218 = vmatprep.subr.mxu0 0.0
      %1219 = vmatpush1.xpose.msra.mxu0 0.0
      %1220 = vmatprep.subr.mxu0 0.0
      %1221 = vmatpush1.xpose.msra.mxu0 0.0
      %1222 = vmatprep.subr.mxu0 0.0
      %1223 = vmatpush1.xpose.msra.mxu0 0.0
      %1224 = vmatprep.subr.mxu0 0.0
      %1225 = vmatpush1.xpose.msra.mxu0 0.0
      %1226 = vmatprep.subr.mxu0 0.0
      %1227 = vmatpush1.xpose.msra.mxu0 0.0
      %1228 = vmatprep.subr.mxu0 0.0
      %1229 = vmatpush1.xpose.msra.mxu0 0.0
      %1230 = vmatprep.subr.mxu0 0.0
      %1231 = vmatpush1.xpose.msra.mxu0 0.0
      %1232 = vmatprep.subr.mxu0 0.0
      %1233 = vmatpush1.xpose.msra.mxu0 0.0
      %1234 = vmatprep.mubr.f32.mxu0 0.0
      %1235 = vmatmul.mubr.f32.gmra.mrb[0].mxu0 %v1153
      %v1236 = vpop.f32.mrb[0].mxu0
      %v1237 = vadd.f32 0.0, %v1236
      %v1238 = vpop.f32.mrb[0].mxu0
      %1239 = vmatprep.mubr.f32.mxu0 0.0
      %1240 = vmatmul.mubr.f32.gmra.mrb[0].mxu0 %v1156
      %v1241 = vpop.f32.mrb[0].mxu0
      %v1242 = vadd.f32 0.0, %v1241
      %v1243 = vpop.f32.mrb[0].mxu0
      %1244 = vmatprep.mubr.f32.mxu0 0.0
      %1245 = vmatmul.mubr.f32.gmra.mrb[0].mxu0 %v1159
      %v1246 = vpop.f32.mrb[0].mxu0
      %v1247 = vadd.f32 0.0, %v1246
      %v1248 = vpop.f32.mrb[0].mxu0
      %1249 = vdwg.mxu0
      %v1251 = vsel %vm881, %v1036, 0
      %v1254 = vsel %vm881, %v1037, 0
      %v1257 = vsel %vm881, %v1038, 0
      %v1260 = vsel %vm881, %v1048, 0
      %v1263 = vsel %vm881, %v1049, 0
      %v1266 = vsel %vm881, %v1050, 0
      %1268 = vmatprep.subr.mxu0 0.0
      %1269 = vmatpush1.xpose.msra.mxu0 %v1260
      %1270 = vmatprep.subr.mxu0 0.0
      %1271 = vmatpush1.xpose.msra.mxu0 %v1263
      %1272 = vmatprep.subr.mxu0 0.0
      %1273 = vmatpush1.xpose.msra.mxu0 %v1266
      %1274 = vmatprep.subr.mxu0 0.0
      %1275 = vmatpush1.xpose.msra.mxu0 0.0
      %1276 = vmatprep.subr.mxu0 0.0
      %1277 = vmatpush1.xpose.msra.mxu0 0.0
      %1278 = vmatprep.subr.mxu0 0.0
      %1279 = vmatpush1.xpose.msra.mxu0 0.0
      %1280 = vmatprep.subr.mxu0 0.0
      %1281 = vmatpush1.xpose.msra.mxu0 0.0
      %1282 = vmatprep.subr.mxu0 0.0
      %1283 = vmatpush1.xpose.msra.mxu0 0.0
      %1284 = vmatprep.subr.mxu0 0.0
      %1285 = vmatpush1.xpose.msra.mxu0 0.0
      %1286 = vmatprep.subr.mxu0 0.0
      %1287 = vmatpush1.xpose.msra.mxu0 0.0
      %1288 = vmatprep.subr.mxu0 0.0
      %1289 = vmatpush1.xpose.msra.mxu0 0.0
      %1290 = vmatprep.subr.mxu0 0.0
      %1291 = vmatpush1.xpose.msra.mxu0 0.0
      %1292 = vmatprep.subr.mxu0 0.0
      %1293 = vmatpush1.xpose.msra.mxu0 0.0
      %1294 = vmatprep.subr.mxu0 0.0
      %1295 = vmatpush1.xpose.msra.mxu0 0.0
      %1296 = vmatprep.subr.mxu0 0.0
      %1297 = vmatpush1.xpose.msra.mxu0 0.0
      %1298 = vmatprep.subr.mxu0 0.0
      %1299 = vmatpush1.xpose.msra.mxu0 0.0
      %1300 = vmatprep.subr.mxu0 0.0
      %1301 = vmatpush1.xpose.msra.mxu0 0.0
      %1302 = vmatprep.subr.mxu0 0.0
      %1303 = vmatpush1.xpose.msra.mxu0 0.0
      %1304 = vmatprep.subr.mxu0 0.0
      %1305 = vmatpush1.xpose.msra.mxu0 0.0
      %1306 = vmatprep.subr.mxu0 0.0
      %1307 = vmatpush1.xpose.msra.mxu0 0.0
      %1308 = vmatprep.subr.mxu0 0.0
      %1309 = vmatpush1.xpose.msra.mxu0 0.0
      %1310 = vmatprep.subr.mxu0 0.0
      %1311 = vmatpush1.xpose.msra.mxu0 0.0
      %1312 = vmatprep.subr.mxu0 0.0
      %1313 = vmatpush1.xpose.msra.mxu0 0.0
      %1314 = vmatprep.subr.mxu0 0.0
      %1315 = vmatpush1.xpose.msra.mxu0 0.0
      %1316 = vmatprep.subr.mxu0 0.0
      %1317 = vmatpush1.xpose.msra.mxu0 0.0
      %1318 = vmatprep.subr.mxu0 0.0
      %1319 = vmatpush1.xpose.msra.mxu0 0.0
      %1320 = vmatprep.subr.mxu0 0.0
      %1321 = vmatpush1.xpose.msra.mxu0 0.0
      %1322 = vmatprep.subr.mxu0 0.0
      %1323 = vmatpush1.xpose.msra.mxu0 0.0
      %1324 = vmatprep.subr.mxu0 0.0
      %1325 = vmatpush1.xpose.msra.mxu0 0.0
      %1326 = vmatprep.subr.mxu0 0.0
      %1327 = vmatpush1.xpose.msra.mxu0 0.0
      %1328 = vmatprep.subr.mxu0 0.0
      %1329 = vmatpush1.xpose.msra.mxu0 0.0
      %1330 = vmatprep.subr.mxu0 0.0
      %1331 = vmatpush1.xpose.msra.mxu0 0.0
      %1332 = vmatprep.mubr.f32.mxu0 0.0
      %1333 = vmatmul.mubr.f32.gmra.mrb[0].mxu0 %v1251
      %v1334 = vpop.f32.mrb[0].mxu0
      %v1335 = vadd.f32 0.0, %v1334
      %v1336 = vpop.f32.mrb[0].mxu0
      %1337 = vmatprep.mubr.f32.mxu0 0.0
      %1338 = vmatmul.mubr.f32.gmra.mrb[0].mxu0 %v1254
      %v1339 = vpop.f32.mrb[0].mxu0
      %v1340 = vadd.f32 0.0, %v1339
      %v1341 = vpop.f32.mrb[0].mxu0
      %1342 = vmatprep.mubr.f32.mxu0 0.0
      %1343 = vmatmul.mubr.f32.gmra.mrb[0].mxu0 %v1257
      %v1344 = vpop.f32.mrb[0].mxu0
      %v1345 = vadd.f32 0.0, %v1344
      %v1346 = vpop.f32.mrb[0].mxu0
      %1347 = vdwg.mxu0
      %v1349 = vsel %vm881, %v1039, 0
      %v1352 = vsel %vm881, %v1040, 0
      %v1355 = vsel %vm881, %v1041, 0
      %v1358 = vsel %vm881, %v1051, 0
      %v1361 = vsel %vm881, %v1052, 0
      %v1364 = vsel %vm881, %v1053, 0
      %1366 = vmatprep.subr.mxu0 0.0
      %1367 = vmatpush1.xpose.msra.mxu0 %v1358
      %1368 = vmatprep.subr.mxu0 0.0
      %1369 = vmatpush1.xpose.msra.mxu0 %v1361
      %1370 = vmatprep.subr.mxu0 0.0
      %1371 = vmatpush1.xpose.msra.mxu0 %v1364
      %1372 = vmatprep.subr.mxu0 0.0
      %1373 = vmatpush1.xpose.msra.mxu0 0.0
      %1374 = vmatprep.subr.mxu0 0.0
      %1375 = vmatpush1.xpose.msra.mxu0 0.0
      %1376 = vmatprep.subr.mxu0 0.0
      %1377 = vmatpush1.xpose.msra.mxu0 0.0
      %1378 = vmatprep.subr.mxu0 0.0
      %1379 = vmatpush1.xpose.msra.mxu0 0.0
      %1380 = vmatprep.subr.mxu0 0.0
      %1381 = vmatpush1.xpose.msra.mxu0 0.0
      %1382 = vmatprep.subr.mxu0 0.0
      %1383 = vmatpush1.xpose.msra.mxu0 0.0
      %1384 = vmatprep.subr.mxu0 0.0
      %1385 = vmatpush1.xpose.msra.mxu0 0.0
      %1386 = vmatprep.subr.mxu0 0.0
      %1387 = vmatpush1.xpose.msra.mxu0 0.0
      %1388 = vmatprep.subr.mxu0 0.0
      %1389 = vmatpush1.xpose.msra.mxu0 0.0
      %1390 = vmatprep.subr.mxu0 0.0
      %1391 = vmatpush1.xpose.msra.mxu0 0.0
      %1392 = vmatprep.subr.mxu0 0.0
      %1393 = vmatpush1.xpose.msra.mxu0 0.0
      %1394 = vmatprep.subr.mxu0 0.0
      %1395 = vmatpush1.xpose.msra.mxu0 0.0
      %1396 = vmatprep.subr.mxu0 0.0
      %1397 = vmatpush1.xpose.msra.mxu0 0.0
      %1398 = vmatprep.subr.mxu0 0.0
      %1399 = vmatpush1.xpose.msra.mxu0 0.0
      %1400 = vmatprep.subr.mxu0 0.0
      %1401 = vmatpush1.xpose.msra.mxu0 0.0
      %1402 = vmatprep.subr.mxu0 0.0
      %1403 = vmatpush1.xpose.msra.mxu0 0.0
      %1404 = vmatprep.subr.mxu0 0.0
      %1405 = vmatpush1.xpose.msra.mxu0 0.0
      %1406 = vmatprep.subr.mxu0 0.0
      %1407 = vmatpush1.xpose.msra.mxu0 0.0
      %1408 = vmatprep.subr.mxu0 0.0
      %1409 = vmatpush1.xpose.msra.mxu0 0.0
      %1410 = vmatprep.subr.mxu0 0.0
      %1411 = vmatpush1.xpose.msra.mxu0 0.0
      %1412 = vmatprep.subr.mxu0 0.0
      %1413 = vmatpush1.xpose.msra.mxu0 0.0
      %1414 = vmatprep.subr.mxu0 0.0
      %1415 = vmatpush1.xpose.msra.mxu0 0.0
      %1416 = vmatprep.subr.mxu0 0.0
      %1417 = vmatpush1.xpose.msra.mxu0 0.0
      %1418 = vmatprep.subr.mxu0 0.0
      %1419 = vmatpush1.xpose.msra.mxu0 0.0
      %1420 = vmatprep.subr.mxu0 0.0
      %1421 = vmatpush1.xpose.msra.mxu0 0.0
      %1422 = vmatprep.subr.mxu0 0.0
      %1423 = vmatpush1.xpose.msra.mxu0 0.0
      %1424 = vmatprep.subr.mxu0 0.0
      %1425 = vmatpush1.xpose.msra.mxu0 0.0
      %1426 = vmatprep.subr.mxu0 0.0
      %1427 = vmatpush1.xpose.msra.mxu0 0.0
      %1428 = vmatprep.subr.mxu0 0.0
      %1429 = vmatpush1.xpose.msra.mxu0 0.0
      %1430 = vmatprep.mubr.f32.mxu0 0.0
      %1431 = vmatmul.mubr.f32.gmra.mrb[0].mxu0 %v1349
      %v1432 = vpop.f32.mrb[0].mxu0
      %v1433 = vadd.f32 0.0, %v1432
      %v1434 = vpop.f32.mrb[0].mxu0
      %1435 = vmatprep.mubr.f32.mxu0 0.0
      %1436 = vmatmul.mubr.f32.gmra.mrb[0].mxu0 %v1352
      %v1437 = vpop.f32.mrb[0].mxu0
      %v1438 = vadd.f32 0.0, %v1437
      %v1439 = vpop.f32.mrb[0].mxu0
      %1440 = vmatprep.mubr.f32.mxu0 0.0
      %1441 = vmatmul.mubr.f32.gmra.mrb[0].mxu0 %v1355
      %v1442 = vpop.f32.mrb[0].mxu0
      %v1443 = vadd.f32 0.0, %v1442
      %v1444 = vpop.f32.mrb[0].mxu0
      %1445 = vdwg.mxu0
      %v1446 = vmul.f32 %v1139, 0.35355338
      %v1447 = vmul.f32 %v1144, 0.35355338
      %v1448 = vmul.f32 %v1149, 0.35355338
      %v1449 = vmul.f32 %v1237, 0.35355338
      %v1450 = vmul.f32 %v1242, 0.35355338
      %v1451 = vmul.f32 %v1247, 0.35355338
      %v1452 = vmul.f32 %v1335, 0.35355338
      %v1453 = vmul.f32 %v1340, 0.35355338
      %v1454 = vmul.f32 %v1345, 0.35355338
      %v1455 = vmul.f32 %v1433, 0.35355338
      %v1456 = vmul.f32 %v1438, 0.35355338
      %v1457 = vmul.f32 %v1443, 0.35355338
      %vm1458 = vcmask 138240
      %v1459 = vsel %vm1458, %v1446, -inf
      %1460 = vmax.xlane.f32.xlu0 %v1459
      %v1461 = vpop.xlane.xlu0 %1460
      %v1462 = vsel %vm1458, %v1447, -inf
      %1463 = vmax.xlane.f32.xlu0 %v1462
      %v1464 = vpop.xlane.xlu0 %1463
      %vm1465 = vcmask 131072
      %v1466 = vsel %vm1465, %v1448, -inf
      %1467 = vmax.xlane.f32.xlu0 %v1466
      %v1468 = vpop.xlane.xlu0 %1467
      %v1469 = vsel %vm1458, %v1449, -inf
      %1470 = vmax.xlane.f32.xlu0 %v1469
      %v1471 = vpop.xlane.xlu0 %1470
      %v1472 = vsel %vm1458, %v1450, -inf
      %1473 = vmax.xlane.f32.xlu0 %v1472
      %v1474 = vpop.xlane.xlu0 %1473
      %v1475 = vsel %vm1465, %v1451, -inf
      %1476 = vmax.xlane.f32.xlu0 %v1475
      %v1477 = vpop.xlane.xlu0 %1476
      %v1478 = vsel %vm1458, %v1452, -inf
      %1479 = vmax.xlane.f32.xlu0 %v1478
      %v1480 = vpop.xlane.xlu0 %1479
      %v1481 = vsel %vm1458, %v1453, -inf
      %1482 = vmax.xlane.f32.xlu0 %v1481
      %v1483 = vpop.xlane.xlu0 %1482
      %v1484 = vsel %vm1465, %v1454, -inf
      %1485 = vmax.xlane.f32.xlu0 %v1484
      %v1486 = vpop.xlane.xlu0 %1485
      %v1487 = vsel %vm1458, %v1455, -inf
      %1488 = vmax.xlane.f32.xlu0 %v1487
      %v1489 = vpop.xlane.xlu0 %1488
      %v1490 = vsel %vm1458, %v1456, -inf
      %1491 = vmax.xlane.f32.xlu0 %v1490
      %v1492 = vpop.xlane.xlu0 %1491
      %v1493 = vsel %vm1465, %v1457, -inf
      %1494 = vmax.xlane.f32.xlu0 %v1493
      %v1495 = vpop.xlane.xlu0 %1494
      %v1496 = vsub.f32 %v1446, %v1461
      %v1497 = vsub.f32 %v1447, %v1464
      %v1498 = vsub.f32 %v1448, %v1468
      %v1499 = vsub.f32 %v1449, %v1471
      %v1500 = vsub.f32 %v1450, %v1474
      %v1501 = vsub.f32 %v1451, %v1477
      %v1502 = vsub.f32 %v1452, %v1480
      %v1503 = vsub.f32 %v1453, %v1483
      %v1504 = vsub.f32 %v1454, %v1486
      %v1505 = vsub.f32 %v1455, %v1489
      %v1506 = vsub.f32 %v1456, %v1492
      %v1507 = vsub.f32 %v1457, %v1495
      %v1508 = vmul.f32 %v1496, 1.442695
      %v1509 = vpow.pop %v1508
      %v1510 = vmul.f32 %v1497, 1.442695
      %v1511 = vpow.pop %v1510
      %v1512 = vmul.f32 %v1498, 1.442695
      %v1513 = vpow.pop %v1512
      %v1514 = vmul.f32 %v1499, 1.442695
      %v1515 = vpow.pop %v1514
      %v1516 = vmul.f32 %v1500, 1.442695
      %v1517 = vpow.pop %v1516
      %v1518 = vmul.f32 %v1501, 1.442695
      %v1519 = vpow.pop %v1518
      %v1520 = vmul.f32 %v1502, 1.442695
      %v1521 = vpow.pop %v1520
      %v1522 = vmul.f32 %v1503, 1.442695
      %v1523 = vpow.pop %v1522
      %v1524 = vmul.f32 %v1504, 1.442695
      %v1525 = vpow.pop %v1524
      %v1526 = vmul.f32 %v1505, 1.442695
      %v1527 = vpow.pop %v1526
      %v1528 = vmul.f32 %v1506, 1.442695
      %v1529 = vpow.pop %v1528
      %v1530 = vmul.f32 %v1507, 1.442695
      %v1531 = vpow.pop %v1530
      %v1532 = vsel %vm1458, %v1509, 0.0
      %1533 = vadd.xlane.f32.xlu0 %v1532
      %v1534 = vpop.xlane.xlu0 %1533
      %v1535 = vsel %vm1458, %v1511, 0.0
      %1536 = vadd.xlane.f32.xlu0 %v1535
      %v1537 = vpop.xlane.xlu0 %1536
      %v1538 = vsel %vm1465, %v1513, 0.0
      %1539 = vadd.xlane.f32.xlu0 %v1538
      %v1540 = vpop.xlane.xlu0 %1539
      %v1541 = vsel %vm1458, %v1515, 0.0
      %1542 = vadd.xlane.f32.xlu0 %v1541
      %v1543 = vpop.xlane.xlu0 %1542
      %v1544 = vsel %vm1458, %v1517, 0.0
      %1545 = vadd.xlane.f32.xlu0 %v1544
      %v1546 = vpop.xlane.xlu0 %1545
      %v1547 = vsel %vm1465, %v1519, 0.0
      %1548 = vadd.xlane.f32.xlu0 %v1547
      %v1549 = vpop.xlane.xlu0 %1548
      %v1550 = vsel %vm1458, %v1521, 0.0
      %1551 = vadd.xlane.f32.xlu0 %v1550
      %v1552 = vpop.xlane.xlu0 %1551
      %v1553 = vsel %vm1458, %v1523, 0.0
      %1554 = vadd.xlane.f32.xlu0 %v1553
      %v1555 = vpop.xlane.xlu0 %1554
      %v1556 = vsel %vm1465, %v1525, 0.0
      %1557 = vadd.xlane.f32.xlu0 %v1556
      %v1558 = vpop.xlane.xlu0 %1557
      %v1559 = vsel %vm1458, %v1527, 0.0
      %1560 = vadd.xlane.f32.xlu0 %v1559
      %v1561 = vpop.xlane.xlu0 %1560
      %v1562 = vsel %vm1458, %v1529, 0.0
      %1563 = vadd.xlane.f32.xlu0 %v1562
      %v1564 = vpop.xlane.xlu0 %1563
      %v1565 = vsel %vm1465, %v1531, 0.0
      %1566 = vadd.xlane.f32.xlu0 %v1565
      %v1567 = vpop.xlane.xlu0 %1566
      %v1568 = vrcp.pop %v1534
      %v1569 = vrcp.pop %v1537
      %v1570 = vrcp.pop %v1540
      %v1571 = vrcp.pop %v1543
      %v1572 = vrcp.pop %v1546
      %v1573 = vrcp.pop %v1549
      %v1574 = vrcp.pop %v1552
      %v1575 = vrcp.pop %v1555
      %v1576 = vrcp.pop %v1558
      %v1577 = vrcp.pop %v1561
      %v1578 = vrcp.pop %v1564
      %v1579 = vrcp.pop %v1567
      %v1580 = vmul.f32 %v1509, %v1568
      %v1581 = vmul.f32 %v1511, %v1569
      %v1582 = vmul.f32 %v1513, %v1570
      %v1583 = vmul.f32 %v1515, %v1571
      %v1584 = vmul.f32 %v1517, %v1572
      %v1585 = vmul.f32 %v1519, %v1573
      %v1586 = vmul.f32 %v1521, %v1574
      %v1587 = vmul.f32 %v1523, %v1575
      %v1588 = vmul.f32 %v1525, %v1576
      %v1589 = vmul.f32 %v1527, %v1577
      %v1590 = vmul.f32 %v1529, %v1578
      %v1591 = vmul.f32 %v1531, %v1579
      %1592 = vst.msk [vmem:[%s709] sm:$0xff] %vm1458, %v1580
      %1593 = vst.msk [vmem:[%s709 + $0x8] sm:$0xff] %vm1458, %v1581
      %1594 = vst.msk [vmem:[%s709 + $0x10] sm:$0x1] %vm1465, %v1582
      %1595 = vst.msk [vmem:[%s709 + $0x18] sm:$0xff] %vm1458, %v1583
      %1596 = vst.msk [vmem:[%s709 + $0x20] sm:$0xff] %vm1458, %v1584
      %1597 = vst.msk [vmem:[%s709 + $0x28] sm:$0x1] %vm1465, %v1585
      %1598 = vst.msk [vmem:[%s709 + $0x30] sm:$0xff] %vm1458, %v1586
      %1599 = vst.msk [vmem:[%s709 + $0x38] sm:$0xff] %vm1458, %v1587
      %1600 = vst.msk [vmem:[%s709 + $0x40] sm:$0x1] %vm1465, %v1588
      %1601 = vst.msk [vmem:[%s709 + $0x48] sm:$0xff] %vm1458, %v1589
      %1602 = vst.msk [vmem:[%s709 + $0x50] sm:$0xff] %vm1458, %v1590
      %1603 = vst.msk [vmem:[%s709 + $0x58] sm:$0x1] %vm1465, %v1591
      %v1604 = vld [vmem:[#allocation5] sm:$0xff]
      %v1605 = vld [vmem:[#allocation5 + $0x8] sm:$0xff]
      %v1606 = vld [vmem:[#allocation5 + $0x10] sm:$0x1]
      %v1607 = vld [vmem:[#allocation5 + $0x18] sm:$0xff]
      %v1608 = vld [vmem:[#allocation5 + $0x20] sm:$0xff]
      %v1609 = vld [vmem:[#allocation5 + $0x28] sm:$0x1]
      %v1610 = vld [vmem:[#allocation5 + $0x30] sm:$0xff]
      %v1611 = vld [vmem:[#allocation5 + $0x38] sm:$0xff]
      %v1612 = vld [vmem:[#allocation5 + $0x40] sm:$0x1]
      %v1613 = vld [vmem:[#allocation5 + $0x48] sm:$0xff]
      %v1614 = vld [vmem:[#allocation5 + $0x50] sm:$0xff]
      %v1615 = vld [vmem:[#allocation5 + $0x58] sm:$0x1]
      %v1617 = vsel %vm1458, %v1580, 0
      %v1620 = vsel %vm1458, %v1581, 0
      %v1623 = vsel %vm1458, %v1582, 0
      %vm1625 = vcmask 1040384
      %v1627 = vsel %vm1625, %v1606, 0
      %1629 = vmatprep.subr.mxu0 0.0
      %1630 = vmatpush1.msra.mxu0 %v1604
      %1631 = vmatprep.subr.mxu0 0.0
      %1632 = vmatpush1.msra.mxu0 %v1605
      %1633 = vmatprep.subr.mxu0 0.0
      %1634 = vmatpush1.msra.mxu0 %v1627
      %1635 = vmatprep.subr.mxu0 0.0
      %1636 = vmatpush1.msra.mxu0 0.0
      %1637 = vmatprep.subr.mxu0 0.0
      %1638 = vmatpush1.msra.mxu0 0.0
      %1639 = vmatprep.subr.mxu0 0.0
      %1640 = vmatpush1.msra.mxu0 0.0
      %1641 = vmatprep.subr.mxu0 0.0
      %1642 = vmatpush1.msra.mxu0 0.0
      %1643 = vmatprep.subr.mxu0 0.0
      %1644 = vmatpush1.msra.mxu0 0.0
      %1645 = vmatprep.subr.mxu0 0.0
      %1646 = vmatpush1.msra.mxu0 0.0
      %1647 = vmatprep.subr.mxu0 0.0
      %1648 = vmatpush1.msra.mxu0 0.0
      %1649 = vmatprep.subr.mxu0 0.0
      %1650 = vmatpush1.msra.mxu0 0.0
      %1651 = vmatprep.subr.mxu0 0.0
      %1652 = vmatpush1.msra.mxu0 0.0
      %1653 = vmatprep.subr.mxu0 0.0
      %1654 = vmatpush1.msra.mxu0 0.0
      %1655 = vmatprep.subr.mxu0 0.0
      %1656 = vmatpush1.msra.mxu0 0.0
      %1657 = vmatprep.subr.mxu0 0.0
      %1658 = vmatpush1.msra.mxu0 0.0
      %1659 = vmatprep.subr.mxu0 0.0
      %1660 = vmatpush1.msra.mxu0 0.0
      %1661 = vmatprep.subr.mxu0 0.0
      %1662 = vmatpush1.msra.mxu0 0.0
      %1663 = vmatprep.subr.mxu0 0.0
      %1664 = vmatpush1.msra.mxu0 0.0
      %1665 = vmatprep.subr.mxu0 0.0
      %1666 = vmatpush1.msra.mxu0 0.0
      %1667 = vmatprep.subr.mxu0 0.0
      %1668 = vmatpush1.msra.mxu0 0.0
      %1669 = vmatprep.subr.mxu0 0.0
      %1670 = vmatpush1.msra.mxu0 0.0
      %1671 = vmatprep.subr.mxu0 0.0
      %1672 = vmatpush1.msra.mxu0 0.0
      %1673 = vmatprep.subr.mxu0 0.0
      %1674 = vmatpush1.msra.mxu0 0.0
      %1675 = vmatprep.subr.mxu0 0.0
      %1676 = vmatpush1.msra.mxu0 0.0
      %1677 = vmatprep.subr.mxu0 0.0
      %1678 = vmatpush1.msra.mxu0 0.0
      %1679 = vmatprep.subr.mxu0 0.0
      %1680 = vmatpush1.msra.mxu0 0.0
      %1681 = vmatprep.subr.mxu0 0.0
      %1682 = vmatpush1.msra.mxu0 0.0
      %1683 = vmatprep.subr.mxu0 0.0
      %1684 = vmatpush1.msra.mxu0 0.0
      %1685 = vmatprep.subr.mxu0 0.0
      %1686 = vmatpush1.msra.mxu0 0.0
      %1687 = vmatprep.subr.mxu0 0.0
      %1688 = vmatpush1.msra.mxu0 0.0
      %1689 = vmatprep.subr.mxu0 0.0
      %1690 = vmatpush1.msra.mxu0 0.0
      %1691 = vmatprep.subr.mxu0 0.0
      %1692 = vmatpush1.msra.mxu0 0.0
      %1693 = vmatprep.mubr.f32.mxu0 0.0
      %1694 = vmatmul.mubr.f32.gmra.mrb[0].mxu0 %v1617
      %v1695 = vpop.f32.mrb[0].mxu0
      %v1696 = vadd.f32 0.0, %v1695
      %v1697 = vpop.f32.mrb[0].mxu0
      %1698 = vmatprep.mubr.f32.mxu0 0.0
      %1699 = vmatmul.mubr.f32.gmra.mrb[0].mxu0 %v1620
      %v1700 = vpop.f32.mrb[0].mxu0
      %v1701 = vadd.f32 0.0, %v1700
      %v1702 = vpop.f32.mrb[0].mxu0
      %1703 = vmatprep.mubr.f32.mxu0 0.0
      %1704 = vmatmul.mubr.f32.gmra.mrb[0].mxu0 %v1623
      %v1705 = vpop.f32.mrb[0].mxu0
      %v1706 = vadd.f32 0.0, %v1705
      %v1707 = vpop.f32.mrb[0].mxu0
      %1708 = vdwg.mxu0
      %v1710 = vsel %vm1458, %v1583, 0
      %v1713 = vsel %vm1458, %v1584, 0
      %v1716 = vsel %vm1458, %v1585, 0
      %v1719 = vsel %vm1625, %v1609, 0
      %1721 = vmatprep.subr.mxu0 0.0
      %1722 = vmatpush1.msra.mxu0 %v1607
      %1723 = vmatprep.subr.mxu0 0.0
      %1724 = vmatpush1.msra.mxu0 %v1608
      %1725 = vmatprep.subr.mxu0 0.0
      %1726 = vmatpush1.msra.mxu0 %v1719
      %1727 = vmatprep.subr.mxu0 0.0
      %1728 = vmatpush1.msra.mxu0 0.0
      %1729 = vmatprep.subr.mxu0 0.0
      %1730 = vmatpush1.msra.mxu0 0.0
      %1731 = vmatprep.subr.mxu0 0.0
      %1732 = vmatpush1.msra.mxu0 0.0
      %1733 = vmatprep.subr.mxu0 0.0
      %1734 = vmatpush1.msra.mxu0 0.0
      %1735 = vmatprep.subr.mxu0 0.0
      %1736 = vmatpush1.msra.mxu0 0.0
      %1737 = vmatprep.subr.mxu0 0.0
      %1738 = vmatpush1.msra.mxu0 0.0
      %1739 = vmatprep.subr.mxu0 0.0
      %1740 = vmatpush1.msra.mxu0 0.0
      %1741 = vmatprep.subr.mxu0 0.0
      %1742 = vmatpush1.msra.mxu0 0.0
      %1743 = vmatprep.subr.mxu0 0.0
      %1744 = vmatpush1.msra.mxu0 0.0
      %1745 = vmatprep.subr.mxu0 0.0
      %1746 = vmatpush1.msra.mxu0 0.0
      %1747 = vmatprep.subr.mxu0 0.0
      %1748 = vmatpush1.msra.mxu0 0.0
      %1749 = vmatprep.subr.mxu0 0.0
      %1750 = vmatpush1.msra.mxu0 0.0
      %1751 = vmatprep.subr.mxu0 0.0
      %1752 = vmatpush1.msra.mxu0 0.0
      %1753 = vmatprep.subr.mxu0 0.0
      %1754 = vmatpush1.msra.mxu0 0.0
      %1755 = vmatprep.subr.mxu0 0.0
      %1756 = vmatpush1.msra.mxu0 0.0
      %1757 = vmatprep.subr.mxu0 0.0
      %1758 = vmatpush1.msra.mxu0 0.0
      %1759 = vmatprep.subr.mxu0 0.0
      %1760 = vmatpush1.msra.mxu0 0.0
      %1761 = vmatprep.subr.mxu0 0.0
      %1762 = vmatpush1.msra.mxu0 0.0
      %1763 = vmatprep.subr.mxu0 0.0
      %1764 = vmatpush1.msra.mxu0 0.0
      %1765 = vmatprep.subr.mxu0 0.0
      %1766 = vmatpush1.msra.mxu0 0.0
      %1767 = vmatprep.subr.mxu0 0.0
      %1768 = vmatpush1.msra.mxu0 0.0
      %1769 = vmatprep.subr.mxu0 0.0
      %1770 = vmatpush1.msra.mxu0 0.0
      %1771 = vmatprep.subr.mxu0 0.0
      %1772 = vmatpush1.msra.mxu0 0.0
      %1773 = vmatprep.subr.mxu0 0.0
      %1774 = vmatpush1.msra.mxu0 0.0
      %1775 = vmatprep.subr.mxu0 0.0
      %1776 = vmatpush1.msra.mxu0 0.0
      %1777 = vmatprep.subr.mxu0 0.0
      %1778 = vmatpush1.msra.mxu0 0.0
      %1779 = vmatprep.subr.mxu0 0.0
      %1780 = vmatpush1.msra.mxu0 0.0
      %1781 = vmatprep.subr.mxu0 0.0
      %1782 = vmatpush1.msra.mxu0 0.0
      %1783 = vmatprep.subr.mxu0 0.0
      %1784 = vmatpush1.msra.mxu0 0.0
      %1785 = vmatprep.mubr.f32.mxu0 0.0
      %1786 = vmatmul.mubr.f32.gmra.mrb[0].mxu0 %v1710
      %v1787 = vpop.f32.mrb[0].mxu0
      %v1788 = vadd.f32 0.0, %v1787
      %v1789 = vpop.f32.mrb[0].mxu0
      %1790 = vmatprep.mubr.f32.mxu0 0.0
      %1791 = vmatmul.mubr.f32.gmra.mrb[0].mxu0 %v1713
      %v1792 = vpop.f32.mrb[0].mxu0
      %v1793 = vadd.f32 0.0, %v1792
      %v1794 = vpop.f32.mrb[0].mxu0
      %1795 = vmatprep.mubr.f32.mxu0 0.0
      %1796 = vmatmul.mubr.f32.gmra.mrb[0].mxu0 %v1716
      %v1797 = vpop.f32.mrb[0].mxu0
      %v1798 = vadd.f32 0.0, %v1797
      %v1799 = vpop.f32.mrb[0].mxu0
      %1800 = vdwg.mxu0
      %v1802 = vsel %vm1458, %v1586, 0
      %v1805 = vsel %vm1458, %v1587, 0
      %v1808 = vsel %vm1458, %v1588, 0
      %v1811 = vsel %vm1625, %v1612, 0
      %1813 = vmatprep.subr.mxu0 0.0
      %1814 = vmatpush1.msra.mxu0 %v1610
      %1815 = vmatprep.subr.mxu0 0.0
      %1816 = vmatpush1.msra.mxu0 %v1611
      %1817 = vmatprep.subr.mxu0 0.0
      %1818 = vmatpush1.msra.mxu0 %v1811
      %1819 = vmatprep.subr.mxu0 0.0
      %1820 = vmatpush1.msra.mxu0 0.0
      %1821 = vmatprep.subr.mxu0 0.0
      %1822 = vmatpush1.msra.mxu0 0.0
      %1823 = vmatprep.subr.mxu0 0.0
      %1824 = vmatpush1.msra.mxu0 0.0
      %1825 = vmatprep.subr.mxu0 0.0
      %1826 = vmatpush1.msra.mxu0 0.0
      %1827 = vmatprep.subr.mxu0 0.0
      %1828 = vmatpush1.msra.mxu0 0.0
      %1829 = vmatprep.subr.mxu0 0.0
      %1830 = vmatpush1.msra.mxu0 0.0
      %1831 = vmatprep.subr.mxu0 0.0
      %1832 = vmatpush1.msra.mxu0 0.0
      %1833 = vmatprep.subr.mxu0 0.0
      %1834 = vmatpush1.msra.mxu0 0.0
      %1835 = vmatprep.subr.mxu0 0.0
      %1836 = vmatpush1.msra.mxu0 0.0
      %1837 = vmatprep.subr.mxu0 0.0
      %1838 = vmatpush1.msra.mxu0 0.0
      %1839 = vmatprep.subr.mxu0 0.0
      %1840 = vmatpush1.msra.mxu0 0.0
      %1841 = vmatprep.subr.mxu0 0.0
      %1842 = vmatpush1.msra.mxu0 0.0
      %1843 = vmatprep.subr.mxu0 0.0
      %1844 = vmatpush1.msra.mxu0 0.0
      %1845 = vmatprep.subr.mxu0 0.0
      %1846 = vmatpush1.msra.mxu0 0.0
      %1847 = vmatprep.subr.mxu0 0.0
      %1848 = vmatpush1.msra.mxu0 0.0
      %1849 = vmatprep.subr.mxu0 0.0
      %1850 = vmatpush1.msra.mxu0 0.0
      %1851 = vmatprep.subr.mxu0 0.0
      %1852 = vmatpush1.msra.mxu0 0.0
      %1853 = vmatprep.subr.mxu0 0.0
      %1854 = vmatpush1.msra.mxu0 0.0
      %1855 = vmatprep.subr.mxu0 0.0
      %1856 = vmatpush1.msra.mxu0 0.0
      %1857 = vmatprep.subr.mxu0 0.0
      %1858 = vmatpush1.msra.mxu0 0.0
      %1859 = vmatprep.subr.mxu0 0.0
      %1860 = vmatpush1.msra.mxu0 0.0
      %1861 = vmatprep.subr.mxu0 0.0
      %1862 = vmatpush1.msra.mxu0 0.0
      %1863 = vmatprep.subr.mxu0 0.0
      %1864 = vmatpush1.msra.mxu0 0.0
      %1865 = vmatprep.subr.mxu0 0.0
      %1866 = vmatpush1.msra.mxu0 0.0
      %1867 = vmatprep.subr.mxu0 0.0
      %1868 = vmatpush1.msra.mxu0 0.0
      %1869 = vmatprep.subr.mxu0 0.0
      %1870 = vmatpush1.msra.mxu0 0.0
      %1871 = vmatprep.subr.mxu0 0.0
      %1872 = vmatpush1.msra.mxu0 0.0
      %1873 = vmatprep.subr.mxu0 0.0
      %1874 = vmatpush1.msra.mxu0 0.0
      %1875 = vmatprep.subr.mxu0 0.0
      %1876 = vmatpush1.msra.mxu0 0.0
      %1877 = vmatprep.mubr.f32.mxu0 0.0
      %1878 = vmatmul.mubr.f32.gmra.mrb[0].mxu0 %v1802
      %v1879 = vpop.f32.mrb[0].mxu0
      %v1880 = vadd.f32 0.0, %v1879
      %v1881 = vpop.f32.mrb[0].mxu0
      %1882 = vmatprep.mubr.f32.mxu0 0.0
      %1883 = vmatmul.mubr.f32.gmra.mrb[0].mxu0 %v1805
      %v1884 = vpop.f32.mrb[0].mxu0
      %v1885 = vadd.f32 0.0, %v1884
      %v1886 = vpop.f32.mrb[0].mxu0
      %1887 = vmatprep.mubr.f32.mxu0 0.0
      %1888 = vmatmul.mubr.f32.gmra.mrb[0].mxu0 %v1808
      %v1889 = vpop.f32.mrb[0].mxu0
      %v1890 = vadd.f32 0.0, %v1889
      %v1891 = vpop.f32.mrb[0].mxu0
      %1892 = vdwg.mxu0
      %v1894 = vsel %vm1458, %v1589, 0
      %v1897 = vsel %vm1458, %v1590, 0
      %v1900 = vsel %vm1458, %v1591, 0
      %v1903 = vsel %vm1625, %v1615, 0
      %1905 = vmatprep.subr.mxu0 0.0
      %1906 = vmatpush1.msra.mxu0 %v1613
      %1907 = vmatprep.subr.mxu0 0.0
      %1908 = vmatpush1.msra.mxu0 %v1614
      %1909 = vmatprep.subr.mxu0 0.0
      %1910 = vmatpush1.msra.mxu0 %v1903
      %1911 = vmatprep.subr.mxu0 0.0
      %1912 = vmatpush1.msra.mxu0 0.0
      %1913 = vmatprep.subr.mxu0 0.0
      %1914 = vmatpush1.msra.mxu0 0.0
      %1915 = vmatprep.subr.mxu0 0.0
      %1916 = vmatpush1.msra.mxu0 0.0
      %1917 = vmatprep.subr.mxu0 0.0
      %1918 = vmatpush1.msra.mxu0 0.0
      %1919 = vmatprep.subr.mxu0 0.0
      %1920 = vmatpush1.msra.mxu0 0.0
      %1921 = vmatprep.subr.mxu0 0.0
      %1922 = vmatpush1.msra.mxu0 0.0
      %1923 = vmatprep.subr.mxu0 0.0
      %1924 = vmatpush1.msra.mxu0 0.0
      %1925 = vmatprep.subr.mxu0 0.0
      %1926 = vmatpush1.msra.mxu0 0.0
      %1927 = vmatprep.subr.mxu0 0.0
      %1928 = vmatpush1.msra.mxu0 0.0
      %1929 = vmatprep.subr.mxu0 0.0
      %1930 = vmatpush1.msra.mxu0 0.0
      %1931 = vmatprep.subr.mxu0 0.0
      %1932 = vmatpush1.msra.mxu0 0.0
      %1933 = vmatprep.subr.mxu0 0.0
      %1934 = vmatpush1.msra.mxu0 0.0
      %1935 = vmatprep.subr.mxu0 0.0
      %1936 = vmatpush1.msra.mxu0 0.0
      %1937 = vmatprep.subr.mxu0 0.0
      %1938 = vmatpush1.msra.mxu0 0.0
      %1939 = vmatprep.subr.mxu0 0.0
      %1940 = vmatpush1.msra.mxu0 0.0
      %1941 = vmatprep.subr.mxu0 0.0
      %1942 = vmatpush1.msra.mxu0 0.0
      %1943 = vmatprep.subr.mxu0 0.0
      %1944 = vmatpush1.msra.mxu0 0.0
      %1945 = vmatprep.subr.mxu0 0.0
      %1946 = vmatpush1.msra.mxu0 0.0
      %1947 = vmatprep.subr.mxu0 0.0
      %1948 = vmatpush1.msra.mxu0 0.0
      %1949 = vmatprep.subr.mxu0 0.0
      %1950 = vmatpush1.msra.mxu0 0.0
      %1951 = vmatprep.subr.mxu0 0.0
      %1952 = vmatpush1.msra.mxu0 0.0
      %1953 = vmatprep.subr.mxu0 0.0
      %1954 = vmatpush1.msra.mxu0 0.0
      %1955 = vmatprep.subr.mxu0 0.0
      %1956 = vmatpush1.msra.mxu0 0.0
      %1957 = vmatprep.subr.mxu0 0.0
      %1958 = vmatpush1.msra.mxu0 0.0
      %1959 = vmatprep.subr.mxu0 0.0
      %1960 = vmatpush1.msra.mxu0 0.0
      %1961 = vmatprep.subr.mxu0 0.0
      %1962 = vmatpush1.msra.mxu0 0.0
      %1963 = vmatprep.subr.mxu0 0.0
      %1964 = vmatpush1.msra.mxu0 0.0
      %1965 = vmatprep.subr.mxu0 0.0
      %1966 = vmatpush1.msra.mxu0 0.0
      %1967 = vmatprep.subr.mxu0 0.0
      %1968 = vmatpush1.msra.mxu0 0.0
      %1969 = vmatprep.mubr.f32.mxu0 0.0
      %1970 = vmatmul.mubr.f32.gmra.mrb[0].mxu0 %v1894
      %v1971 = vpop.f32.mrb[0].mxu0
      %v1972 = vadd.f32 0.0, %v1971
      %v1973 = vpop.f32.mrb[0].mxu0
      %1974 = vmatprep.mubr.f32.mxu0 0.0
      %1975 = vmatmul.mubr.f32.gmra.mrb[0].mxu0 %v1897
      %v1976 = vpop.f32.mrb[0].mxu0
      %v1977 = vadd.f32 0.0, %v1976
      %v1978 = vpop.f32.mrb[0].mxu0
      %1979 = vmatprep.mubr.f32.mxu0 0.0
      %1980 = vmatmul.mubr.f32.gmra.mrb[0].mxu0 %v1900
      %v1981 = vpop.f32.mrb[0].mxu0
      %v1982 = vadd.f32 0.0, %v1981
      %v1983 = vpop.f32.mrb[0].mxu0
      %1984 = vdwg.mxu0
      %1985 = vst.msk [vmem:[#allocation6] sm:$0xff] %vm881, %v1696
      %1986 = vst.msk [vmem:[#allocation6 + $0x8] sm:$0xff] %vm881, %v1701
      %1987 = vst.msk [vmem:[#allocation6 + $0x10] sm:$0x1] %vm884, %v1706
      %1991 = vrot.lane.b32.xlu0 %v1788, 8
      %v1992 = vpop.permute.xlu0 %1991
      %1993 = vrot.lane.b32.xlu0 %v1793, 8
      %v1994 = vpop.permute.xlu0 %1993
      %1995 = vrot.lane.b32.xlu0 %v1798, 8
      %v1996 = vpop.permute.xlu0 %1995
      %vm2000 = vcmask 130112
      %2001 = vst.msk [vmem:[#allocation6] sm:$0xff] %vm2000, %v1992
      %2002 = vst.msk [vmem:[#allocation6 + $0x8] sm:$0xff] %vm2000, %v1994
      %vm2003 = vcmask 122944
      %2004 = vst.msk [vmem:[#allocation6 + $0x10] sm:$0x1] %vm2003, %v1996
      %2008 = vrot.lane.b32.xlu0 %v1880, 16
      %v2009 = vpop.permute.xlu0 %2008
      %2010 = vrot.lane.b32.xlu0 %v1885, 16
      %v2011 = vpop.permute.xlu0 %2010
      %2012 = vrot.lane.b32.xlu0 %v1890, 16
      %v2013 = vpop.permute.xlu0 %2012
      %vm2017 = vcmask 195712
      %2018 = vst.msk [vmem:[#allocation6] sm:$0xff] %vm2017, %v2009
      %2019 = vst.msk [vmem:[#allocation6 + $0x8] sm:$0xff] %vm2017, %v2011
      %vm2020 = vcmask 188544
      %2021 = vst.msk [vmem:[#allocation6 + $0x10] sm:$0x1] %vm2020, %v2013
      %2025 = vrot.lane.b32.xlu0 %v1972, 24
      %v2026 = vpop.permute.xlu0 %2025
      %2027 = vrot.lane.b32.xlu0 %v1977, 24
      %v2028 = vpop.permute.xlu0 %2027
      %2029 = vrot.lane.b32.xlu0 %v1982, 24
      %v2030 = vpop.permute.xlu0 %2029
      %vm2034 = vcmask 261312
      %2035 = vst.msk [vmem:[#allocation6] sm:$0xff] %vm2034, %v2026
      %2036 = vst.msk [vmem:[#allocation6 + $0x8] sm:$0xff] %vm2034, %v2028
      %vm2037 = vcmask 254144
      %2038 = vst.msk [vmem:[#allocation6 + $0x10] sm:$0x1] %vm2037, %v2030
      %v2039 = vld [vmem:[#allocation6] sm:$0xff]
      %v2040 = vld [vmem:[#allocation6 + $0x8] sm:$0xff]
      %v2041 = vld [vmem:[#allocation6 + $0x10] sm:$0x1]
      %v2042 = vld [vmem:[%s669] sm:$0xff]
      %v2043 = vld [vmem:[%s669 + $0x8] sm:$0xff]
      %v2044 = vld [vmem:[%s669 + $0x10] sm:$0xff]
      %v2045 = vld [vmem:[%s669 + $0x18] sm:$0xff]
      %v2046 = vld [vmem:[%s672] sm:$0x1]
      %v2048 = vlaneseq
      %v2049 = vshrl.u32 %v2048, 7
      %v2050 = vsub.s32 0, %v2049
      %v2051 = vrot.slane %v2046, %v2050
      %v2054 = vsel %vm728, %v2039, 0
      %v2057 = vsel %vm728, %v2040, 0
      %v2060 = vsel %vm728, %v2041, 0
      %2062 = vmatprep.subr.mxu0 0.0
      %2063 = vmatpush1.msra.mxu0 %v2042
      %2064 = vmatprep.subr.mxu0 0.0
      %2065 = vmatpush1.msra.mxu0 %v2043
      %2066 = vmatprep.subr.mxu0 0.0
      %2067 = vmatpush1.msra.mxu0 %v2044
      %2068 = vmatprep.subr.mxu0 0.0
      %2069 = vmatpush1.msra.mxu0 %v2045
      %2070 = vmatprep.subr.mxu0 0.0
      %2071 = vmatpush1.msra.mxu0 0.0
      %2072 = vmatprep.subr.mxu0 0.0
      %2073 = vmatpush1.msra.mxu0 0.0
      %2074 = vmatprep.subr.mxu0 0.0
      %2075 = vmatpush1.msra.mxu0 0.0
      %2076 = vmatprep.subr.mxu0 0.0
      %2077 = vmatpush1.msra.mxu0 0.0
      %2078 = vmatprep.subr.mxu0 0.0
      %2079 = vmatpush1.msra.mxu0 0.0
      %2080 = vmatprep.subr.mxu0 0.0
      %2081 = vmatpush1.msra.mxu0 0.0
      %2082 = vmatprep.subr.mxu0 0.0
      %2083 = vmatpush1.msra.mxu0 0.0
      %2084 = vmatprep.subr.mxu0 0.0
      %2085 = vmatpush1.msra.mxu0 0.0
      %2086 = vmatprep.subr.mxu0 0.0
      %2087 = vmatpush1.msra.mxu0 0.0
      %2088 = vmatprep.subr.mxu0 0.0
      %2089 = vmatpush1.msra.mxu0 0.0
      %2090 = vmatprep.subr.mxu0 0.0
      %2091 = vmatpush1.msra.mxu0 0.0
      %2092 = vmatprep.subr.mxu0 0.0
      %2093 = vmatpush1.msra.mxu0 0.0
      %2094 = vmatprep.subr.mxu0 0.0
      %2095 = vmatpush1.msra.mxu0 0.0
      %2096 = vmatprep.subr.mxu0 0.0
      %2097 = vmatpush1.msra.mxu0 0.0
      %2098 = vmatprep.subr.mxu0 0.0
      %2099 = vmatpush1.msra.mxu0 0.0
      %2100 = vmatprep.subr.mxu0 0.0
      %2101 = vmatpush1.msra.mxu0 0.0
      %2102 = vmatprep.subr.mxu0 0.0
      %2103 = vmatpush1.msra.mxu0 0.0
      %2104 = vmatprep.subr.mxu0 0.0
      %2105 = vmatpush1.msra.mxu0 0.0
      %2106 = vmatprep.subr.mxu0 0.0
      %2107 = vmatpush1.msra.mxu0 0.0
      %2108 = vmatprep.subr.mxu0 0.0
      %2109 = vmatpush1.msra.mxu0 0.0
      %2110 = vmatprep.subr.mxu0 0.0
      %2111 = vmatpush1.msra.mxu0 0.0
      %2112 = vmatprep.subr.mxu0 0.0
      %2113 = vmatpush1.msra.mxu0 0.0
      %2114 = vmatprep.subr.mxu0 0.0
      %2115 = vmatpush1.msra.mxu0 0.0
      %2116 = vmatprep.subr.mxu0 0.0
      %2117 = vmatpush1.msra.mxu0 0.0
      %2118 = vmatprep.subr.mxu0 0.0
      %2119 = vmatpush1.msra.mxu0 0.0
      %2120 = vmatprep.subr.mxu0 0.0
      %2121 = vmatpush1.msra.mxu0 0.0
      %2122 = vmatprep.subr.mxu0 0.0
      %2123 = vmatpush1.msra.mxu0 0.0
      %2124 = vmatprep.subr.mxu0 0.0
      %2125 = vmatpush1.msra.mxu0 0.0
      %2126 = vmatprep.mubr.f32.mxu0 0.0
      %2127 = vmatmul.mubr.f32.gmra.mrb[0].mxu0 %v2054
      %v2128 = vpop.f32.mrb[0].mxu0
      %v2129 = vadd.f32 %v2051, %v2128
      %v2130 = vpop.f32.mrb[0].mxu0
      %2131 = vmatprep.mubr.f32.mxu0 0.0
      %2132 = vmatmul.mubr.f32.gmra.mrb[0].mxu0 %v2057
      %v2133 = vpop.f32.mrb[0].mxu0
      %v2134 = vadd.f32 %v2051, %v2133
      %v2135 = vpop.f32.mrb[0].mxu0
      %2136 = vmatprep.mubr.f32.mxu0 0.0
      %2137 = vmatmul.mubr.f32.gmra.mrb[0].mxu0 %v2060
      %v2138 = vpop.f32.mrb[0].mxu0
      %v2139 = vadd.f32 %v2051, %v2138
      %v2140 = vpop.f32.mrb[0].mxu0
      %2141 = vdwg.mxu0
      %v2142 = vadd.f32 %v723, %v2129
      %v2143 = vadd.f32 %v724, %v2134
      %v2144 = vadd.f32 %v725, %v2139
      %v2145 = vld [vmem:[%s675] sm:$0x1]
      %v2146 = vld [vmem:[%s678] sm:$0x1]
      %v2147 = vsel %vm728, %v2142, 0.0
      %2148 = vadd.xlane.f32.xlu0 %v2147
      %v2149 = vpop.xlane.xlu0 %2148
      %v2150 = vsel %vm728, %v2143, 0.0
      %2151 = vadd.xlane.f32.xlu0 %v2150
      %v2152 = vpop.xlane.xlu0 %2151
      %v2153 = vsel %vm735, %v2144, 0.0
      %2154 = vadd.xlane.f32.xlu0 %v2153
      %v2155 = vpop.xlane.xlu0 %2154
      %v2156 = vmul.f32 %v2149, %v739
      %v2157 = vmul.f32 %v2152, %v739
      %v2158 = vmul.f32 %v2155, %v739
      %v2159 = vsub.f32 %v2142, %v2156
      %v2160 = vsub.f32 %v2143, %v2157
      %v2161 = vsub.f32 %v2144, %v2158
      %v2162 = vmul.f32 %v2159, %v2159
      %v2163 = vmul.f32 %v2160, %v2160
      %v2164 = vmul.f32 %v2161, %v2161
      %v2165 = vsel %vm728, %v2162, 0.0
      %2166 = vadd.xlane.f32.xlu0 %v2165
      %v2167 = vpop.xlane.xlu0 %2166
      %v2168 = vsel %vm728, %v2163, 0.0
      %2169 = vadd.xlane.f32.xlu0 %v2168
      %v2170 = vpop.xlane.xlu0 %2169
      %v2171 = vsel %vm735, %v2164, 0.0
      %2172 = vadd.xlane.f32.xlu0 %v2171
      %v2173 = vpop.xlane.xlu0 %2172
      %v2174 = vmul.f32 %v2167, %v739
      %v2175 = vmul.f32 %v2170, %v739
      %v2176 = vmul.f32 %v2173, %v739
      %v2177 = vadd.f32 %v2174, 1e-05
      %v2178 = vadd.f32 %v2175, 1e-05
      %v2179 = vadd.f32 %v2176, 1e-05
      %v2180 = vrsqrt.pop %v2177
      %v2181 = vrsqrt.pop %v2178
      %v2182 = vrsqrt.pop %v2179
      %v2183 = vmul.f32 %v2159, %v2180
      %v2184 = vmul.f32 %v2160, %v2181
      %v2185 = vmul.f32 %v2161, %v2182
      %v2187 = vlaneseq
      %v2188 = vshrl.u32 %v2187, 7
      %v2189 = vsub.s32 0, %v2188
      %v2190 = vrot.slane %v2145, %v2189
      %v2192 = vmul.f32 %v2183, %v2190
      %v2193 = vmul.f32 %v2184, %v2190
      %v2194 = vmul.f32 %v2185, %v2190
      %v2196 = vlaneseq
      %v2197 = vshrl.u32 %v2196, 7
      %v2198 = vsub.s32 0, %v2197
      %v2199 = vrot.slane %v2146, %v2198
      %v2201 = vadd.f32 %v2192, %v2199
      %v2202 = vadd.f32 %v2193, %v2199
      %v2203 = vadd.f32 %v2194, %v2199
      %v2204 = vld [vmem:[%s683] sm:$0xff]
      %v2205 = vld [vmem:[%s683 + $0x8] sm:$0xff]
      %v2206 = vld [vmem:[%s683 + $0x10] sm:$0xff]
      %v2207 = vld [vmem:[%s683 + $0x18] sm:$0xff]
      %v2208 = vld [vmem:[%s686] sm:$0x1]
      %v2210 = vlaneseq
      %v2211 = vshrl.u32 %v2210, 7
      %v2212 = vsub.s32 0, %v2211
      %v2213 = vrot.slane %v2208, %v2212
      %v2216 = vsel %vm728, %v2201, 0
      %v2219 = vsel %vm728, %v2202, 0
      %v2222 = vsel %vm728, %v2203, 0
      %2224 = vmatprep.subr.mxu0 0.0
      %2225 = vmatpush1.msra.mxu0 %v2204
      %2226 = vmatprep.subr.mxu0 0.0
      %2227 = vmatpush1.msra.mxu0 %v2205
      %2228 = vmatprep.subr.mxu0 0.0
      %2229 = vmatpush1.msra.mxu0 %v2206
      %2230 = vmatprep.subr.mxu0 0.0
      %2231 = vmatpush1.msra.mxu0 %v2207
      %2232 = vmatprep.subr.mxu0 0.0
      %2233 = vmatpush1.msra.mxu0 0.0
      %2234 = vmatprep.subr.mxu0 0.0
      %2235 = vmatpush1.msra.mxu0 0.0
      %2236 = vmatprep.subr.mxu0 0.0
      %2237 = vmatpush1.msra.mxu0 0.0
      %2238 = vmatprep.subr.mxu0 0.0
      %2239 = vmatpush1.msra.mxu0 0.0
      %2240 = vmatprep.subr.mxu0 0.0
      %2241 = vmatpush1.msra.mxu0 0.0
      %2242 = vmatprep.subr.mxu0 0.0
      %2243 = vmatpush1.msra.mxu0 0.0
      %2244 = vmatprep.subr.mxu0 0.0
      %2245 = vmatpush1.msra.mxu0 0.0
      %2246 = vmatprep.subr.mxu0 0.0
      %2247 = vmatpush1.msra.mxu0 0.0
      %2248 = vmatprep.subr.mxu0 0.0
      %2249 = vmatpush1.msra.mxu0 0.0
      %2250 = vmatprep.subr.mxu0 0.0
      %2251 = vmatpush1.msra.mxu0 0.0
      %2252 = vmatprep.subr.mxu0 0.0
      %2253 = vmatpush1.msra.mxu0 0.0
      %2254 = vmatprep.subr.mxu0 0.0
      %2255 = vmatpush1.msra.mxu0 0.0
      %2256 = vmatprep.subr.mxu0 0.0
      %2257 = vmatpush1.msra.mxu0 0.0
      %2258 = vmatprep.subr.mxu0 0.0
      %2259 = vmatpush1.msra.mxu0 0.0
      %2260 = vmatprep.subr.mxu0 0.0
      %2261 = vmatpush1.msra.mxu0 0.0
      %2262 = vmatprep.subr.mxu0 0.0
      %2263 = vmatpush1.msra.mxu0 0.0
      %2264 = vmatprep.subr.mxu0 0.0
      %2265 = vmatpush1.msra.mxu0 0.0
      %2266 = vmatprep.subr.mxu0 0.0
      %2267 = vmatpush1.msra.mxu0 0.0
      %2268 = vmatprep.subr.mxu0 0.0
      %2269 = vmatpush1.msra.mxu0 0.0
      %2270 = vmatprep.subr.mxu0 0.0
      %2271 = vmatpush1.msra.mxu0 0.0
      %2272 = vmatprep.subr.mxu0 0.0
      %2273 = vmatpush1.msra.mxu0 0.0
      %2274 = vmatprep.subr.mxu0 0.0
      %2275 = vmatpush1.msra.mxu0 0.0
      %2276 = vmatprep.subr.mxu0 0.0
      %2277 = vmatpush1.msra.mxu0 0.0
      %2278 = vmatprep.subr.mxu0 0.0
      %2279 = vmatpush1.msra.mxu0 0.0
      %2280 = vmatprep.subr.mxu0 0.0
      %2281 = vmatpush1.msra.mxu0 0.0
      %2282 = vmatprep.subr.mxu0 0.0
      %2283 = vmatpush1.msra.mxu0 0.0
      %2284 = vmatprep.subr.mxu0 0.0
      %2285 = vmatpush1.msra.mxu0 0.0
      %2286 = vmatprep.subr.mxu0 0.0
      %2287 = vmatpush1.msra.mxu0 0.0
      %2288 = vmatprep.mubr.f32.mxu0 0.0
      %2289 = vmatmul.mubr.f32.gmra.mrb[0].mxu0 %v2216
      %v2290 = vpop.f32.mrb[0].mxu0
      %v2291 = vadd.f32 %v2213, %v2290
      %v2292 = vpop.f32.mrb[0].mxu0
      %2293 = vmatprep.mubr.f32.mxu0 0.0
      %2294 = vmatmul.mubr.f32.gmra.mrb[0].mxu0 %v2219
      %v2295 = vpop.f32.mrb[0].mxu0
      %v2296 = vadd.f32 %v2213, %v2295
      %v2297 = vpop.f32.mrb[0].mxu0
      %2298 = vmatprep.mubr.f32.mxu0 0.0
      %2299 = vmatmul.mubr.f32.gmra.mrb[0].mxu0 %v2222
      %v2300 = vpop.f32.mrb[0].mxu0
      %v2301 = vadd.f32 %v2213, %v2300
      %v2302 = vpop.f32.mrb[0].mxu0
      %2303 = vdwg.mxu0
      %v2304 = vmul.f32 %v2291, 0.5
      %v2305 = vmul.f32 %v2296, 0.5
      %v2306 = vmul.f32 %v2301, 0.5
      %v2307 = vmul.f32 %v2291, 0.044715
      %v2308 = vmul.f32 %v2296, 0.044715
      %v2309 = vmul.f32 %v2301, 0.044715
      %v2310 = vmul.f32 %v2307, %v2291
      %v2311 = vmul.f32 %v2308, %v2296
      %v2312 = vmul.f32 %v2309, %v2301
      %v2313 = vmul.f32 %v2310, %v2291
      %v2314 = vmul.f32 %v2311, %v2296
      %v2315 = vmul.f32 %v2312, %v2301
      %v2316 = vadd.f32 %v2291, %v2313
      %v2317 = vadd.f32 %v2296, %v2314
      %v2318 = vadd.f32 %v2301, %v2315
      %v2319 = vmul.f32 %v2316, 0.7978846
      %v2320 = vmul.f32 %v2317, 0.7978846
      %v2321 = vmul.f32 %v2318, 0.7978846
      %v2322 = vtanh.pop %v2319
      %v2323 = vtanh.pop %v2320
      %v2324 = vtanh.pop %v2321
      %v2325 = vadd.f32 %v2322, 1.0
      %v2326 = vadd.f32 %v2323, 1.0
      %v2327 = vadd.f32 %v2324, 1.0
      %v2328 = vmul.f32 %v2304, %v2325
      %v2329 = vmul.f32 %v2305, %v2326
      %v2330 = vmul.f32 %v2306, %v2327
      %v2331 = vld [vmem:[%s691] sm:$0xff]
      %v2332 = vld [vmem:[%s691 + $0x8] sm:$0xff]
      %v2333 = vld [vmem:[%s691 + $0x10] sm:$0xff]
      %v2334 = vld [vmem:[%s691 + $0x18] sm:$0xff]
      %v2335 = vld [vmem:[%s691 + $0x20] sm:$0xff]
      %v2336 = vld [vmem:[%s691 + $0x28] sm:$0xff]
      %v2337 = vld [vmem:[%s691 + $0x30] sm:$0xff]
      %v2338 = vld [vmem:[%s691 + $0x38] sm:$0xff]
      %v2339 = vld [vmem:[%s694] sm:$0x1]
      %v2341 = vlaneseq
      %v2342 = vshrl.u32 %v2341, 7
      %v2343 = vsub.s32 0, %v2342
      %v2344 = vrot.slane %v2339, %v2343
      %vm2346 = vcmask 523264
      %v2348 = vsel %vm2346, %v2328, 0
      %v2351 = vsel %vm2346, %v2329, 0
      %v2354 = vsel %vm2346, %v2330, 0
      %2356 = vmatprep.subr.mxu0 0.0
      %2357 = vmatpush1.msra.mxu0 %v2331
      %2358 = vmatprep.subr.mxu0 0.0
      %2359 = vmatpush1.msra.mxu0 %v2332
      %2360 = vmatprep.subr.mxu0 0.0
      %2361 = vmatpush1.msra.mxu0 %v2333
      %2362 = vmatprep.subr.mxu0 0.0
      %2363 = vmatpush1.msra.mxu0 %v2334
      %2364 = vmatprep.subr.mxu0 0.0
      %2365 = vmatpush1.msra.mxu0 %v2335
      %2366 = vmatprep.subr.mxu0 0.0
      %2367 = vmatpush1.msra.mxu0 %v2336
      %2368 = vmatprep.subr.mxu0 0.0
      %2369 = vmatpush1.msra.mxu0 %v2337
      %2370 = vmatprep.subr.mxu0 0.0
      %2371 = vmatpush1.msra.mxu0 %v2338
      %2372 = vmatprep.subr.mxu0 0.0
      %2373 = vmatpush1.msra.mxu0 0.0
      %2374 = vmatprep.subr.mxu0 0.0
      %2375 = vmatpush1.msra.mxu0 0.0
      %2376 = vmatprep.subr.mxu0 0.0
      %2377 = vmatpush1.msra.mxu0 0.0
      %2378 = vmatprep.subr.mxu0 0.0
      %2379 = vmatpush1.msra.mxu0 0.0
      %2380 = vmatprep.subr.mxu0 0.0
      %2381 = vmatpush1.msra.mxu0 0.0
      %2382 = vmatprep.subr.mxu0 0.0
      %2383 = vmatpush1.msra.mxu0 0.0
      %2384 = vmatprep.subr.mxu0 0.0
      %2385 = vmatpush1.msra.mxu0 0.0
      %2386 = vmatprep.subr.mxu0 0.0
      %2387 = vmatpush1.msra.mxu0 0.0
      %2388 = vmatprep.subr.mxu0 0.0
      %2389 = vmatpush1.msra.mxu0 0.0
      %2390 = vmatprep.subr.mxu0 0.0
      %2391 = vmatpush1.msra.mxu0 0.0
      %2392 = vmatprep.subr.mxu0 0.0
      %2393 = vmatpush1.msra.mxu0 0.0
      %2394 = vmatprep.subr.mxu0 0.0
      %2395 = vmatpush1.msra.mxu0 0.0
      %2396 = vmatprep.subr.mxu0 0.0
      %2397 = vmatpush1.msra.mxu0 0.0
      %2398 = vmatprep.subr.mxu0 0.0
      %2399 = vmatpush1.msra.mxu0 0.0
      %2400 = vmatprep.subr.mxu0 0.0
      %2401 = vmatpush1.msra.mxu0 0.0
      %2402 = vmatprep.subr.mxu0 0.0
      %2403 = vmatpush1.msra.mxu0 0.0
      %2404 = vmatprep.subr.mxu0 0.0
      %2405 = vmatpush1.msra.mxu0 0.0
      %2406 = vmatprep.subr.mxu0 0.0
      %2407 = vmatpush1.msra.mxu0 0.0
      %2408 = vmatprep.subr.mxu0 0.0
      %2409 = vmatpush1.msra.mxu0 0.0
      %2410 = vmatprep.subr.mxu0 0.0
      %2411 = vmatpush1.msra.mxu0 0.0
      %2412 = vmatprep.subr.mxu0 0.0
      %2413 = vmatpush1.msra.mxu0 0.0
      %2414 = vmatprep.subr.mxu0 0.0
      %2415 = vmatpush1.msra.mxu0 0.0
      %2416 = vmatprep.subr.mxu0 0.0
      %2417 = vmatpush1.msra.mxu0 0.0
      %2418 = vmatprep.subr.mxu0 0.0
      %2419 = vmatpush1.msra.mxu0 0.0
      %2420 = vmatprep.mubr.f32.mxu0 0.0
      %2421 = vmatmul.mubr.f32.gmra.mrb[0].mxu0 %v2348
      %v2422 = vpop.f32.mrb[0].mxu0
      %v2423 = vadd.f32 %v2344, %v2422
      %v2424 = vpop.f32.mrb[0].mxu0
      %2425 = vmatprep.mubr.f32.mxu0 0.0
      %2426 = vmatmul.mubr.f32.gmra.mrb[0].mxu0 %v2351
      %v2427 = vpop.f32.mrb[0].mxu0
      %v2428 = vadd.f32 %v2344, %v2427
      %v2429 = vpop.f32.mrb[0].mxu0
      %2430 = vmatprep.mubr.f32.mxu0 0.0
      %2431 = vmatmul.mubr.f32.gmra.mrb[0].mxu0 %v2354
      %v2432 = vpop.f32.mrb[0].mxu0
      %v2433 = vadd.f32 %v2344, %v2432
      %v2434 = vpop.f32.mrb[0].mxu0
      %2435 = vdwg.mxu0
      %v2436 = vadd.f32 %v2142, %v2423
      %v2437 = vadd.f32 %v2143, %v2428
      %v2438 = vadd.f32 %v2144, %v2433
      %2439 = vst.msk [vmem:[#allocation2] sm:$0xff] %vm728, %v2436
      %2440 = vst.msk [vmem:[#allocation2 + $0x8] sm:$0xff] %vm728, %v2437
      %2441 = vst.msk [vmem:[#allocation2 + $0x10] sm:$0x1] %vm735, %v2438
      %p2442 = scmp.eq.s32.totalorder %s32, 1
      // Predicated region
      $region81: #{tpu_custom_call.1} parent=75 // pred_check
        %p2443 = pneg %p2442
      $region82: #{tpu_custom_call.1} parent=75 // pred_check_branch
        %2445 = sbr.rel (%p2443) target = $region84
      $region83: #{tpu_custom_call.1} parent=75 // pred_region
        %v2446 = vld [vmem:[%s12] sm:$0x1]
        %v2447 = vld [vmem:[%s13] sm:$0x1]
        %v2448 = vsel %vm728, %v2436, 0.0
        %2449 = vadd.xlane.f32.xlu0 %v2448
        %v2450 = vpop.xlane.xlu0 %2449
        %v2451 = vsel %vm728, %v2437, 0.0
        %2452 = vadd.xlane.f32.xlu0 %v2451
        %v2453 = vpop.xlane.xlu0 %2452
        %v2454 = vsel %vm735, %v2438, 0.0
        %2455 = vadd.xlane.f32.xlu0 %v2454
        %v2456 = vpop.xlane.xlu0 %2455
        %v2457 = vmul.f32 %v2450, %v739
        %v2458 = vmul.f32 %v2453, %v739
        %v2459 = vmul.f32 %v2456, %v739
        %v2460 = vsub.f32 %v2436, %v2457
        %v2461 = vsub.f32 %v2437, %v2458
        %v2462 = vsub.f32 %v2438, %v2459
        %v2463 = vmul.f32 %v2460, %v2460
        %v2464 = vmul.f32 %v2461, %v2461
        %v2465 = vmul.f32 %v2462, %v2462
        %v2466 = vsel %vm728, %v2463, 0.0
        %2467 = vadd.xlane.f32.xlu0 %v2466
        %v2468 = vpop.xlane.xlu0 %2467
        %v2469 = vsel %vm728, %v2464, 0.0
        %2470 = vadd.xlane.f32.xlu0 %v2469
        %v2471 = vpop.xlane.xlu0 %2470
        %v2472 = vsel %vm735, %v2465, 0.0
        %2473 = vadd.xlane.f32.xlu0 %v2472
        %v2474 = vpop.xlane.xlu0 %2473
        %v2475 = vmul.f32 %v2468, %v739
        %v2476 = vmul.f32 %v2471, %v739
        %v2477 = vmul.f32 %v2474, %v739
        %v2478 = vadd.f32 %v2475, 1e-05
        %v2479 = vadd.f32 %v2476, 1e-05
        %v2480 = vadd.f32 %v2477, 1e-05
        %v2481 = vrsqrt.pop %v2478
        %v2482 = vrsqrt.pop %v2479
        %v2483 = vrsqrt.pop %v2480
        %v2484 = vmul.f32 %v2460, %v2481
        %v2485 = vmul.f32 %v2461, %v2482
        %v2486 = vmul.f32 %v2462, %v2483
        %v2488 = vlaneseq
        %v2489 = vshrl.u32 %v2488, 7
        %v2490 = vsub.s32 0, %v2489
        %v2491 = vrot.slane %v2446, %v2490
        %v2493 = vmul.f32 %v2484, %v2491
        %v2494 = vmul.f32 %v2485, %v2491
        %v2495 = vmul.f32 %v2486, %v2491
        %v2497 = vlaneseq
        %v2498 = vshrl.u32 %v2497, 7
        %v2499 = vsub.s32 0, %v2498
        %v2500 = vrot.slane %v2447, %v2499
        %v2502 = vadd.f32 %v2493, %v2500
        %v2503 = vadd.f32 %v2494, %v2500
        %v2504 = vadd.f32 %v2495, %v2500
        %2505 = vst.msk [vmem:[%s699] sm:$0xff] %vm728, %v2502
        %2506 = vst.msk [vmem:[%s699 + $0x8] sm:$0xff] %vm728, %v2503
        %2507 = vst.msk [vmem:[%s699 + $0x10] sm:$0x1] %vm735, %v2504
      $region84: #{tpu_custom_call.1} parent=75 // pred_fallthru
        _
      %p2508 = scmp.lt.s32.totalorder %s31, 1
      %s2509 = scalar_select %p2508, %s31, 1
      %s2510 = smul.addr %s2509, 3
      %s2511 = smul.addr %s2510, 8
      %s2512 = scalar_lea.vmem %s14, %s2511
      %s2513 = smul.u32 4, %s32
      %p2514 = scmp.lt.s32.totalorder %s31, 1
      %s2515 = scalar_select %p2514, %s31, 1
      %p2516 = scmp.lt.s32.totalorder %s2513, 7
      %s2517 = scalar_select %p2516, %s2513, 7
      %s2518 = smul.addr %s2517, 3
      %s2519 = smul.addr %s2515, 24
      %s2520 = sadd.s32 %s2518, %s2519
      %s2521 = smul.addr %s2520, 8
      %s2522 = scalar_lea.vmem %s15, %s2521
      // Predicated region
      $region85: #{tpu_custom_call.1} parent=75 // pred_check
        %p2523 = pneg %p411
      $region86: #{tpu_custom_call.1} parent=75 // pred_check_branch
        %2525 = sbr.rel (%p2523) target = $region88
      $region87: #{tpu_custom_call.1} parent=75 // pred_region
        _
      $region88: #{tpu_custom_call.1} parent=75 // pred_fallthru
        _
      // Predicated region
      $region89: #{tpu_custom_call.1} parent=75 // pred_check
        %p2526 = pneg %p439
      $region90: #{tpu_custom_call.1} parent=75 // pred_check_branch
        %2528 = sbr.rel (%p2526) target = $region92
      $region91: #{tpu_custom_call.1} parent=75 // pred_region
        %s2529 = smul.u32 4, %s32
      $region92: #{tpu_custom_call.1} parent=75 // pred_fallthru
        _
    $region76: #{tpu_custom_call.1} parent=5 // pred_fallthru
      _
    %p2530 = scmp.le.s32.totalorder 2, %s22
    // Predicated region
    $region93: #{tpu_custom_call.1} parent=5 // pred_check
      %p2531 = pneg %p2530
    $region94: #{tpu_custom_call.1} parent=5 // pred_check_branch
      %2533 = sbr.rel (%p2531) target = $region96
    $region95: #{tpu_custom_call.1} parent=5 // pred_region
      %s2534 = ssub.s32 %s22, 2
      // Predicated region
      $region97: #{tpu_custom_call.1} parent=95 // pred_check
        %p2535 = pneg %p417
      $region98: #{tpu_custom_call.1} parent=95 // pred_check_branch
        %2537 = sbr.rel (%p2535) target = $region100
      $region99: #{tpu_custom_call.1} parent=95 // pred_region
        %p2538 = scmp.lt.s32.totalorder %s33, 1
        %s2539 = scalar_select %p2538, %s33, 1
        %s2540 = smul.addr %s2539, 3
        %s2541 = smul.addr %s2540, 8
        %s2542 = scalar_lea.vmem %s14, %s2541
      $region100: #{tpu_custom_call.1} parent=95 // pred_fallthru
        _
      // Predicated region
      $region101: #{tpu_custom_call.1} parent=95 // pred_check
        %p2543 = pneg %p445
      $region102: #{tpu_custom_call.1} parent=95 // pred_check_branch
        %2545 = sbr.rel (%p2543) target = $region104
      $region103: #{tpu_custom_call.1} parent=95 // pred_region
        %s2546 = smul.u32 4, %s34
        %p2547 = scmp.lt.s32.totalorder %s33, 1
        %s2548 = scalar_select %p2547, %s33, 1
        %p2549 = scmp.lt.s32.totalorder %s2546, 7
        %s2550 = scalar_select %p2549, %s2546, 7
        %s2551 = smul.addr %s2550, 3
        %s2552 = smul.addr %s2548, 24
        %s2553 = sadd.s32 %s2551, %s2552
        %s2554 = smul.addr %s2553, 8
        %s2555 = scalar_lea.vmem %s15, %s2554
      $region104: #{tpu_custom_call.1} parent=95 // pred_fallthru
        _
    $region96: #{tpu_custom_call.1} parent=5 // pred_fallthru
      _
  $region6: #{tpu_custom_call.1} parent=0 // loop_footer
    %s26 = sadd.s32 1, %s22
  $region7: #{tpu_custom_call.1} parent=0 // loop_footer_branch
    %21 = sbr.rel target = $region3
  $region8: #{tpu_custom_call.1} parent=0 // loop_exit
    _

</llo_original>
